<compile_context>
chip_gen: v7x
topology: tpu7x:2x2x1
jax: 0.10.0
libtpu: 0.0.40
codegen_flags: <defaults>
</compile_context>

<pallas_src>
import functools

import jax
import jax.numpy as jnp
import numpy as np
from jax.experimental import pallas as pl
from jax.experimental.pallas import tpu as pltpu

CHAR_EMBED = 50   # torch.nn.Embedding(len(vocab.char2id), 50)
KERNEL = 5        # CNN(50, word_embed_size, 5, 1) -> kernel_size=5
PAD = 1           # padding=1
C_PAD = 64        # char channels padded 50 -> 64 so the flat slab is lane-dense


def _round_up(x, m):
    return ((x + m - 1) // m) * m


# ---------------------------------------------------------------------------
# Pallas kernel: one word block -> conv(all windows) + max-over-time + Highway
# ---------------------------------------------------------------------------
def _word_cnn_highway_kernel(x_ref, wband_ref, bc_ref, wpg_ref, bpg_ref, o_ref,
                             *, l_out, e_pad):
    # x_ref    : (bn, W_pad*C_PAD)          bf16  flattened padded char slab
    # wband_ref: (W_pad*C_PAD, l_out*E_pad) bf16  block-banded conv weight
    # bc_ref   : (1, E_pad)                 f32   conv bias
    # wpg_ref  : (E_pad, 2*E_pad)           bf16  fused highway proj|gate weight
    # bpg_ref  : (1, 2*E_pad)               f32   fused highway proj|gate bias
    # o_ref    : (bn, E_pad)                f32
    conv = jnp.dot(x_ref[...], wband_ref[...],
                   preferred_element_type=jnp.float32)        # (bn, l_out*E_pad)

    # max-over-time: static 128-wide lane slices, no relayout
    h = conv[:, 0:e_pad]
    for t in range(1, l_out):
        h = jnp.maximum(h, conv[:, t * e_pad:(t + 1) * e_pad])
    h = jnp.maximum(h + bc_ref[...], 0.0)                     # bias + ReLU

    hb = h.astype(wpg_ref.dtype)                              # bf16 for MXU
    pg = jnp.dot(hb, wpg_ref[...],
                 preferred_element_type=jnp.float32) + bpg_ref[...]
    proj = jnp.maximum(pg[:, :e_pad], 0.0)
    gate = jax.nn.sigmoid(pg[:, e_pad:])
    o_ref[...] = h + gate * (proj - h)                        # fused highway blend


# ---------------------------------------------------------------------------
# One-time parameter preparation (hoisted out of the forward path)
# ---------------------------------------------------------------------------
def prepare_params(params, max_word_len):
    E = params["conv_w"].shape[0]
    E_pad = _round_up(E, 128)
    W_pad = max_word_len + 2 * PAD
    l_out = W_pad - KERNEL + 1

    # Block-banded conv weight: band[w*C_PAD + c, t*E_pad + e] = conv_w[e, c, w-t]
    conv_w = np.asarray(params["conv_w"], np.float32)          # (E, C, K)
    band = np.zeros((W_pad * C_PAD, l_out * E_pad), np.float32)
    for t in range(l_out):
        for k in range(KERNEL):
            w = t + k
            band[w * C_PAD:w * C_PAD + CHAR_EMBED,
                 t * E_pad:t * E_pad + E] = conv_w[:, :, k].T
    wband = jnp.asarray(band, dtype=jnp.bfloat16)

    def pad_wT(m):   # torch Linear weight (E,E): y = x @ m.T, pad to (E_pad,E_pad)
        return np.pad(np.asarray(m, np.float32).T,
                      ((0, E_pad - E), (0, E_pad - E)))

    def pad_b(b):
        return np.pad(np.asarray(b, np.float32), (0, E_pad - E))

    wpg = jnp.asarray(np.concatenate([pad_wT(params["proj_w"]),
                                      pad_wT(params["gate_w"])], axis=1),
                      dtype=jnp.bfloat16)                      # (E_pad, 2*E_pad)
    bpg = jnp.asarray(np.concatenate([pad_b(params["proj_b"]),
                                      pad_b(params["gate_b"])])[None, :],
                      dtype=jnp.float32)                       # (1, 2*E_pad)
    bc = jnp.asarray(pad_b(params["conv_b"])[None, :], dtype=jnp.float32)

    return {
        "char_embed": params["char_embed"].astype(jnp.bfloat16),
        "wband": wband, "bc": bc, "wpg": wpg, "bpg": bpg,
    }


# ---------------------------------------------------------------------------
# Forward: embedding gather in XLA, conv/max/highway in one Pallas kernel
# ---------------------------------------------------------------------------
@functools.partial(jax.jit, static_argnames=("word_embed_size", "block_n"))
def model_embeddings_forward(tokens, prep, word_embed_size, block_n=512):
    S, B, W = tokens.shape
    E = word_embed_size
    E_pad = prep["wpg"].shape[0]
    W_pad = W + 2 * PAD
    WC = W_pad * C_PAD
    l_out = W_pad - KERNEL + 1
    N = S * B

    # Word-block size: multiple of 16 (bf16 sublane pack), clamped for tiny N.
    bn = _round_up(max(16, min(block_n, _round_up(N, 16))), 16)
    n_pad = _round_up(N, bn)

    # TODO(synk): data-dependent char-embedding gather stays in plain JAX/XLA.
    x = prep["char_embed"][tokens.reshape(N, W)]               # (N, W, 50) bf16
    x = jnp.pad(x, ((0, n_pad - N), (PAD, PAD), (0, C_PAD - CHAR_EMBED)))
    x_flat = x.reshape(n_pad, WC)                              # lane-dense bf16 slab

    kernel = functools.partial(_word_cnn_highway_kernel, l_out=l_out, e_pad=E_pad)

    out = pl.pallas_call(
        kernel,
        out_shape=jax.ShapeDtypeStruct((n_pad, E_pad), jnp.float32),
        grid_spec=pltpu.PrefetchScalarGridSpec(
            num_scalar_prefetch=0,
            grid=(n_pad // bn,),
            in_specs=[
                # per-block char slab
                pl.BlockSpec((bn, WC), lambda n: (n, 0)),
                # weights/biases: constant index maps -> resident in VMEM
                pl.BlockSpec((WC, l_out * E_pad), lambda n: (0, 0)),
                pl.BlockSpec((1, E_pad), lambda n: (0, 0)),
                pl.BlockSpec((E_pad, 2 * E_pad), lambda n: (0, 0)),
                pl.BlockSpec((1, 2 * E_pad), lambda n: (0, 0)),
            ],
            out_specs=pl.BlockSpec((bn, E_pad), lambda n: (n, 0)),
        ),
        compiler_params=pltpu.CompilerParams(
            dimension_semantics=("parallel",)),
    )(x_flat, prep["wband"], prep["bc"], prep["wpg"], prep["bpg"])

    return out[:N, :E].reshape(S, B, E)


# ---------------------------------------------------------------------------
# Pure-JAX reference (mirrors the PyTorch semantics) for a sanity check
# ---------------------------------------------------------------------------
def reference_forward(tokens, params):
    char_table = params["char_embed"]
    x = char_table[tokens]                              # (S, B, W, 50)
    S, B, W, C = x.shape
    xt = jnp.transpose(x, (0, 1, 3, 2)).reshape(S * B, C, W)   # NCW (torch)
    xp = jnp.pad(xt, ((0, 0), (0, 0), (PAD, PAD)))
    l_out = W + 2 * PAD - KERNEL + 1
    wc = params["conv_w"]                               # (E, C, K)
    conv = jnp.stack(
        [jnp.einsum("nck,eck->ne", xp[:, :, t:t + KERNEL], wc)
         for t in range(l_out)], axis=-1) + params["conv_b"][None, :, None]
    h = jnp.max(jax.nn.relu(conv), axis=-1)             # (N, E)
    proj = jax.nn.relu(h @ params["proj_w"].T + params["proj_b"])
    gate = jax.nn.sigmoid(h @ params["gate_w"].T + params["gate_b"])
    out = gate * proj + (1.0 - gate) * h
    return out.reshape(S, B, -1)


def init_params(key, vocab_size, word_embed_size):
    ks = jax.random.split(key, 6)
    scale = 0.1
    return {
        "char_embed": scale * jax.random.normal(ks[0], (vocab_size, CHAR_EMBED), jnp.float32),
        "conv_w": scale * jax.random.normal(ks[1], (word_embed_size, CHAR_EMBED, KERNEL), jnp.float32),
        "conv_b": scale * jax.random.normal(ks[2], (word_embed_size,), jnp.float32),
        "proj_w": scale * jax.random.normal(ks[3], (word_embed_size, word_embed_size), jnp.float32),
        "proj_b": scale * jax.random.normal(ks[4], (word_embed_size,), jnp.float32),
        "gate_w": scale * jax.random.normal(ks[5], (word_embed_size, word_embed_size), jnp.float32),
        "gate_b": jnp.zeros((word_embed_size,), jnp.float32),
    }


if __name__ == "__main__":
    key = jax.random.PRNGKey(0)
    S, B, W = 8, 2, 12          # sentence_length, batch_size, max_word_length
    VOCAB = 96                  # synthetic len(vocab.char2id)
    E = 32                      # word_embed_size

    k_tok, k_par = jax.random.split(key)
    tokens = jax.random.randint(k_tok, (S, B, W), 0, VOCAB, dtype=jnp.int32)
    params = init_params(k_par, VOCAB, E)
    prep = prepare_params(params, max_word_len=W)

    out = model_embeddings_forward(tokens, prep, word_embed_size=E)
    out = jax.block_until_ready(out)
    assert out.shape == (S, B, E), out.shape

    ref = jax.block_until_ready(reference_forward(tokens, params))
    # bf16 matmul inputs / char table (f32 accumulation) -> loose tolerance.
    assert np.allclose(np.asarray(out), np.asarray(ref), atol=2e-2, rtol=2e-2), \
        float(np.max(np.abs(np.asarray(out) - np.asarray(ref))))

    print("KERNEL_OK")
</pallas_src>

<mosaic_0001>
module attributes {stable_mosaic.version = 11 : i64} {
  func.func @_word_cnn_highway_kernel(%arg0: i32, %arg1: memref<16x896xbf16, #tpu.memory_space<vmem>>, %arg2: memref<896x1280xbf16, #tpu.memory_space<vmem>>, %arg3: memref<1x128xf32, #tpu.memory_space<vmem>>, %arg4: memref<128x256xbf16, #tpu.memory_space<vmem>>, %arg5: memref<1x256xf32, #tpu.memory_space<vmem>>, %arg6: memref<16x128xf32, #tpu.memory_space<vmem>>) attributes {dimension_semantics = [#tpu.dimension_semantics<parallel>], iteration_bounds = array<i64: 1>, scalar_prefetch = 0 : i64, scratch_operands = 0 : i64, tpu.core_type = #tpu.core_type<tc>, window_params = [{transform_indices = @transform_0, window_bounds = array<i64: 16, 896>}, {pipeline_mode = #tpu.pipeline_mode<synchronous>, transform_indices = @transform_1, window_bounds = array<i64: 896, 1280>}, {pipeline_mode = #tpu.pipeline_mode<synchronous>, transform_indices = @transform_2, window_bounds = array<i64: 1, 128>}, {pipeline_mode = #tpu.pipeline_mode<synchronous>, transform_indices = @transform_3, window_bounds = array<i64: 128, 256>}, {pipeline_mode = #tpu.pipeline_mode<synchronous>, transform_indices = @transform_4, window_bounds = array<i64: 1, 256>}, {transform_indices = @transform_5, window_bounds = array<i64: 16, 128>}]} {
    %c0 = arith.constant 0 : index
    %c0_0 = arith.constant 0 : index
    %0 = vector.load %arg1[%c0, %c0_0] : memref<16x896xbf16, #tpu.memory_space<vmem>>, vector<16x896xbf16>
    %c0_1 = arith.constant 0 : index
    %c0_2 = arith.constant 0 : index
    %1 = vector.load %arg2[%c0_1, %c0_2] : memref<896x1280xbf16, #tpu.memory_space<vmem>>, vector<896x1280xbf16>
    %cst = arith.constant dense<0.000000e+00> : vector<16x1280xf32>
    %2 = tpu.matmul %0, %1, %cst {dimension_numbers = #tpu.dot_dimension_numbers<[1], [0], [0], [1], [0, 0, 1, 1], [], []>} : vector<16x896xbf16>, vector<896x1280xbf16>, vector<16x1280xf32> -> vector<16x1280xf32>
    %3 = vector.extract_strided_slice %2 {offsets = [0, 0], sizes = [16, 128], strides = [1, 1]} : vector<16x1280xf32> to vector<16x128xf32>
    %4 = vector.extract_strided_slice %2 {offsets = [0, 128], sizes = [16, 128], strides = [1, 1]} : vector<16x1280xf32> to vector<16x128xf32>
    %5 = arith.maximumf %3, %4 : vector<16x128xf32>
    %6 = vector.extract_strided_slice %2 {offsets = [0, 256], sizes = [16, 128], strides = [1, 1]} : vector<16x1280xf32> to vector<16x128xf32>
    %7 = arith.maximumf %5, %6 : vector<16x128xf32>
    %8 = vector.extract_strided_slice %2 {offsets = [0, 384], sizes = [16, 128], strides = [1, 1]} : vector<16x1280xf32> to vector<16x128xf32>
    %9 = arith.maximumf %7, %8 : vector<16x128xf32>
    %10 = vector.extract_strided_slice %2 {offsets = [0, 512], sizes = [16, 128], strides = [1, 1]} : vector<16x1280xf32> to vector<16x128xf32>
    %11 = arith.maximumf %9, %10 : vector<16x128xf32>
    %12 = vector.extract_strided_slice %2 {offsets = [0, 640], sizes = [16, 128], strides = [1, 1]} : vector<16x1280xf32> to vector<16x128xf32>
    %13 = arith.maximumf %11, %12 : vector<16x128xf32>
    %14 = vector.extract_strided_slice %2 {offsets = [0, 768], sizes = [16, 128], strides = [1, 1]} : vector<16x1280xf32> to vector<16x128xf32>
    %15 = arith.maximumf %13, %14 : vector<16x128xf32>
    %16 = vector.extract_strided_slice %2 {offsets = [0, 896], sizes = [16, 128], strides = [1, 1]} : vector<16x1280xf32> to vector<16x128xf32>
    %17 = arith.maximumf %15, %16 : vector<16x128xf32>
    %18 = vector.extract_strided_slice %2 {offsets = [0, 1024], sizes = [16, 128], strides = [1, 1]} : vector<16x1280xf32> to vector<16x128xf32>
    %19 = arith.maximumf %17, %18 : vector<16x128xf32>
    %20 = vector.extract_strided_slice %2 {offsets = [0, 1152], sizes = [16, 128], strides = [1, 1]} : vector<16x1280xf32> to vector<16x128xf32>
    %21 = arith.maximumf %19, %20 : vector<16x128xf32>
    %c0_3 = arith.constant 0 : index
    %c0_4 = arith.constant 0 : index
    %22 = vector.load %arg3[%c0_3, %c0_4] : memref<1x128xf32, #tpu.memory_space<vmem>>, vector<1x128xf32>
    %23 = vector.broadcast %22 : vector<1x128xf32> to vector<16x128xf32>
    %24 = arith.addf %21, %23 : vector<16x128xf32>
    %cst_5 = arith.constant 0.000000e+00 : f32
    %25 = vector.broadcast %cst_5 : f32 to vector<16x128xf32>
    %26 = arith.maximumf %24, %25 : vector<16x128xf32>
    %27 = arith.truncf %26 : vector<16x128xf32> to vector<16x128xbf16>
    %c0_6 = arith.constant 0 : index
    %c0_7 = arith.constant 0 : index
    %28 = vector.load %arg4[%c0_6, %c0_7] : memref<128x256xbf16, #tpu.memory_space<vmem>>, vector<128x256xbf16>
    %cst_8 = arith.constant dense<0.000000e+00> : vector<16x256xf32>
    %29 = tpu.matmul %27, %28, %cst_8 {dimension_numbers = #tpu.dot_dimension_numbers<[1], [0], [0], [1], [0, 0, 1, 1], [], []>} : vector<16x128xbf16>, vector<128x256xbf16>, vector<16x256xf32> -> vector<16x256xf32>
    %c0_9 = arith.constant 0 : index
    %c0_10 = arith.constant 0 : index
    %30 = vector.load %arg5[%c0_9, %c0_10] : memref<1x256xf32, #tpu.memory_space<vmem>>, vector<1x256xf32>
    %31 = vector.broadcast %30 : vector<1x256xf32> to vector<16x256xf32>
    %32 = arith.addf %29, %31 : vector<16x256xf32>
    %33 = vector.extract_strided_slice %32 {offsets = [0, 0], sizes = [16, 128], strides = [1, 1]} : vector<16x256xf32> to vector<16x128xf32>
    %cst_11 = arith.constant 0.000000e+00 : f32
    %34 = vector.broadcast %cst_11 : f32 to vector<16x128xf32>
    %35 = arith.maximumf %33, %34 : vector<16x128xf32>
    %36 = vector.extract_strided_slice %32 {offsets = [0, 128], sizes = [16, 128], strides = [1, 1]} : vector<16x256xf32> to vector<16x128xf32>
    %37 = arith.negf %36 : vector<16x128xf32>
    %38 = math.exp %37 : vector<16x128xf32>
    %cst_12 = arith.constant 1.000000e+00 : f32
    %39 = vector.broadcast %cst_12 : f32 to vector<16x128xf32>
    %40 = arith.addf %39, %38 : vector<16x128xf32>
    %41 = arith.divf %39, %40 : vector<16x128xf32>
    %42 = arith.subf %35, %26 : vector<16x128xf32>
    %43 = arith.mulf %41, %42 : vector<16x128xf32>
    %44 = arith.addf %26, %43 : vector<16x128xf32>
    %c0_13 = arith.constant 0 : index
    %c0_14 = arith.constant 0 : index
    %45 = vector.load %arg6[%c0_13, %c0_14] : memref<16x128xf32, #tpu.memory_space<vmem>>, vector<16x128xf32>
    tpu.vector_store %arg6[%c0_13, %c0_14], %44 {strides = array<i32>} : memref<16x128xf32, #tpu.memory_space<vmem>>, vector<16x128xf32>,
    return
  }
  func.func @transform_0(%arg0: i32) -> (i32, i32) {
    %c0_i32 = arith.constant 0 : i32
    %c0_i32_0 = arith.constant 0 : i32
    return %arg0, %c0_i32 : i32, i32
  }
  func.func @transform_1(%arg0: i32) -> (i32, i32) {
    %c0_i32 = arith.constant 0 : i32
    %c0_i32_0 = arith.constant 0 : i32
    %c0_i32_1 = arith.constant 0 : i32
    return %c0_i32, %c0_i32_0 : i32, i32
  }
  func.func @transform_2(%arg0: i32) -> (i32, i32) {
    %c0_i32 = arith.constant 0 : i32
    %c0_i32_0 = arith.constant 0 : i32
    %c0_i32_1 = arith.constant 0 : i32
    return %c0_i32, %c0_i32_0 : i32, i32
  }
  func.func @transform_3(%arg0: i32) -> (i32, i32) {
    %c0_i32 = arith.constant 0 : i32
    %c0_i32_0 = arith.constant 0 : i32
    %c0_i32_1 = arith.constant 0 : i32
    return %c0_i32, %c0_i32_0 : i32, i32
  }
  func.func @transform_4(%arg0: i32) -> (i32, i32) {
    %c0_i32 = arith.constant 0 : i32
    %c0_i32_0 = arith.constant 0 : i32
    %c0_i32_1 = arith.constant 0 : i32
    return %c0_i32, %c0_i32_0 : i32, i32
  }
  func.func @transform_5(%arg0: i32) -> (i32, i32) {
    %c0_i32 = arith.constant 0 : i32
    %c0_i32_0 = arith.constant 0 : i32
    return %arg0, %c0_i32 : i32, i32
  }
}

</mosaic_0001>

<llo_original>
// kernel: model_embeddings_forward.1
$region0: #{model_embeddings_forward.1}
  #allocation0 [shape = 'u32[]', space=smem, size = 0x4, offset = 0x4, fixed_abs, tag = 'smem constant byte address 0x4 - core index']
  #allocation1 [shape = 'u32[144,128]{1,0:T(1,128)}', space=vmem, size = 0x12000, scoped, tag = 'internal scratch']
  %s0 = inlined_call_operand.vmem [shape: bf16[16,896], index: 0, kind: input, shape index: {}]
  %s1 = inlined_call_operand.hbm [shape: bf16[896,1280], index: 1, kind: input, shape index: {}]
  %s2 = inlined_call_operand.hbm [shape: f32[1,128], index: 2, kind: input, shape index: {}]
  %s3 = inlined_call_operand.hbm [shape: bf16[128,256], index: 3, kind: input, shape index: {}]
  %s4 = inlined_call_operand.hbm [shape: f32[1,256], index: 4, kind: input, shape index: {}]
  %s5 = inlined_call_operand.hbm [shape: f32[16,128], index: 5, kind: output, shape index: {}]
  %s6 = sld [smem:[#allocation0]]
  $region46: #{model_embeddings_forward.1} parent=0
    _
  %s8 = ssub.s32 1, %s6
  %s9 = scalar_select 0, %s8, %s6
  $region1: #{model_embeddings_forward.1} parent=0
    #allocation2 [shape = 'u8[2293760]{0}', space=vmem, size = 0x230000, scoped, tag = 'input window, operand 1, single buffered']
    #allocation3 [shape = 's32[1]{0}', space=sflag, size = 0x4, scoped, tag = 'scoped memory for model_embeddings_forward.1']
    #allocation4 [shape = 's32[1]{0}', space=sflag, size = 0x4, scoped, tag = 'scoped memory for model_embeddings_forward.1']
    #allocation5 [shape = 'u8[512]{0}', space=vmem, size = 0x400, scoped, tag = 'input window, operand 2, single buffered']
    #allocation6 [shape = 's32[1]{0}', space=sflag, size = 0x4, scoped, tag = 'scoped memory for model_embeddings_forward.1']
    #allocation7 [shape = 'u8[65536]{0}', space=vmem, size = 0x10000, scoped, tag = 'input window, operand 3, single buffered']
    #allocation8 [shape = 'u8[1024]{0}', space=vmem, size = 0x400, scoped, tag = 'input window, operand 4, single buffered']
    #allocation9 [shape = 's32[1]{0}', space=sflag, size = 0x4, scoped, tag = 'scoped memory for model_embeddings_forward.1']
    #allocation10 [shape = 'u8[8192]{0}', space=vmem, size = 0x2000, scoped, tag = 'output window, operand 0, single buffered']
    %10 = vsyncpa [#allocation3], 0
    %11 = vsyncpa [#allocation6], 0
    %12 = vsyncpa [#allocation9], 0
    %13 = vsyncpa [#allocation4], 0
    // Predicated region
    $region2: #{model_embeddings_forward.1} parent=1 // pred_check
      _
    $region3: #{model_embeddings_forward.1} parent=1 // pred_check_branch
      %15 = sbr.rel (0) target = $region5
    $region4: #{model_embeddings_forward.1} parent=1 // pred_region
      _
    $region5: #{model_embeddings_forward.1} parent=1 // pred_fallthru
      _
    // Predicated region
    $region6: #{model_embeddings_forward.1} parent=1 // pred_check
      _
    $region7: #{model_embeddings_forward.1} parent=1 // pred_check_branch
      %17 = sbr.rel (0) target = $region9
    $region8: #{model_embeddings_forward.1} parent=1 // pred_region
      %s19 = ssub.s32 71680, 71680
      %20 = vsyncadd [#allocation3], %s19
      %s21 = sshll.u32 [#allocation2], 4
      %s22 = int_to_ptr.vmem [resolvable:$true] %s21
      %27 = dma.hbm_to_vmem [thread:$0]  %s1, 71680, %s22, [#allocation3], 640, 640, 40
    $region9: #{model_embeddings_forward.1} parent=1 // pred_fallthru
      _
    // Predicated region
    $region10: #{model_embeddings_forward.1} parent=1 // pred_check
      _
    $region11: #{model_embeddings_forward.1} parent=1 // pred_check_branch
      %29 = sbr.rel (0) target = $region13
    $region12: #{model_embeddings_forward.1} parent=1 // pred_region
      %s31 = ssub.s32 16, 16
      %32 = vsyncadd [#allocation6], %s31
      %s34 = sshll.u32 [#allocation5], 4
      %s35 = int_to_ptr.vmem [resolvable:$true] %s34
      %37 = dma.hbm_to_vmem [thread:$0]  %s2, 16, %s35, [#allocation6]
    $region13: #{model_embeddings_forward.1} parent=1 // pred_fallthru
      _
    // Predicated region
    $region14: #{model_embeddings_forward.1} parent=1 // pred_check
      _
    $region15: #{model_embeddings_forward.1} parent=1 // pred_check_branch
      %39 = sbr.rel (0) target = $region17
    $region16: #{model_embeddings_forward.1} parent=1 // pred_region
      %s41 = ssub.s32 2048, 2048
      %42 = vsyncadd [#allocation6], %s41
      %s43 = sshll.u32 [#allocation7], 4
      %s44 = int_to_ptr.vmem [resolvable:$true] %s43
      %49 = dma.hbm_to_vmem [thread:$0]  %s3, 2048, %s44, [#allocation6], 128, 128, 8
    $region17: #{model_embeddings_forward.1} parent=1 // pred_fallthru
      _
    // Predicated region
    $region18: #{model_embeddings_forward.1} parent=1 // pred_check
      _
    $region19: #{model_embeddings_forward.1} parent=1 // pred_check_branch
      %51 = sbr.rel (0) target = $region21
    $region20: #{model_embeddings_forward.1} parent=1 // pred_region
      %s53 = ssub.s32 32, 32
      %54 = vsyncadd [#allocation9], %s53
      %s56 = sshll.u32 [#allocation8], 4
      %s57 = int_to_ptr.vmem [resolvable:$true] %s56
      %59 = dma.hbm_to_vmem [thread:$0]  %s4, 32, %s57, [#allocation9]
    $region21: #{model_embeddings_forward.1} parent=1 // pred_fallthru
      _
    // Predicated region
    $region22: #{model_embeddings_forward.1} parent=1 // pred_check
      _
    $region23: #{model_embeddings_forward.1} parent=1 // pred_check_branch
      %61 = sbr.rel (0) target = $region25
    $region24: #{model_embeddings_forward.1} parent=1 // pred_region
      %62 = dma.done [#allocation3], 71680
    $region25: #{model_embeddings_forward.1} parent=1 // pred_fallthru
      _
    // Predicated region
    $region26: #{model_embeddings_forward.1} parent=1 // pred_check
      _
    $region27: #{model_embeddings_forward.1} parent=1 // pred_check_branch
      %64 = sbr.rel (0) target = $region29
    $region28: #{model_embeddings_forward.1} parent=1 // pred_region
      %65 = dma.done [#allocation6], 16
    $region29: #{model_embeddings_forward.1} parent=1 // pred_fallthru
      _
    // Predicated region
    $region30: #{model_embeddings_forward.1} parent=1 // pred_check
      _
    $region31: #{model_embeddings_forward.1} parent=1 // pred_check_branch
      %67 = sbr.rel (0) target = $region33
    $region32: #{model_embeddings_forward.1} parent=1 // pred_region
      %68 = dma.done [#allocation6], 2048
    $region33: #{model_embeddings_forward.1} parent=1 // pred_fallthru
      _
    // Predicated region
    $region34: #{model_embeddings_forward.1} parent=1 // pred_check
      _
    $region35: #{model_embeddings_forward.1} parent=1 // pred_check_branch
      %70 = sbr.rel (0) target = $region37
    $region36: #{model_embeddings_forward.1} parent=1 // pred_region
      %71 = dma.done [#allocation9], 32
    $region37: #{model_embeddings_forward.1} parent=1 // pred_fallthru
      _
    %v73 = vld [vmem:[%s0] sm:$0xff]
    %v74 = vld [vmem:[%s0 + $0x8] sm:$0xff]
    %v75 = vld [vmem:[%s0 + $0x10] sm:$0xff]
    %v76 = vld [vmem:[%s0 + $0x18] sm:$0xf]
    %v77 = vld [vmem:[%s0 + $0x1c] sm:$0xff]
    %v78 = vld [vmem:[%s0 + $0x24] sm:$0xff]
    %v79 = vld [vmem:[%s0 + $0x2c] sm:$0xff]
    %v80 = vld [vmem:[%s0 + $0x34] sm:$0xf]
    %v81 = vld [vmem:[#allocation2] sm:$0xff]
    %v82 = vld [vmem:[#allocation2 + $0x8] sm:$0xff]
    %v83 = vld [vmem:[#allocation2 + $0x10] sm:$0xff]
    %v84 = vld [vmem:[#allocation2 + $0x18] sm:$0xff]
    %v85 = vld [vmem:[#allocation2 + $0x20] sm:$0xff]
    %v86 = vld [vmem:[#allocation2 + $0x28] sm:$0xff]
    %v87 = vld [vmem:[#allocation2 + $0x30] sm:$0xff]
    %v88 = vld [vmem:[#allocation2 + $0x38] sm:$0xff]
    %v89 = vld [vmem:[#allocation2 + $0x40] sm:$0xff]
    %v90 = vld [vmem:[#allocation2 + $0x48] sm:$0xff]
    %v91 = vld [vmem:[#allocation2 + $0x50] sm:$0xff]
    %v92 = vld [vmem:[#allocation2 + $0x58] sm:$0xff]
    %v93 = vld [vmem:[#allocation2 + $0x60] sm:$0xff]
    %v94 = vld [vmem:[#allocation2 + $0x68] sm:$0xff]
    %v95 = vld [vmem:[#allocation2 + $0x70] sm:$0xff]
    %v96 = vld [vmem:[#allocation2 + $0x78] sm:$0xff]
    %v97 = vld [vmem:[#allocation2 + $0x80] sm:$0xff]
    %v98 = vld [vmem:[#allocation2 + $0x88] sm:$0xff]
    %v99 = vld [vmem:[#allocation2 + $0x90] sm:$0xff]
    %v100 = vld [vmem:[#allocation2 + $0x98] sm:$0xff]
    %v101 = vld [vmem:[#allocation2 + $0xa0] sm:$0xff]
    %v102 = vld [vmem:[#allocation2 + $0xa8] sm:$0xff]
    %v103 = vld [vmem:[#allocation2 + $0xb0] sm:$0xff]
    %v104 = vld [vmem:[#allocation2 + $0xb8] sm:$0xff]
    %v105 = vld [vmem:[#allocation2 + $0xc0] sm:$0xff]
    %v106 = vld [vmem:[#allocation2 + $0xc8] sm:$0xff]
    %v107 = vld [vmem:[#allocation2 + $0xd0] sm:$0xff]
    %v108 = vld [vmem:[#allocation2 + $0xd8] sm:$0xff]
    %v109 = vld [vmem:[#allocation2 + $0xe0] sm:$0xff]
    %v110 = vld [vmem:[#allocation2 + $0xe8] sm:$0xff]
    %v111 = vld [vmem:[#allocation2 + $0xf0] sm:$0xff]
    %v112 = vld [vmem:[#allocation2 + $0xf8] sm:$0xff]
    %v113 = vld [vmem:[#allocation2 + $0x100] sm:$0xff]
    %v114 = vld [vmem:[#allocation2 + $0x108] sm:$0xff]
    %v115 = vld [vmem:[#allocation2 + $0x110] sm:$0xff]
    %v116 = vld [vmem:[#allocation2 + $0x118] sm:$0xff]
    %v117 = vld [vmem:[#allocation2 + $0x120] sm:$0xff]
    %v118 = vld [vmem:[#allocation2 + $0x128] sm:$0xff]
    %v119 = vld [vmem:[#allocation2 + $0x130] sm:$0xff]
    %v120 = vld [vmem:[#allocation2 + $0x138] sm:$0xff]
    %v121 = vld [vmem:[#allocation2 + $0x140] sm:$0xff]
    %v122 = vld [vmem:[#allocation2 + $0x148] sm:$0xff]
    %v123 = vld [vmem:[#allocation2 + $0x150] sm:$0xff]
    %v124 = vld [vmem:[#allocation2 + $0x158] sm:$0xff]
    %v125 = vld [vmem:[#allocation2 + $0x160] sm:$0xff]
    %v126 = vld [vmem:[#allocation2 + $0x168] sm:$0xff]
    %v127 = vld [vmem:[#allocation2 + $0x170] sm:$0xff]
    %v128 = vld [vmem:[#allocation2 + $0x178] sm:$0xff]
    %v129 = vld [vmem:[#allocation2 + $0x180] sm:$0xff]
    %v130 = vld [vmem:[#allocation2 + $0x188] sm:$0xff]
    %v131 = vld [vmem:[#allocation2 + $0x190] sm:$0xff]
    %v132 = vld [vmem:[#allocation2 + $0x198] sm:$0xff]
    %v133 = vld [vmem:[#allocation2 + $0x1a0] sm:$0xff]
    %v134 = vld [vmem:[#allocation2 + $0x1a8] sm:$0xff]
    %v135 = vld [vmem:[#allocation2 + $0x1b0] sm:$0xff]
    %v136 = vld [vmem:[#allocation2 + $0x1b8] sm:$0xff]
    %v137 = vld [vmem:[#allocation2 + $0x1c0] sm:$0xff]
    %v138 = vld [vmem:[#allocation2 + $0x1c8] sm:$0xff]
    %v139 = vld [vmem:[#allocation2 + $0x1d0] sm:$0xff]
    %v140 = vld [vmem:[#allocation2 + $0x1d8] sm:$0xff]
    %v141 = vld [vmem:[#allocation2 + $0x1e0] sm:$0xff]
    %v142 = vld [vmem:[#allocation2 + $0x1e8] sm:$0xff]
    %v143 = vld [vmem:[#allocation2 + $0x1f0] sm:$0xff]
    %v144 = vld [vmem:[#allocation2 + $0x1f8] sm:$0xff]
    %v145 = vld [vmem:[#allocation2 + $0x200] sm:$0xff]
    %v146 = vld [vmem:[#allocation2 + $0x208] sm:$0xff]
    %v147 = vld [vmem:[#allocation2 + $0x210] sm:$0xff]
    %v148 = vld [vmem:[#allocation2 + $0x218] sm:$0xff]
    %v149 = vld [vmem:[#allocation2 + $0x220] sm:$0xff]
    %v150 = vld [vmem:[#allocation2 + $0x228] sm:$0xff]
    %v151 = vld [vmem:[#allocation2 + $0x230] sm:$0xff]
    %v152 = vld [vmem:[#allocation2 + $0x238] sm:$0xff]
    %v153 = vld [vmem:[#allocation2 + $0x240] sm:$0xff]
    %v154 = vld [vmem:[#allocation2 + $0x248] sm:$0xff]
    %v155 = vld [vmem:[#allocation2 + $0x250] sm:$0xff]
    %v156 = vld [vmem:[#allocation2 + $0x258] sm:$0xff]
    %v157 = vld [vmem:[#allocation2 + $0x260] sm:$0xff]
    %v158 = vld [vmem:[#allocation2 + $0x268] sm:$0xff]
    %v159 = vld [vmem:[#allocation2 + $0x270] sm:$0xff]
    %v160 = vld [vmem:[#allocation2 + $0x278] sm:$0xff]
    %v161 = vld [vmem:[#allocation2 + $0x280] sm:$0xff]
    %v162 = vld [vmem:[#allocation2 + $0x288] sm:$0xff]
    %v163 = vld [vmem:[#allocation2 + $0x290] sm:$0xff]
    %v164 = vld [vmem:[#allocation2 + $0x298] sm:$0xff]
    %v165 = vld [vmem:[#allocation2 + $0x2a0] sm:$0xff]
    %v166 = vld [vmem:[#allocation2 + $0x2a8] sm:$0xff]
    %v167 = vld [vmem:[#allocation2 + $0x2b0] sm:$0xff]
    %v168 = vld [vmem:[#allocation2 + $0x2b8] sm:$0xff]
    %v169 = vld [vmem:[#allocation2 + $0x2c0] sm:$0xff]
    %v170 = vld [vmem:[#allocation2 + $0x2c8] sm:$0xff]
    %v171 = vld [vmem:[#allocation2 + $0x2d0] sm:$0xff]
    %v172 = vld [vmem:[#allocation2 + $0x2d8] sm:$0xff]
    %v173 = vld [vmem:[#allocation2 + $0x2e0] sm:$0xff]
    %v174 = vld [vmem:[#allocation2 + $0x2e8] sm:$0xff]
    %v175 = vld [vmem:[#allocation2 + $0x2f0] sm:$0xff]
    %v176 = vld [vmem:[#allocation2 + $0x2f8] sm:$0xff]
    %v177 = vld [vmem:[#allocation2 + $0x300] sm:$0xff]
    %v178 = vld [vmem:[#allocation2 + $0x308] sm:$0xff]
    %v179 = vld [vmem:[#allocation2 + $0x310] sm:$0xff]
    %v180 = vld [vmem:[#allocation2 + $0x318] sm:$0xff]
    %v181 = vld [vmem:[#allocation2 + $0x320] sm:$0xff]
    %v182 = vld [vmem:[#allocation2 + $0x328] sm:$0xff]
    %v183 = vld [vmem:[#allocation2 + $0x330] sm:$0xff]
    %v184 = vld [vmem:[#allocation2 + $0x338] sm:$0xff]
    %v185 = vld [vmem:[#allocation2 + $0x340] sm:$0xff]
    %v186 = vld [vmem:[#allocation2 + $0x348] sm:$0xff]
    %v187 = vld [vmem:[#allocation2 + $0x350] sm:$0xff]
    %v188 = vld [vmem:[#allocation2 + $0x358] sm:$0xff]
    %v189 = vld [vmem:[#allocation2 + $0x360] sm:$0xff]
    %v190 = vld [vmem:[#allocation2 + $0x368] sm:$0xff]
    %v191 = vld [vmem:[#allocation2 + $0x370] sm:$0xff]
    %v192 = vld [vmem:[#allocation2 + $0x378] sm:$0xff]
    %v193 = vld [vmem:[#allocation2 + $0x380] sm:$0xff]
    %v194 = vld [vmem:[#allocation2 + $0x388] sm:$0xff]
    %v195 = vld [vmem:[#allocation2 + $0x390] sm:$0xff]
    %v196 = vld [vmem:[#allocation2 + $0x398] sm:$0xff]
    %v197 = vld [vmem:[#allocation2 + $0x3a0] sm:$0xff]
    %v198 = vld [vmem:[#allocation2 + $0x3a8] sm:$0xff]
    %v199 = vld [vmem:[#allocation2 + $0x3b0] sm:$0xff]
    %v200 = vld [vmem:[#allocation2 + $0x3b8] sm:$0xff]
    %v201 = vld [vmem:[#allocation2 + $0x3c0] sm:$0xff]
    %v202 = vld [vmem:[#allocation2 + $0x3c8] sm:$0xff]
    %v203 = vld [vmem:[#allocation2 + $0x3d0] sm:$0xff]
    %v204 = vld [vmem:[#allocation2 + $0x3d8] sm:$0xff]
    %v205 = vld [vmem:[#allocation2 + $0x3e0] sm:$0xff]
    %v206 = vld [vmem:[#allocation2 + $0x3e8] sm:$0xff]
    %v207 = vld [vmem:[#allocation2 + $0x3f0] sm:$0xff]
    %v208 = vld [vmem:[#allocation2 + $0x3f8] sm:$0xff]
    %v209 = vld [vmem:[#allocation2 + $0x400] sm:$0xff]
    %v210 = vld [vmem:[#allocation2 + $0x408] sm:$0xff]
    %v211 = vld [vmem:[#allocation2 + $0x410] sm:$0xff]
    %v212 = vld [vmem:[#allocation2 + $0x418] sm:$0xff]
    %v213 = vld [vmem:[#allocation2 + $0x420] sm:$0xff]
    %v214 = vld [vmem:[#allocation2 + $0x428] sm:$0xff]
    %v215 = vld [vmem:[#allocation2 + $0x430] sm:$0xff]
    %v216 = vld [vmem:[#allocation2 + $0x438] sm:$0xff]
    %v217 = vld [vmem:[#allocation2 + $0x440] sm:$0xff]
    %v218 = vld [vmem:[#allocation2 + $0x448] sm:$0xff]
    %v219 = vld [vmem:[#allocation2 + $0x450] sm:$0xff]
    %v220 = vld [vmem:[#allocation2 + $0x458] sm:$0xff]
    %v221 = vld [vmem:[#allocation2 + $0x460] sm:$0xff]
    %v222 = vld [vmem:[#allocation2 + $0x468] sm:$0xff]
    %v223 = vld [vmem:[#allocation2 + $0x470] sm:$0xff]
    %v224 = vld [vmem:[#allocation2 + $0x478] sm:$0xff]
    %v225 = vld [vmem:[#allocation2 + $0x480] sm:$0xff]
    %v226 = vld [vmem:[#allocation2 + $0x488] sm:$0xff]
    %v227 = vld [vmem:[#allocation2 + $0x490] sm:$0xff]
    %v228 = vld [vmem:[#allocation2 + $0x498] sm:$0xff]
    %v229 = vld [vmem:[#allocation2 + $0x4a0] sm:$0xff]
    %v230 = vld [vmem:[#allocation2 + $0x4a8] sm:$0xff]
    %v231 = vld [vmem:[#allocation2 + $0x4b0] sm:$0xff]
    %v232 = vld [vmem:[#allocation2 + $0x4b8] sm:$0xff]
    %v233 = vld [vmem:[#allocation2 + $0x4c0] sm:$0xff]
    %v234 = vld [vmem:[#allocation2 + $0x4c8] sm:$0xff]
    %v235 = vld [vmem:[#allocation2 + $0x4d0] sm:$0xff]
    %v236 = vld [vmem:[#allocation2 + $0x4d8] sm:$0xff]
    %v237 = vld [vmem:[#allocation2 + $0x4e0] sm:$0xff]
    %v238 = vld [vmem:[#allocation2 + $0x4e8] sm:$0xff]
    %v239 = vld [vmem:[#allocation2 + $0x4f0] sm:$0xff]
    %v240 = vld [vmem:[#allocation2 + $0x4f8] sm:$0xff]
    %v241 = vld [vmem:[#allocation2 + $0x500] sm:$0xff]
    %v242 = vld [vmem:[#allocation2 + $0x508] sm:$0xff]
    %v243 = vld [vmem:[#allocation2 + $0x510] sm:$0xff]
    %v244 = vld [vmem:[#allocation2 + $0x518] sm:$0xff]
    %v245 = vld [vmem:[#allocation2 + $0x520] sm:$0xff]
    %v246 = vld [vmem:[#allocation2 + $0x528] sm:$0xff]
    %v247 = vld [vmem:[#allocation2 + $0x530] sm:$0xff]
    %v248 = vld [vmem:[#allocation2 + $0x538] sm:$0xff]
    %v249 = vld [vmem:[#allocation2 + $0x540] sm:$0xff]
    %v250 = vld [vmem:[#allocation2 + $0x548] sm:$0xff]
    %v251 = vld [vmem:[#allocation2 + $0x550] sm:$0xff]
    %v252 = vld [vmem:[#allocation2 + $0x558] sm:$0xff]
    %v253 = vld [vmem:[#allocation2 + $0x560] sm:$0xff]
    %v254 = vld [vmem:[#allocation2 + $0x568] sm:$0xff]
    %v255 = vld [vmem:[#allocation2 + $0x570] sm:$0xff]
    %v256 = vld [vmem:[#allocation2 + $0x578] sm:$0xff]
    %v257 = vld [vmem:[#allocation2 + $0x580] sm:$0xff]
    %v258 = vld [vmem:[#allocation2 + $0x588] sm:$0xff]
    %v259 = vld [vmem:[#allocation2 + $0x590] sm:$0xff]
    %v260 = vld [vmem:[#allocation2 + $0x598] sm:$0xff]
    %v261 = vld [vmem:[#allocation2 + $0x5a0] sm:$0xff]
    %v262 = vld [vmem:[#allocation2 + $0x5a8] sm:$0xff]
    %v263 = vld [vmem:[#allocation2 + $0x5b0] sm:$0xff]
    %v264 = vld [vmem:[#allocation2 + $0x5b8] sm:$0xff]
    %v265 = vld [vmem:[#allocation2 + $0x5c0] sm:$0xff]
    %v266 = vld [vmem:[#allocation2 + $0x5c8] sm:$0xff]
    %v267 = vld [vmem:[#allocation2 + $0x5d0] sm:$0xff]
    %v268 = vld [vmem:[#allocation2 + $0x5d8] sm:$0xff]
    %v269 = vld [vmem:[#allocation2 + $0x5e0] sm:$0xff]
    %v270 = vld [vmem:[#allocation2 + $0x5e8] sm:$0xff]
    %v271 = vld [vmem:[#allocation2 + $0x5f0] sm:$0xff]
    %v272 = vld [vmem:[#allocation2 + $0x5f8] sm:$0xff]
    %v273 = vld [vmem:[#allocation2 + $0x600] sm:$0xff]
    %v274 = vld [vmem:[#allocation2 + $0x608] sm:$0xff]
    %v275 = vld [vmem:[#allocation2 + $0x610] sm:$0xff]
    %v276 = vld [vmem:[#allocation2 + $0x618] sm:$0xff]
    %v277 = vld [vmem:[#allocation2 + $0x620] sm:$0xff]
    %v278 = vld [vmem:[#allocation2 + $0x628] sm:$0xff]
    %v279 = vld [vmem:[#allocation2 + $0x630] sm:$0xff]
    %v280 = vld [vmem:[#allocation2 + $0x638] sm:$0xff]
    %v281 = vld [vmem:[#allocation2 + $0x640] sm:$0xff]
    %v282 = vld [vmem:[#allocation2 + $0x648] sm:$0xff]
    %v283 = vld [vmem:[#allocation2 + $0x650] sm:$0xff]
    %v284 = vld [vmem:[#allocation2 + $0x658] sm:$0xff]
    %v285 = vld [vmem:[#allocation2 + $0x660] sm:$0xff]
    %v286 = vld [vmem:[#allocation2 + $0x668] sm:$0xff]
    %v287 = vld [vmem:[#allocation2 + $0x670] sm:$0xff]
    %v288 = vld [vmem:[#allocation2 + $0x678] sm:$0xff]
    %v289 = vld [vmem:[#allocation2 + $0x680] sm:$0xff]
    %v290 = vld [vmem:[#allocation2 + $0x688] sm:$0xff]
    %v291 = vld [vmem:[#allocation2 + $0x690] sm:$0xff]
    %v292 = vld [vmem:[#allocation2 + $0x698] sm:$0xff]
    %v293 = vld [vmem:[#allocation2 + $0x6a0] sm:$0xff]
    %v294 = vld [vmem:[#allocation2 + $0x6a8] sm:$0xff]
    %v295 = vld [vmem:[#allocation2 + $0x6b0] sm:$0xff]
    %v296 = vld [vmem:[#allocation2 + $0x6b8] sm:$0xff]
    %v297 = vld [vmem:[#allocation2 + $0x6c0] sm:$0xff]
    %v298 = vld [vmem:[#allocation2 + $0x6c8] sm:$0xff]
    %v299 = vld [vmem:[#allocation2 + $0x6d0] sm:$0xff]
    %v300 = vld [vmem:[#allocation2 + $0x6d8] sm:$0xff]
    %v301 = vld [vmem:[#allocation2 + $0x6e0] sm:$0xff]
    %v302 = vld [vmem:[#allocation2 + $0x6e8] sm:$0xff]
    %v303 = vld [vmem:[#allocation2 + $0x6f0] sm:$0xff]
    %v304 = vld [vmem:[#allocation2 + $0x6f8] sm:$0xff]
    %v305 = vld [vmem:[#allocation2 + $0x700] sm:$0xff]
    %v306 = vld [vmem:[#allocation2 + $0x708] sm:$0xff]
    %v307 = vld [vmem:[#allocation2 + $0x710] sm:$0xff]
    %v308 = vld [vmem:[#allocation2 + $0x718] sm:$0xff]
    %v309 = vld [vmem:[#allocation2 + $0x720] sm:$0xff]
    %v310 = vld [vmem:[#allocation2 + $0x728] sm:$0xff]
    %v311 = vld [vmem:[#allocation2 + $0x730] sm:$0xff]
    %v312 = vld [vmem:[#allocation2 + $0x738] sm:$0xff]
    %v313 = vld [vmem:[#allocation2 + $0x740] sm:$0xff]
    %v314 = vld [vmem:[#allocation2 + $0x748] sm:$0xff]
    %v315 = vld [vmem:[#allocation2 + $0x750] sm:$0xff]
    %v316 = vld [vmem:[#allocation2 + $0x758] sm:$0xff]
    %v317 = vld [vmem:[#allocation2 + $0x760] sm:$0xff]
    %v318 = vld [vmem:[#allocation2 + $0x768] sm:$0xff]
    %v319 = vld [vmem:[#allocation2 + $0x770] sm:$0xff]
    %v320 = vld [vmem:[#allocation2 + $0x778] sm:$0xff]
    %v321 = vld [vmem:[#allocation2 + $0x780] sm:$0xff]
    %v322 = vld [vmem:[#allocation2 + $0x788] sm:$0xff]
    %v323 = vld [vmem:[#allocation2 + $0x790] sm:$0xff]
    %v324 = vld [vmem:[#allocation2 + $0x798] sm:$0xff]
    %v325 = vld [vmem:[#allocation2 + $0x7a0] sm:$0xff]
    %v326 = vld [vmem:[#allocation2 + $0x7a8] sm:$0xff]
    %v327 = vld [vmem:[#allocation2 + $0x7b0] sm:$0xff]
    %v328 = vld [vmem:[#allocation2 + $0x7b8] sm:$0xff]
    %v329 = vld [vmem:[#allocation2 + $0x7c0] sm:$0xff]
    %v330 = vld [vmem:[#allocation2 + $0x7c8] sm:$0xff]
    %v331 = vld [vmem:[#allocation2 + $0x7d0] sm:$0xff]
    %v332 = vld [vmem:[#allocation2 + $0x7d8] sm:$0xff]
    %v333 = vld [vmem:[#allocation2 + $0x7e0] sm:$0xff]
    %v334 = vld [vmem:[#allocation2 + $0x7e8] sm:$0xff]
    %v335 = vld [vmem:[#allocation2 + $0x7f0] sm:$0xff]
    %v336 = vld [vmem:[#allocation2 + $0x7f8] sm:$0xff]
    %v337 = vld [vmem:[#allocation2 + $0x800] sm:$0xff]
    %v338 = vld [vmem:[#allocation2 + $0x808] sm:$0xff]
    %v339 = vld [vmem:[#allocation2 + $0x810] sm:$0xff]
    %v340 = vld [vmem:[#allocation2 + $0x818] sm:$0xff]
    %v341 = vld [vmem:[#allocation2 + $0x820] sm:$0xff]
    %v342 = vld [vmem:[#allocation2 + $0x828] sm:$0xff]
    %v343 = vld [vmem:[#allocation2 + $0x830] sm:$0xff]
    %v344 = vld [vmem:[#allocation2 + $0x838] sm:$0xff]
    %v345 = vld [vmem:[#allocation2 + $0x840] sm:$0xff]
    %v346 = vld [vmem:[#allocation2 + $0x848] sm:$0xff]
    %v347 = vld [vmem:[#allocation2 + $0x850] sm:$0xff]
    %v348 = vld [vmem:[#allocation2 + $0x858] sm:$0xff]
    %v349 = vld [vmem:[#allocation2 + $0x860] sm:$0xff]
    %v350 = vld [vmem:[#allocation2 + $0x868] sm:$0xff]
    %v351 = vld [vmem:[#allocation2 + $0x870] sm:$0xff]
    %v352 = vld [vmem:[#allocation2 + $0x878] sm:$0xff]
    %v353 = vld [vmem:[#allocation2 + $0x880] sm:$0xff]
    %v354 = vld [vmem:[#allocation2 + $0x888] sm:$0xff]
    %v355 = vld [vmem:[#allocation2 + $0x890] sm:$0xff]
    %v356 = vld [vmem:[#allocation2 + $0x898] sm:$0xff]
    %v357 = vld [vmem:[#allocation2 + $0x8a0] sm:$0xff]
    %v358 = vld [vmem:[#allocation2 + $0x8a8] sm:$0xff]
    %v359 = vld [vmem:[#allocation2 + $0x8b0] sm:$0xff]
    %v360 = vld [vmem:[#allocation2 + $0x8b8] sm:$0xff]
    %v361 = vld [vmem:[#allocation2 + $0x8c0] sm:$0xff]
    %v362 = vld [vmem:[#allocation2 + $0x8c8] sm:$0xff]
    %v363 = vld [vmem:[#allocation2 + $0x8d0] sm:$0xff]
    %v364 = vld [vmem:[#allocation2 + $0x8d8] sm:$0xff]
    %v365 = vld [vmem:[#allocation2 + $0x8e0] sm:$0xff]
    %v366 = vld [vmem:[#allocation2 + $0x8e8] sm:$0xff]
    %v367 = vld [vmem:[#allocation2 + $0x8f0] sm:$0xff]
    %v368 = vld [vmem:[#allocation2 + $0x8f8] sm:$0xff]
    %v369 = vld [vmem:[#allocation2 + $0x900] sm:$0xff]
    %v370 = vld [vmem:[#allocation2 + $0x908] sm:$0xff]
    %v371 = vld [vmem:[#allocation2 + $0x910] sm:$0xff]
    %v372 = vld [vmem:[#allocation2 + $0x918] sm:$0xff]
    %v373 = vld [vmem:[#allocation2 + $0x920] sm:$0xff]
    %v374 = vld [vmem:[#allocation2 + $0x928] sm:$0xff]
    %v375 = vld [vmem:[#allocation2 + $0x930] sm:$0xff]
    %v376 = vld [vmem:[#allocation2 + $0x938] sm:$0xff]
    %v377 = vld [vmem:[#allocation2 + $0x940] sm:$0xff]
    %v378 = vld [vmem:[#allocation2 + $0x948] sm:$0xff]
    %v379 = vld [vmem:[#allocation2 + $0x950] sm:$0xff]
    %v380 = vld [vmem:[#allocation2 + $0x958] sm:$0xff]
    %v381 = vld [vmem:[#allocation2 + $0x960] sm:$0xff]
    %v382 = vld [vmem:[#allocation2 + $0x968] sm:$0xff]
    %v383 = vld [vmem:[#allocation2 + $0x970] sm:$0xff]
    %v384 = vld [vmem:[#allocation2 + $0x978] sm:$0xff]
    %v385 = vld [vmem:[#allocation2 + $0x980] sm:$0xff]
    %v386 = vld [vmem:[#allocation2 + $0x988] sm:$0xff]
    %v387 = vld [vmem:[#allocation2 + $0x990] sm:$0xff]
    %v388 = vld [vmem:[#allocation2 + $0x998] sm:$0xff]
    %v389 = vld [vmem:[#allocation2 + $0x9a0] sm:$0xff]
    %v390 = vld [vmem:[#allocation2 + $0x9a8] sm:$0xff]
    %v391 = vld [vmem:[#allocation2 + $0x9b0] sm:$0xff]
    %v392 = vld [vmem:[#allocation2 + $0x9b8] sm:$0xff]
    %v393 = vld [vmem:[#allocation2 + $0x9c0] sm:$0xff]
    %v394 = vld [vmem:[#allocation2 + $0x9c8] sm:$0xff]
    %v395 = vld [vmem:[#allocation2 + $0x9d0] sm:$0xff]
    %v396 = vld [vmem:[#allocation2 + $0x9d8] sm:$0xff]
    %v397 = vld [vmem:[#allocation2 + $0x9e0] sm:$0xff]
    %v398 = vld [vmem:[#allocation2 + $0x9e8] sm:$0xff]
    %v399 = vld [vmem:[#allocation2 + $0x9f0] sm:$0xff]
    %v400 = vld [vmem:[#allocation2 + $0x9f8] sm:$0xff]
    %v401 = vld [vmem:[#allocation2 + $0xa00] sm:$0xff]
    %v402 = vld [vmem:[#allocation2 + $0xa08] sm:$0xff]
    %v403 = vld [vmem:[#allocation2 + $0xa10] sm:$0xff]
    %v404 = vld [vmem:[#allocation2 + $0xa18] sm:$0xff]
    %v405 = vld [vmem:[#allocation2 + $0xa20] sm:$0xff]
    %v406 = vld [vmem:[#allocation2 + $0xa28] sm:$0xff]
    %v407 = vld [vmem:[#allocation2 + $0xa30] sm:$0xff]
    %v408 = vld [vmem:[#allocation2 + $0xa38] sm:$0xff]
    %v409 = vld [vmem:[#allocation2 + $0xa40] sm:$0xff]
    %v410 = vld [vmem:[#allocation2 + $0xa48] sm:$0xff]
    %v411 = vld [vmem:[#allocation2 + $0xa50] sm:$0xff]
    %v412 = vld [vmem:[#allocation2 + $0xa58] sm:$0xff]
    %v413 = vld [vmem:[#allocation2 + $0xa60] sm:$0xff]
    %v414 = vld [vmem:[#allocation2 + $0xa68] sm:$0xff]
    %v415 = vld [vmem:[#allocation2 + $0xa70] sm:$0xff]
    %v416 = vld [vmem:[#allocation2 + $0xa78] sm:$0xff]
    %v417 = vld [vmem:[#allocation2 + $0xa80] sm:$0xff]
    %v418 = vld [vmem:[#allocation2 + $0xa88] sm:$0xff]
    %v419 = vld [vmem:[#allocation2 + $0xa90] sm:$0xff]
    %v420 = vld [vmem:[#allocation2 + $0xa98] sm:$0xff]
    %v421 = vld [vmem:[#allocation2 + $0xaa0] sm:$0xff]
    %v422 = vld [vmem:[#allocation2 + $0xaa8] sm:$0xff]
    %v423 = vld [vmem:[#allocation2 + $0xab0] sm:$0xff]
    %v424 = vld [vmem:[#allocation2 + $0xab8] sm:$0xff]
    %v425 = vld [vmem:[#allocation2 + $0xac0] sm:$0xff]
    %v426 = vld [vmem:[#allocation2 + $0xac8] sm:$0xff]
    %v427 = vld [vmem:[#allocation2 + $0xad0] sm:$0xff]
    %v428 = vld [vmem:[#allocation2 + $0xad8] sm:$0xff]
    %v429 = vld [vmem:[#allocation2 + $0xae0] sm:$0xff]
    %v430 = vld [vmem:[#allocation2 + $0xae8] sm:$0xff]
    %v431 = vld [vmem:[#allocation2 + $0xaf0] sm:$0xff]
    %v432 = vld [vmem:[#allocation2 + $0xaf8] sm:$0xff]
    %v433 = vld [vmem:[#allocation2 + $0xb00] sm:$0xff]
    %v434 = vld [vmem:[#allocation2 + $0xb08] sm:$0xff]
    %v435 = vld [vmem:[#allocation2 + $0xb10] sm:$0xff]
    %v436 = vld [vmem:[#allocation2 + $0xb18] sm:$0xff]
    %v437 = vld [vmem:[#allocation2 + $0xb20] sm:$0xff]
    %v438 = vld [vmem:[#allocation2 + $0xb28] sm:$0xff]
    %v439 = vld [vmem:[#allocation2 + $0xb30] sm:$0xff]
    %v440 = vld [vmem:[#allocation2 + $0xb38] sm:$0xff]
    %v441 = vld [vmem:[#allocation2 + $0xb40] sm:$0xff]
    %v442 = vld [vmem:[#allocation2 + $0xb48] sm:$0xff]
    %v443 = vld [vmem:[#allocation2 + $0xb50] sm:$0xff]
    %v444 = vld [vmem:[#allocation2 + $0xb58] sm:$0xff]
    %v445 = vld [vmem:[#allocation2 + $0xb60] sm:$0xff]
    %v446 = vld [vmem:[#allocation2 + $0xb68] sm:$0xff]
    %v447 = vld [vmem:[#allocation2 + $0xb70] sm:$0xff]
    %v448 = vld [vmem:[#allocation2 + $0xb78] sm:$0xff]
    %v449 = vld [vmem:[#allocation2 + $0xb80] sm:$0xff]
    %v450 = vld [vmem:[#allocation2 + $0xb88] sm:$0xff]
    %v451 = vld [vmem:[#allocation2 + $0xb90] sm:$0xff]
    %v452 = vld [vmem:[#allocation2 + $0xb98] sm:$0xff]
    %v453 = vld [vmem:[#allocation2 + $0xba0] sm:$0xff]
    %v454 = vld [vmem:[#allocation2 + $0xba8] sm:$0xff]
    %v455 = vld [vmem:[#allocation2 + $0xbb0] sm:$0xff]
    %v456 = vld [vmem:[#allocation2 + $0xbb8] sm:$0xff]
    %v457 = vld [vmem:[#allocation2 + $0xbc0] sm:$0xff]
    %v458 = vld [vmem:[#allocation2 + $0xbc8] sm:$0xff]
    %v459 = vld [vmem:[#allocation2 + $0xbd0] sm:$0xff]
    %v460 = vld [vmem:[#allocation2 + $0xbd8] sm:$0xff]
    %v461 = vld [vmem:[#allocation2 + $0xbe0] sm:$0xff]
    %v462 = vld [vmem:[#allocation2 + $0xbe8] sm:$0xff]
    %v463 = vld [vmem:[#allocation2 + $0xbf0] sm:$0xff]
    %v464 = vld [vmem:[#allocation2 + $0xbf8] sm:$0xff]
    %v465 = vld [vmem:[#allocation2 + $0xc00] sm:$0xff]
    %v466 = vld [vmem:[#allocation2 + $0xc08] sm:$0xff]
    %v467 = vld [vmem:[#allocation2 + $0xc10] sm:$0xff]
    %v468 = vld [vmem:[#allocation2 + $0xc18] sm:$0xff]
    %v469 = vld [vmem:[#allocation2 + $0xc20] sm:$0xff]
    %v470 = vld [vmem:[#allocation2 + $0xc28] sm:$0xff]
    %v471 = vld [vmem:[#allocation2 + $0xc30] sm:$0xff]
    %v472 = vld [vmem:[#allocation2 + $0xc38] sm:$0xff]
    %v473 = vld [vmem:[#allocation2 + $0xc40] sm:$0xff]
    %v474 = vld [vmem:[#allocation2 + $0xc48] sm:$0xff]
    %v475 = vld [vmem:[#allocation2 + $0xc50] sm:$0xff]
    %v476 = vld [vmem:[#allocation2 + $0xc58] sm:$0xff]
    %v477 = vld [vmem:[#allocation2 + $0xc60] sm:$0xff]
    %v478 = vld [vmem:[#allocation2 + $0xc68] sm:$0xff]
    %v479 = vld [vmem:[#allocation2 + $0xc70] sm:$0xff]
    %v480 = vld [vmem:[#allocation2 + $0xc78] sm:$0xff]
    %v481 = vld [vmem:[#allocation2 + $0xc80] sm:$0xff]
    %v482 = vld [vmem:[#allocation2 + $0xc88] sm:$0xff]
    %v483 = vld [vmem:[#allocation2 + $0xc90] sm:$0xff]
    %v484 = vld [vmem:[#allocation2 + $0xc98] sm:$0xff]
    %v485 = vld [vmem:[#allocation2 + $0xca0] sm:$0xff]
    %v486 = vld [vmem:[#allocation2 + $0xca8] sm:$0xff]
    %v487 = vld [vmem:[#allocation2 + $0xcb0] sm:$0xff]
    %v488 = vld [vmem:[#allocation2 + $0xcb8] sm:$0xff]
    %v489 = vld [vmem:[#allocation2 + $0xcc0] sm:$0xff]
    %v490 = vld [vmem:[#allocation2 + $0xcc8] sm:$0xff]
    %v491 = vld [vmem:[#allocation2 + $0xcd0] sm:$0xff]
    %v492 = vld [vmem:[#allocation2 + $0xcd8] sm:$0xff]
    %v493 = vld [vmem:[#allocation2 + $0xce0] sm:$0xff]
    %v494 = vld [vmem:[#allocation2 + $0xce8] sm:$0xff]
    %v495 = vld [vmem:[#allocation2 + $0xcf0] sm:$0xff]
    %v496 = vld [vmem:[#allocation2 + $0xcf8] sm:$0xff]
    %v497 = vld [vmem:[#allocation2 + $0xd00] sm:$0xff]
    %v498 = vld [vmem:[#allocation2 + $0xd08] sm:$0xff]
    %v499 = vld [vmem:[#allocation2 + $0xd10] sm:$0xff]
    %v500 = vld [vmem:[#allocation2 + $0xd18] sm:$0xff]
    %v501 = vld [vmem:[#allocation2 + $0xd20] sm:$0xff]
    %v502 = vld [vmem:[#allocation2 + $0xd28] sm:$0xff]
    %v503 = vld [vmem:[#allocation2 + $0xd30] sm:$0xff]
    %v504 = vld [vmem:[#allocation2 + $0xd38] sm:$0xff]
    %v505 = vld [vmem:[#allocation2 + $0xd40] sm:$0xff]
    %v506 = vld [vmem:[#allocation2 + $0xd48] sm:$0xff]
    %v507 = vld [vmem:[#allocation2 + $0xd50] sm:$0xff]
    %v508 = vld [vmem:[#allocation2 + $0xd58] sm:$0xff]
    %v509 = vld [vmem:[#allocation2 + $0xd60] sm:$0xff]
    %v510 = vld [vmem:[#allocation2 + $0xd68] sm:$0xff]
    %v511 = vld [vmem:[#allocation2 + $0xd70] sm:$0xff]
    %v512 = vld [vmem:[#allocation2 + $0xd78] sm:$0xff]
    %v513 = vld [vmem:[#allocation2 + $0xd80] sm:$0xff]
    %v514 = vld [vmem:[#allocation2 + $0xd88] sm:$0xff]
    %v515 = vld [vmem:[#allocation2 + $0xd90] sm:$0xff]
    %v516 = vld [vmem:[#allocation2 + $0xd98] sm:$0xff]
    %v517 = vld [vmem:[#allocation2 + $0xda0] sm:$0xff]
    %v518 = vld [vmem:[#allocation2 + $0xda8] sm:$0xff]
    %v519 = vld [vmem:[#allocation2 + $0xdb0] sm:$0xff]
    %v520 = vld [vmem:[#allocation2 + $0xdb8] sm:$0xff]
    %v521 = vld [vmem:[#allocation2 + $0xdc0] sm:$0xff]
    %v522 = vld [vmem:[#allocation2 + $0xdc8] sm:$0xff]
    %v523 = vld [vmem:[#allocation2 + $0xdd0] sm:$0xff]
    %v524 = vld [vmem:[#allocation2 + $0xdd8] sm:$0xff]
    %v525 = vld [vmem:[#allocation2 + $0xde0] sm:$0xff]
    %v526 = vld [vmem:[#allocation2 + $0xde8] sm:$0xff]
    %v527 = vld [vmem:[#allocation2 + $0xdf0] sm:$0xff]
    %v528 = vld [vmem:[#allocation2 + $0xdf8] sm:$0xff]
    %v529 = vld [vmem:[#allocation2 + $0xe00] sm:$0xff]
    %v530 = vld [vmem:[#allocation2 + $0xe08] sm:$0xff]
    %v531 = vld [vmem:[#allocation2 + $0xe10] sm:$0xff]
    %v532 = vld [vmem:[#allocation2 + $0xe18] sm:$0xff]
    %v533 = vld [vmem:[#allocation2 + $0xe20] sm:$0xff]
    %v534 = vld [vmem:[#allocation2 + $0xe28] sm:$0xff]
    %v535 = vld [vmem:[#allocation2 + $0xe30] sm:$0xff]
    %v536 = vld [vmem:[#allocation2 + $0xe38] sm:$0xff]
    %v537 = vld [vmem:[#allocation2 + $0xe40] sm:$0xff]
    %v538 = vld [vmem:[#allocation2 + $0xe48] sm:$0xff]
    %v539 = vld [vmem:[#allocation2 + $0xe50] sm:$0xff]
    %v540 = vld [vmem:[#allocation2 + $0xe58] sm:$0xff]
    %v541 = vld [vmem:[#allocation2 + $0xe60] sm:$0xff]
    %v542 = vld [vmem:[#allocation2 + $0xe68] sm:$0xff]
    %v543 = vld [vmem:[#allocation2 + $0xe70] sm:$0xff]
    %v544 = vld [vmem:[#allocation2 + $0xe78] sm:$0xff]
    %v545 = vld [vmem:[#allocation2 + $0xe80] sm:$0xff]
    %v546 = vld [vmem:[#allocation2 + $0xe88] sm:$0xff]
    %v547 = vld [vmem:[#allocation2 + $0xe90] sm:$0xff]
    %v548 = vld [vmem:[#allocation2 + $0xe98] sm:$0xff]
    %v549 = vld [vmem:[#allocation2 + $0xea0] sm:$0xff]
    %v550 = vld [vmem:[#allocation2 + $0xea8] sm:$0xff]
    %v551 = vld [vmem:[#allocation2 + $0xeb0] sm:$0xff]
    %v552 = vld [vmem:[#allocation2 + $0xeb8] sm:$0xff]
    %v553 = vld [vmem:[#allocation2 + $0xec0] sm:$0xff]
    %v554 = vld [vmem:[#allocation2 + $0xec8] sm:$0xff]
    %v555 = vld [vmem:[#allocation2 + $0xed0] sm:$0xff]
    %v556 = vld [vmem:[#allocation2 + $0xed8] sm:$0xff]
    %v557 = vld [vmem:[#allocation2 + $0xee0] sm:$0xff]
    %v558 = vld [vmem:[#allocation2 + $0xee8] sm:$0xff]
    %v559 = vld [vmem:[#allocation2 + $0xef0] sm:$0xff]
    %v560 = vld [vmem:[#allocation2 + $0xef8] sm:$0xff]
    %v561 = vld [vmem:[#allocation2 + $0xf00] sm:$0xff]
    %v562 = vld [vmem:[#allocation2 + $0xf08] sm:$0xff]
    %v563 = vld [vmem:[#allocation2 + $0xf10] sm:$0xff]
    %v564 = vld [vmem:[#allocation2 + $0xf18] sm:$0xff]
    %v565 = vld [vmem:[#allocation2 + $0xf20] sm:$0xff]
    %v566 = vld [vmem:[#allocation2 + $0xf28] sm:$0xff]
    %v567 = vld [vmem:[#allocation2 + $0xf30] sm:$0xff]
    %v568 = vld [vmem:[#allocation2 + $0xf38] sm:$0xff]
    %v569 = vld [vmem:[#allocation2 + $0xf40] sm:$0xff]
    %v570 = vld [vmem:[#allocation2 + $0xf48] sm:$0xff]
    %v571 = vld [vmem:[#allocation2 + $0xf50] sm:$0xff]
    %v572 = vld [vmem:[#allocation2 + $0xf58] sm:$0xff]
    %v573 = vld [vmem:[#allocation2 + $0xf60] sm:$0xff]
    %v574 = vld [vmem:[#allocation2 + $0xf68] sm:$0xff]
    %v575 = vld [vmem:[#allocation2 + $0xf70] sm:$0xff]
    %v576 = vld [vmem:[#allocation2 + $0xf78] sm:$0xff]
    %v577 = vld [vmem:[#allocation2 + $0xf80] sm:$0xff]
    %v578 = vld [vmem:[#allocation2 + $0xf88] sm:$0xff]
    %v579 = vld [vmem:[#allocation2 + $0xf90] sm:$0xff]
    %v580 = vld [vmem:[#allocation2 + $0xf98] sm:$0xff]
    %v581 = vld [vmem:[#allocation2 + $0xfa0] sm:$0xff]
    %v582 = vld [vmem:[#allocation2 + $0xfa8] sm:$0xff]
    %v583 = vld [vmem:[#allocation2 + $0xfb0] sm:$0xff]
    %v584 = vld [vmem:[#allocation2 + $0xfb8] sm:$0xff]
    %v585 = vld [vmem:[#allocation2 + $0xfc0] sm:$0xff]
    %v586 = vld [vmem:[#allocation2 + $0xfc8] sm:$0xff]
    %v587 = vld [vmem:[#allocation2 + $0xfd0] sm:$0xff]
    %v588 = vld [vmem:[#allocation2 + $0xfd8] sm:$0xff]
    %v589 = vld [vmem:[#allocation2 + $0xfe0] sm:$0xff]
    %v590 = vld [vmem:[#allocation2 + $0xfe8] sm:$0xff]
    %v591 = vld [vmem:[#allocation2 + $0xff0] sm:$0xff]
    %v592 = vld [vmem:[#allocation2 + $0xff8] sm:$0xff]
    %v593 = vld [vmem:[#allocation2 + $0x1000] sm:$0xff]
    %v594 = vld [vmem:[#allocation2 + $0x1008] sm:$0xff]
    %v595 = vld [vmem:[#allocation2 + $0x1010] sm:$0xff]
    %v596 = vld [vmem:[#allocation2 + $0x1018] sm:$0xff]
    %v597 = vld [vmem:[#allocation2 + $0x1020] sm:$0xff]
    %v598 = vld [vmem:[#allocation2 + $0x1028] sm:$0xff]
    %v599 = vld [vmem:[#allocation2 + $0x1030] sm:$0xff]
    %v600 = vld [vmem:[#allocation2 + $0x1038] sm:$0xff]
    %v601 = vld [vmem:[#allocation2 + $0x1040] sm:$0xff]
    %v602 = vld [vmem:[#allocation2 + $0x1048] sm:$0xff]
    %v603 = vld [vmem:[#allocation2 + $0x1050] sm:$0xff]
    %v604 = vld [vmem:[#allocation2 + $0x1058] sm:$0xff]
    %v605 = vld [vmem:[#allocation2 + $0x1060] sm:$0xff]
    %v606 = vld [vmem:[#allocation2 + $0x1068] sm:$0xff]
    %v607 = vld [vmem:[#allocation2 + $0x1070] sm:$0xff]
    %v608 = vld [vmem:[#allocation2 + $0x1078] sm:$0xff]
    %v609 = vld [vmem:[#allocation2 + $0x1080] sm:$0xff]
    %v610 = vld [vmem:[#allocation2 + $0x1088] sm:$0xff]
    %v611 = vld [vmem:[#allocation2 + $0x1090] sm:$0xff]
    %v612 = vld [vmem:[#allocation2 + $0x1098] sm:$0xff]
    %v613 = vld [vmem:[#allocation2 + $0x10a0] sm:$0xff]
    %v614 = vld [vmem:[#allocation2 + $0x10a8] sm:$0xff]
    %v615 = vld [vmem:[#allocation2 + $0x10b0] sm:$0xff]
    %v616 = vld [vmem:[#allocation2 + $0x10b8] sm:$0xff]
    %v617 = vld [vmem:[#allocation2 + $0x10c0] sm:$0xff]
    %v618 = vld [vmem:[#allocation2 + $0x10c8] sm:$0xff]
    %v619 = vld [vmem:[#allocation2 + $0x10d0] sm:$0xff]
    %v620 = vld [vmem:[#allocation2 + $0x10d8] sm:$0xff]
    %v621 = vld [vmem:[#allocation2 + $0x10e0] sm:$0xff]
    %v622 = vld [vmem:[#allocation2 + $0x10e8] sm:$0xff]
    %v623 = vld [vmem:[#allocation2 + $0x10f0] sm:$0xff]
    %v624 = vld [vmem:[#allocation2 + $0x10f8] sm:$0xff]
    %v625 = vld [vmem:[#allocation2 + $0x1100] sm:$0xff]
    %v626 = vld [vmem:[#allocation2 + $0x1108] sm:$0xff]
    %v627 = vld [vmem:[#allocation2 + $0x1110] sm:$0xff]
    %v628 = vld [vmem:[#allocation2 + $0x1118] sm:$0xff]
    %v629 = vld [vmem:[#allocation2 + $0x1120] sm:$0xff]
    %v630 = vld [vmem:[#allocation2 + $0x1128] sm:$0xff]
    %v631 = vld [vmem:[#allocation2 + $0x1130] sm:$0xff]
    %v632 = vld [vmem:[#allocation2 + $0x1138] sm:$0xff]
    %v633 = vld [vmem:[#allocation2 + $0x1140] sm:$0xff]
    %v634 = vld [vmem:[#allocation2 + $0x1148] sm:$0xff]
    %v635 = vld [vmem:[#allocation2 + $0x1150] sm:$0xff]
    %v636 = vld [vmem:[#allocation2 + $0x1158] sm:$0xff]
    %v637 = vld [vmem:[#allocation2 + $0x1160] sm:$0xff]
    %v638 = vld [vmem:[#allocation2 + $0x1168] sm:$0xff]
    %v639 = vld [vmem:[#allocation2 + $0x1170] sm:$0xff]
    %v640 = vld [vmem:[#allocation2 + $0x1178] sm:$0xff]
    %v649 = vunpack.c.l.b16 %v73
    %v650 = vunpack.c.h.b16 %v73
    %v651 = vunpack.c.l.b16 %v74
    %v652 = vunpack.c.h.b16 %v74
    %v653 = vunpack.c.l.b16 %v75
    %v654 = vunpack.c.h.b16 %v75
    %v655 = vunpack.c.l.b16 %v76
    %v656 = vunpack.c.l.b16 %v77
    %v657 = vunpack.c.h.b16 %v77
    %v658 = vunpack.c.l.b16 %v78
    %v659 = vunpack.c.h.b16 %v78
    %v660 = vunpack.c.l.b16 %v79
    %v661 = vunpack.c.h.b16 %v79
    %v662 = vunpack.c.l.b16 %v80
    %v663 = vpack.c.b16 %v656, %v649
    %v664 = vpack.c.b16 %v657, %v650
    %v665 = vpack.c.b16 %v658, %v651
    %v666 = vpack.c.b16 %v659, %v652
    %v667 = vpack.c.b16 %v660, %v653
    %v668 = vpack.c.b16 %v661, %v654
    %v669 = vpack.c.b16 %v662, %v655
    %v1237 = vunpack.c.l.b16 %v81
    %v1238 = vunpack.c.h.b16 %v81
    %v1239 = vunpack.c.l.b16 %v82
    %v1240 = vunpack.c.h.b16 %v82
    %v1241 = vunpack.c.l.b16 %v83
    %v1242 = vunpack.c.h.b16 %v83
    %v1243 = vunpack.c.l.b16 %v84
    %v1244 = vunpack.c.h.b16 %v84
    %v1245 = vunpack.c.l.b16 %v85
    %v1246 = vunpack.c.h.b16 %v85
    %v1247 = vunpack.c.l.b16 %v86
    %v1248 = vunpack.c.h.b16 %v86
    %v1249 = vunpack.c.l.b16 %v87
    %v1250 = vunpack.c.h.b16 %v87
    %v1251 = vunpack.c.l.b16 %v88
    %v1252 = vunpack.c.h.b16 %v88
    %v1253 = vunpack.c.l.b16 %v89
    %v1254 = vunpack.c.h.b16 %v89
    %v1255 = vunpack.c.l.b16 %v90
    %v1256 = vunpack.c.h.b16 %v90
    %v1257 = vunpack.c.l.b16 %v91
    %v1258 = vunpack.c.h.b16 %v91
    %v1259 = vunpack.c.l.b16 %v92
    %v1260 = vunpack.c.h.b16 %v92
    %v1261 = vunpack.c.l.b16 %v93
    %v1262 = vunpack.c.h.b16 %v93
    %v1263 = vunpack.c.l.b16 %v94
    %v1264 = vunpack.c.h.b16 %v94
    %v1265 = vunpack.c.l.b16 %v95
    %v1266 = vunpack.c.h.b16 %v95
    %v1267 = vunpack.c.l.b16 %v96
    %v1268 = vunpack.c.h.b16 %v96
    %v1269 = vunpack.c.l.b16 %v97
    %v1270 = vunpack.c.h.b16 %v97
    %v1271 = vunpack.c.l.b16 %v98
    %v1272 = vunpack.c.h.b16 %v98
    %v1273 = vunpack.c.l.b16 %v99
    %v1274 = vunpack.c.h.b16 %v99
    %v1275 = vunpack.c.l.b16 %v100
    %v1276 = vunpack.c.h.b16 %v100
    %v1277 = vunpack.c.l.b16 %v101
    %v1278 = vunpack.c.h.b16 %v101
    %v1279 = vunpack.c.l.b16 %v102
    %v1280 = vunpack.c.h.b16 %v102
    %v1281 = vunpack.c.l.b16 %v103
    %v1282 = vunpack.c.h.b16 %v103
    %v1283 = vunpack.c.l.b16 %v104
    %v1284 = vunpack.c.h.b16 %v104
    %v1285 = vunpack.c.l.b16 %v105
    %v1286 = vunpack.c.h.b16 %v105
    %v1287 = vunpack.c.l.b16 %v106
    %v1288 = vunpack.c.h.b16 %v106
    %v1289 = vunpack.c.l.b16 %v107
    %v1290 = vunpack.c.h.b16 %v107
    %v1291 = vunpack.c.l.b16 %v108
    %v1292 = vunpack.c.h.b16 %v108
    %v1293 = vunpack.c.l.b16 %v109
    %v1294 = vunpack.c.h.b16 %v109
    %v1295 = vunpack.c.l.b16 %v110
    %v1296 = vunpack.c.h.b16 %v110
    %v1297 = vunpack.c.l.b16 %v111
    %v1298 = vunpack.c.h.b16 %v111
    %v1299 = vunpack.c.l.b16 %v112
    %v1300 = vunpack.c.h.b16 %v112
    %v1301 = vunpack.c.l.b16 %v113
    %v1302 = vunpack.c.h.b16 %v113
    %v1303 = vunpack.c.l.b16 %v114
    %v1304 = vunpack.c.h.b16 %v114
    %v1305 = vunpack.c.l.b16 %v115
    %v1306 = vunpack.c.h.b16 %v115
    %v1307 = vunpack.c.l.b16 %v116
    %v1308 = vunpack.c.h.b16 %v116
    %v1309 = vunpack.c.l.b16 %v117
    %v1310 = vunpack.c.h.b16 %v117
    %v1311 = vunpack.c.l.b16 %v118
    %v1312 = vunpack.c.h.b16 %v118
    %v1313 = vunpack.c.l.b16 %v119
    %v1314 = vunpack.c.h.b16 %v119
    %v1315 = vunpack.c.l.b16 %v120
    %v1316 = vunpack.c.h.b16 %v120
    %v1317 = vunpack.c.l.b16 %v121
    %v1318 = vunpack.c.h.b16 %v121
    %v1319 = vunpack.c.l.b16 %v122
    %v1320 = vunpack.c.h.b16 %v122
    %v1321 = vunpack.c.l.b16 %v123
    %v1322 = vunpack.c.h.b16 %v123
    %v1323 = vunpack.c.l.b16 %v124
    %v1324 = vunpack.c.h.b16 %v124
    %v1325 = vunpack.c.l.b16 %v125
    %v1326 = vunpack.c.h.b16 %v125
    %v1327 = vunpack.c.l.b16 %v126
    %v1328 = vunpack.c.h.b16 %v126
    %v1329 = vunpack.c.l.b16 %v127
    %v1330 = vunpack.c.h.b16 %v127
    %v1331 = vunpack.c.l.b16 %v128
    %v1332 = vunpack.c.h.b16 %v128
    %v1333 = vunpack.c.l.b16 %v129
    %v1334 = vunpack.c.h.b16 %v129
    %v1335 = vunpack.c.l.b16 %v130
    %v1336 = vunpack.c.h.b16 %v130
    %v1337 = vunpack.c.l.b16 %v131
    %v1338 = vunpack.c.h.b16 %v131
    %v1339 = vunpack.c.l.b16 %v132
    %v1340 = vunpack.c.h.b16 %v132
    %v1341 = vunpack.c.l.b16 %v133
    %v1342 = vunpack.c.h.b16 %v133
    %v1343 = vunpack.c.l.b16 %v134
    %v1344 = vunpack.c.h.b16 %v134
    %v1345 = vunpack.c.l.b16 %v135
    %v1346 = vunpack.c.h.b16 %v135
    %v1347 = vunpack.c.l.b16 %v136
    %v1348 = vunpack.c.h.b16 %v136
    %v1349 = vunpack.c.l.b16 %v137
    %v1350 = vunpack.c.h.b16 %v137
    %v1351 = vunpack.c.l.b16 %v138
    %v1352 = vunpack.c.h.b16 %v138
    %v1353 = vunpack.c.l.b16 %v139
    %v1354 = vunpack.c.h.b16 %v139
    %v1355 = vunpack.c.l.b16 %v140
    %v1356 = vunpack.c.h.b16 %v140
    %v1357 = vunpack.c.l.b16 %v141
    %v1358 = vunpack.c.h.b16 %v141
    %v1359 = vunpack.c.l.b16 %v142
    %v1360 = vunpack.c.h.b16 %v142
    %v1361 = vunpack.c.l.b16 %v143
    %v1362 = vunpack.c.h.b16 %v143
    %v1363 = vunpack.c.l.b16 %v144
    %v1364 = vunpack.c.h.b16 %v144
    %v1365 = vunpack.c.l.b16 %v145
    %v1366 = vunpack.c.h.b16 %v145
    %v1367 = vunpack.c.l.b16 %v146
    %v1368 = vunpack.c.h.b16 %v146
    %v1369 = vunpack.c.l.b16 %v147
    %v1370 = vunpack.c.h.b16 %v147
    %v1371 = vunpack.c.l.b16 %v148
    %v1372 = vunpack.c.h.b16 %v148
    %v1373 = vunpack.c.l.b16 %v149
    %v1374 = vunpack.c.h.b16 %v149
    %v1375 = vunpack.c.l.b16 %v150
    %v1376 = vunpack.c.h.b16 %v150
    %v1377 = vunpack.c.l.b16 %v151
    %v1378 = vunpack.c.h.b16 %v151
    %v1379 = vunpack.c.l.b16 %v152
    %v1380 = vunpack.c.h.b16 %v152
    %v1381 = vunpack.c.l.b16 %v153
    %v1382 = vunpack.c.h.b16 %v153
    %v1383 = vunpack.c.l.b16 %v154
    %v1384 = vunpack.c.h.b16 %v154
    %v1385 = vunpack.c.l.b16 %v155
    %v1386 = vunpack.c.h.b16 %v155
    %v1387 = vunpack.c.l.b16 %v156
    %v1388 = vunpack.c.h.b16 %v156
    %v1389 = vunpack.c.l.b16 %v157
    %v1390 = vunpack.c.h.b16 %v157
    %v1391 = vunpack.c.l.b16 %v158
    %v1392 = vunpack.c.h.b16 %v158
    %v1393 = vunpack.c.l.b16 %v159
    %v1394 = vunpack.c.h.b16 %v159
    %v1395 = vunpack.c.l.b16 %v160
    %v1396 = vunpack.c.h.b16 %v160
    %v1397 = vunpack.c.l.b16 %v161
    %v1398 = vunpack.c.h.b16 %v161
    %v1399 = vunpack.c.l.b16 %v162
    %v1400 = vunpack.c.h.b16 %v162
    %v1401 = vunpack.c.l.b16 %v163
    %v1402 = vunpack.c.h.b16 %v163
    %v1403 = vunpack.c.l.b16 %v164
    %v1404 = vunpack.c.h.b16 %v164
    %v1405 = vunpack.c.l.b16 %v165
    %v1406 = vunpack.c.h.b16 %v165
    %v1407 = vunpack.c.l.b16 %v166
    %v1408 = vunpack.c.h.b16 %v166
    %v1409 = vunpack.c.l.b16 %v167
    %v1410 = vunpack.c.h.b16 %v167
    %v1411 = vunpack.c.l.b16 %v168
    %v1412 = vunpack.c.h.b16 %v168
    %v1413 = vunpack.c.l.b16 %v169
    %v1414 = vunpack.c.h.b16 %v169
    %v1415 = vunpack.c.l.b16 %v170
    %v1416 = vunpack.c.h.b16 %v170
    %v1417 = vunpack.c.l.b16 %v171
    %v1418 = vunpack.c.h.b16 %v171
    %v1419 = vunpack.c.l.b16 %v172
    %v1420 = vunpack.c.h.b16 %v172
    %v1421 = vunpack.c.l.b16 %v173
    %v1422 = vunpack.c.h.b16 %v173
    %v1423 = vunpack.c.l.b16 %v174
    %v1424 = vunpack.c.h.b16 %v174
    %v1425 = vunpack.c.l.b16 %v175
    %v1426 = vunpack.c.h.b16 %v175
    %v1427 = vunpack.c.l.b16 %v176
    %v1428 = vunpack.c.h.b16 %v176
    %v1429 = vunpack.c.l.b16 %v177
    %v1430 = vunpack.c.h.b16 %v177
    %v1431 = vunpack.c.l.b16 %v178
    %v1432 = vunpack.c.h.b16 %v178
    %v1433 = vunpack.c.l.b16 %v179
    %v1434 = vunpack.c.h.b16 %v179
    %v1435 = vunpack.c.l.b16 %v180
    %v1436 = vunpack.c.h.b16 %v180
    %v1437 = vunpack.c.l.b16 %v181
    %v1438 = vunpack.c.h.b16 %v181
    %v1439 = vunpack.c.l.b16 %v182
    %v1440 = vunpack.c.h.b16 %v182
    %v1441 = vunpack.c.l.b16 %v183
    %v1442 = vunpack.c.h.b16 %v183
    %v1443 = vunpack.c.l.b16 %v184
    %v1444 = vunpack.c.h.b16 %v184
    %v1445 = vunpack.c.l.b16 %v185
    %v1446 = vunpack.c.h.b16 %v185
    %v1447 = vunpack.c.l.b16 %v186
    %v1448 = vunpack.c.h.b16 %v186
    %v1449 = vunpack.c.l.b16 %v187
    %v1450 = vunpack.c.h.b16 %v187
    %v1451 = vunpack.c.l.b16 %v188
    %v1452 = vunpack.c.h.b16 %v188
    %v1453 = vunpack.c.l.b16 %v189
    %v1454 = vunpack.c.h.b16 %v189
    %v1455 = vunpack.c.l.b16 %v190
    %v1456 = vunpack.c.h.b16 %v190
    %v1457 = vunpack.c.l.b16 %v191
    %v1458 = vunpack.c.h.b16 %v191
    %v1459 = vunpack.c.l.b16 %v192
    %v1460 = vunpack.c.h.b16 %v192
    %v1461 = vunpack.c.l.b16 %v193
    %v1462 = vunpack.c.h.b16 %v193
    %v1463 = vunpack.c.l.b16 %v194
    %v1464 = vunpack.c.h.b16 %v194
    %v1465 = vunpack.c.l.b16 %v195
    %v1466 = vunpack.c.h.b16 %v195
    %v1467 = vunpack.c.l.b16 %v196
    %v1468 = vunpack.c.h.b16 %v196
    %v1469 = vunpack.c.l.b16 %v197
    %v1470 = vunpack.c.h.b16 %v197
    %v1471 = vunpack.c.l.b16 %v198
    %v1472 = vunpack.c.h.b16 %v198
    %v1473 = vunpack.c.l.b16 %v199
    %v1474 = vunpack.c.h.b16 %v199
    %v1475 = vunpack.c.l.b16 %v200
    %v1476 = vunpack.c.h.b16 %v200
    %v1477 = vunpack.c.l.b16 %v201
    %v1478 = vunpack.c.h.b16 %v201
    %v1479 = vunpack.c.l.b16 %v202
    %v1480 = vunpack.c.h.b16 %v202
    %v1481 = vunpack.c.l.b16 %v203
    %v1482 = vunpack.c.h.b16 %v203
    %v1483 = vunpack.c.l.b16 %v204
    %v1484 = vunpack.c.h.b16 %v204
    %v1485 = vunpack.c.l.b16 %v205
    %v1486 = vunpack.c.h.b16 %v205
    %v1487 = vunpack.c.l.b16 %v206
    %v1488 = vunpack.c.h.b16 %v206
    %v1489 = vunpack.c.l.b16 %v207
    %v1490 = vunpack.c.h.b16 %v207
    %v1491 = vunpack.c.l.b16 %v208
    %v1492 = vunpack.c.h.b16 %v208
    %v1493 = vunpack.c.l.b16 %v209
    %v1494 = vunpack.c.h.b16 %v209
    %v1495 = vunpack.c.l.b16 %v210
    %v1496 = vunpack.c.h.b16 %v210
    %v1497 = vunpack.c.l.b16 %v211
    %v1498 = vunpack.c.h.b16 %v211
    %v1499 = vunpack.c.l.b16 %v212
    %v1500 = vunpack.c.h.b16 %v212
    %v1501 = vunpack.c.l.b16 %v213
    %v1502 = vunpack.c.h.b16 %v213
    %v1503 = vunpack.c.l.b16 %v214
    %v1504 = vunpack.c.h.b16 %v214
    %v1505 = vunpack.c.l.b16 %v215
    %v1506 = vunpack.c.h.b16 %v215
    %v1507 = vunpack.c.l.b16 %v216
    %v1508 = vunpack.c.h.b16 %v216
    %v1509 = vunpack.c.l.b16 %v217
    %v1510 = vunpack.c.h.b16 %v217
    %v1511 = vunpack.c.l.b16 %v218
    %v1512 = vunpack.c.h.b16 %v218
    %v1513 = vunpack.c.l.b16 %v219
    %v1514 = vunpack.c.h.b16 %v219
    %v1515 = vunpack.c.l.b16 %v220
    %v1516 = vunpack.c.h.b16 %v220
    %v1517 = vunpack.c.l.b16 %v221
    %v1518 = vunpack.c.h.b16 %v221
    %v1519 = vunpack.c.l.b16 %v222
    %v1520 = vunpack.c.h.b16 %v222
    %v1521 = vunpack.c.l.b16 %v223
    %v1522 = vunpack.c.h.b16 %v223
    %v1523 = vunpack.c.l.b16 %v224
    %v1524 = vunpack.c.h.b16 %v224
    %v1525 = vunpack.c.l.b16 %v225
    %v1526 = vunpack.c.h.b16 %v225
    %v1527 = vunpack.c.l.b16 %v226
    %v1528 = vunpack.c.h.b16 %v226
    %v1529 = vunpack.c.l.b16 %v227
    %v1530 = vunpack.c.h.b16 %v227
    %v1531 = vunpack.c.l.b16 %v228
    %v1532 = vunpack.c.h.b16 %v228
    %v1533 = vunpack.c.l.b16 %v229
    %v1534 = vunpack.c.h.b16 %v229
    %v1535 = vunpack.c.l.b16 %v230
    %v1536 = vunpack.c.h.b16 %v230
    %v1537 = vunpack.c.l.b16 %v231
    %v1538 = vunpack.c.h.b16 %v231
    %v1539 = vunpack.c.l.b16 %v232
    %v1540 = vunpack.c.h.b16 %v232
    %v1541 = vunpack.c.l.b16 %v233
    %v1542 = vunpack.c.h.b16 %v233
    %v1543 = vunpack.c.l.b16 %v234
    %v1544 = vunpack.c.h.b16 %v234
    %v1545 = vunpack.c.l.b16 %v235
    %v1546 = vunpack.c.h.b16 %v235
    %v1547 = vunpack.c.l.b16 %v236
    %v1548 = vunpack.c.h.b16 %v236
    %v1549 = vunpack.c.l.b16 %v237
    %v1550 = vunpack.c.h.b16 %v237
    %v1551 = vunpack.c.l.b16 %v238
    %v1552 = vunpack.c.h.b16 %v238
    %v1553 = vunpack.c.l.b16 %v239
    %v1554 = vunpack.c.h.b16 %v239
    %v1555 = vunpack.c.l.b16 %v240
    %v1556 = vunpack.c.h.b16 %v240
    %v1557 = vunpack.c.l.b16 %v241
    %v1558 = vunpack.c.h.b16 %v241
    %v1559 = vunpack.c.l.b16 %v242
    %v1560 = vunpack.c.h.b16 %v242
    %v1561 = vunpack.c.l.b16 %v243
    %v1562 = vunpack.c.h.b16 %v243
    %v1563 = vunpack.c.l.b16 %v244
    %v1564 = vunpack.c.h.b16 %v244
    %v1565 = vunpack.c.l.b16 %v245
    %v1566 = vunpack.c.h.b16 %v245
    %v1567 = vunpack.c.l.b16 %v246
    %v1568 = vunpack.c.h.b16 %v246
    %v1569 = vunpack.c.l.b16 %v247
    %v1570 = vunpack.c.h.b16 %v247
    %v1571 = vunpack.c.l.b16 %v248
    %v1572 = vunpack.c.h.b16 %v248
    %v1573 = vunpack.c.l.b16 %v249
    %v1574 = vunpack.c.h.b16 %v249
    %v1575 = vunpack.c.l.b16 %v250
    %v1576 = vunpack.c.h.b16 %v250
    %v1577 = vunpack.c.l.b16 %v251
    %v1578 = vunpack.c.h.b16 %v251
    %v1579 = vunpack.c.l.b16 %v252
    %v1580 = vunpack.c.h.b16 %v252
    %v1581 = vunpack.c.l.b16 %v253
    %v1582 = vunpack.c.h.b16 %v253
    %v1583 = vunpack.c.l.b16 %v254
    %v1584 = vunpack.c.h.b16 %v254
    %v1585 = vunpack.c.l.b16 %v255
    %v1586 = vunpack.c.h.b16 %v255
    %v1587 = vunpack.c.l.b16 %v256
    %v1588 = vunpack.c.h.b16 %v256
    %v1589 = vunpack.c.l.b16 %v257
    %v1590 = vunpack.c.h.b16 %v257
    %v1591 = vunpack.c.l.b16 %v258
    %v1592 = vunpack.c.h.b16 %v258
    %v1593 = vunpack.c.l.b16 %v259
    %v1594 = vunpack.c.h.b16 %v259
    %v1595 = vunpack.c.l.b16 %v260
    %v1596 = vunpack.c.h.b16 %v260
    %v1597 = vunpack.c.l.b16 %v261
    %v1598 = vunpack.c.h.b16 %v261
    %v1599 = vunpack.c.l.b16 %v262
    %v1600 = vunpack.c.h.b16 %v262
    %v1601 = vunpack.c.l.b16 %v263
    %v1602 = vunpack.c.h.b16 %v263
    %v1603 = vunpack.c.l.b16 %v264
    %v1604 = vunpack.c.h.b16 %v264
    %v1605 = vunpack.c.l.b16 %v265
    %v1606 = vunpack.c.h.b16 %v265
    %v1607 = vunpack.c.l.b16 %v266
    %v1608 = vunpack.c.h.b16 %v266
    %v1609 = vunpack.c.l.b16 %v267
    %v1610 = vunpack.c.h.b16 %v267
    %v1611 = vunpack.c.l.b16 %v268
    %v1612 = vunpack.c.h.b16 %v268
    %v1613 = vunpack.c.l.b16 %v269
    %v1614 = vunpack.c.h.b16 %v269
    %v1615 = vunpack.c.l.b16 %v270
    %v1616 = vunpack.c.h.b16 %v270
    %v1617 = vunpack.c.l.b16 %v271
    %v1618 = vunpack.c.h.b16 %v271
    %v1619 = vunpack.c.l.b16 %v272
    %v1620 = vunpack.c.h.b16 %v272
    %v1621 = vunpack.c.l.b16 %v273
    %v1622 = vunpack.c.h.b16 %v273
    %v1623 = vunpack.c.l.b16 %v274
    %v1624 = vunpack.c.h.b16 %v274
    %v1625 = vunpack.c.l.b16 %v275
    %v1626 = vunpack.c.h.b16 %v275
    %v1627 = vunpack.c.l.b16 %v276
    %v1628 = vunpack.c.h.b16 %v276
    %v1629 = vunpack.c.l.b16 %v277
    %v1630 = vunpack.c.h.b16 %v277
    %v1631 = vunpack.c.l.b16 %v278
    %v1632 = vunpack.c.h.b16 %v278
    %v1633 = vunpack.c.l.b16 %v279
    %v1634 = vunpack.c.h.b16 %v279
    %v1635 = vunpack.c.l.b16 %v280
    %v1636 = vunpack.c.h.b16 %v280
    %v1637 = vunpack.c.l.b16 %v281
    %v1638 = vunpack.c.h.b16 %v281
    %v1639 = vunpack.c.l.b16 %v282
    %v1640 = vunpack.c.h.b16 %v282
    %v1641 = vunpack.c.l.b16 %v283
    %v1642 = vunpack.c.h.b16 %v283
    %v1643 = vunpack.c.l.b16 %v284
    %v1644 = vunpack.c.h.b16 %v284
    %v1645 = vunpack.c.l.b16 %v285
    %v1646 = vunpack.c.h.b16 %v285
    %v1647 = vunpack.c.l.b16 %v286
    %v1648 = vunpack.c.h.b16 %v286
    %v1649 = vunpack.c.l.b16 %v287
    %v1650 = vunpack.c.h.b16 %v287
    %v1651 = vunpack.c.l.b16 %v288
    %v1652 = vunpack.c.h.b16 %v288
    %v1653 = vunpack.c.l.b16 %v289
    %v1654 = vunpack.c.h.b16 %v289
    %v1655 = vunpack.c.l.b16 %v290
    %v1656 = vunpack.c.h.b16 %v290
    %v1657 = vunpack.c.l.b16 %v291
    %v1658 = vunpack.c.h.b16 %v291
    %v1659 = vunpack.c.l.b16 %v292
    %v1660 = vunpack.c.h.b16 %v292
    %v1661 = vunpack.c.l.b16 %v293
    %v1662 = vunpack.c.h.b16 %v293
    %v1663 = vunpack.c.l.b16 %v294
    %v1664 = vunpack.c.h.b16 %v294
    %v1665 = vunpack.c.l.b16 %v295
    %v1666 = vunpack.c.h.b16 %v295
    %v1667 = vunpack.c.l.b16 %v296
    %v1668 = vunpack.c.h.b16 %v296
    %v1669 = vunpack.c.l.b16 %v297
    %v1670 = vunpack.c.h.b16 %v297
    %v1671 = vunpack.c.l.b16 %v298
    %v1672 = vunpack.c.h.b16 %v298
    %v1673 = vunpack.c.l.b16 %v299
    %v1674 = vunpack.c.h.b16 %v299
    %v1675 = vunpack.c.l.b16 %v300
    %v1676 = vunpack.c.h.b16 %v300
    %v1677 = vunpack.c.l.b16 %v301
    %v1678 = vunpack.c.h.b16 %v301
    %v1679 = vunpack.c.l.b16 %v302
    %v1680 = vunpack.c.h.b16 %v302
    %v1681 = vunpack.c.l.b16 %v303
    %v1682 = vunpack.c.h.b16 %v303
    %v1683 = vunpack.c.l.b16 %v304
    %v1684 = vunpack.c.h.b16 %v304
    %v1685 = vunpack.c.l.b16 %v305
    %v1686 = vunpack.c.h.b16 %v305
    %v1687 = vunpack.c.l.b16 %v306
    %v1688 = vunpack.c.h.b16 %v306
    %v1689 = vunpack.c.l.b16 %v307
    %v1690 = vunpack.c.h.b16 %v307
    %v1691 = vunpack.c.l.b16 %v308
    %v1692 = vunpack.c.h.b16 %v308
    %v1693 = vunpack.c.l.b16 %v309
    %v1694 = vunpack.c.h.b16 %v309
    %v1695 = vunpack.c.l.b16 %v310
    %v1696 = vunpack.c.h.b16 %v310
    %v1697 = vunpack.c.l.b16 %v311
    %v1698 = vunpack.c.h.b16 %v311
    %v1699 = vunpack.c.l.b16 %v312
    %v1700 = vunpack.c.h.b16 %v312
    %v1701 = vunpack.c.l.b16 %v313
    %v1702 = vunpack.c.h.b16 %v313
    %v1703 = vunpack.c.l.b16 %v314
    %v1704 = vunpack.c.h.b16 %v314
    %v1705 = vunpack.c.l.b16 %v315
    %v1706 = vunpack.c.h.b16 %v315
    %v1707 = vunpack.c.l.b16 %v316
    %v1708 = vunpack.c.h.b16 %v316
    %v1709 = vunpack.c.l.b16 %v317
    %v1710 = vunpack.c.h.b16 %v317
    %v1711 = vunpack.c.l.b16 %v318
    %v1712 = vunpack.c.h.b16 %v318
    %v1713 = vunpack.c.l.b16 %v319
    %v1714 = vunpack.c.h.b16 %v319
    %v1715 = vunpack.c.l.b16 %v320
    %v1716 = vunpack.c.h.b16 %v320
    %v1717 = vunpack.c.l.b16 %v321
    %v1718 = vunpack.c.h.b16 %v321
    %v1719 = vunpack.c.l.b16 %v322
    %v1720 = vunpack.c.h.b16 %v322
    %v1721 = vunpack.c.l.b16 %v323
    %v1722 = vunpack.c.h.b16 %v323
    %v1723 = vunpack.c.l.b16 %v324
    %v1724 = vunpack.c.h.b16 %v324
    %v1725 = vunpack.c.l.b16 %v325
    %v1726 = vunpack.c.h.b16 %v325
    %v1727 = vunpack.c.l.b16 %v326
    %v1728 = vunpack.c.h.b16 %v326
    %v1729 = vunpack.c.l.b16 %v327
    %v1730 = vunpack.c.h.b16 %v327
    %v1731 = vunpack.c.l.b16 %v328
    %v1732 = vunpack.c.h.b16 %v328
    %v1733 = vunpack.c.l.b16 %v329
    %v1734 = vunpack.c.h.b16 %v329
    %v1735 = vunpack.c.l.b16 %v330
    %v1736 = vunpack.c.h.b16 %v330
    %v1737 = vunpack.c.l.b16 %v331
    %v1738 = vunpack.c.h.b16 %v331
    %v1739 = vunpack.c.l.b16 %v332
    %v1740 = vunpack.c.h.b16 %v332
    %v1741 = vunpack.c.l.b16 %v333
    %v1742 = vunpack.c.h.b16 %v333
    %v1743 = vunpack.c.l.b16 %v334
    %v1744 = vunpack.c.h.b16 %v334
    %v1745 = vunpack.c.l.b16 %v335
    %v1746 = vunpack.c.h.b16 %v335
    %v1747 = vunpack.c.l.b16 %v336
    %v1748 = vunpack.c.h.b16 %v336
    %v1749 = vunpack.c.l.b16 %v337
    %v1750 = vunpack.c.h.b16 %v337
    %v1751 = vunpack.c.l.b16 %v338
    %v1752 = vunpack.c.h.b16 %v338
    %v1753 = vunpack.c.l.b16 %v339
    %v1754 = vunpack.c.h.b16 %v339
    %v1755 = vunpack.c.l.b16 %v340
    %v1756 = vunpack.c.h.b16 %v340
    %v1757 = vunpack.c.l.b16 %v341
    %v1758 = vunpack.c.h.b16 %v341
    %v1759 = vunpack.c.l.b16 %v342
    %v1760 = vunpack.c.h.b16 %v342
    %v1761 = vunpack.c.l.b16 %v343
    %v1762 = vunpack.c.h.b16 %v343
    %v1763 = vunpack.c.l.b16 %v344
    %v1764 = vunpack.c.h.b16 %v344
    %v1765 = vunpack.c.l.b16 %v345
    %v1766 = vunpack.c.h.b16 %v345
    %v1767 = vunpack.c.l.b16 %v346
    %v1768 = vunpack.c.h.b16 %v346
    %v1769 = vunpack.c.l.b16 %v347
    %v1770 = vunpack.c.h.b16 %v347
    %v1771 = vunpack.c.l.b16 %v348
    %v1772 = vunpack.c.h.b16 %v348
    %v1773 = vunpack.c.l.b16 %v349
    %v1774 = vunpack.c.h.b16 %v349
    %v1775 = vunpack.c.l.b16 %v350
    %v1776 = vunpack.c.h.b16 %v350
    %v1777 = vunpack.c.l.b16 %v351
    %v1778 = vunpack.c.h.b16 %v351
    %v1779 = vunpack.c.l.b16 %v352
    %v1780 = vunpack.c.h.b16 %v352
    %v1781 = vunpack.c.l.b16 %v353
    %v1782 = vunpack.c.h.b16 %v353
    %v1783 = vunpack.c.l.b16 %v354
    %v1784 = vunpack.c.h.b16 %v354
    %v1785 = vunpack.c.l.b16 %v355
    %v1786 = vunpack.c.h.b16 %v355
    %v1787 = vunpack.c.l.b16 %v356
    %v1788 = vunpack.c.h.b16 %v356
    %v1789 = vunpack.c.l.b16 %v357
    %v1790 = vunpack.c.h.b16 %v357
    %v1791 = vunpack.c.l.b16 %v358
    %v1792 = vunpack.c.h.b16 %v358
    %v1793 = vunpack.c.l.b16 %v359
    %v1794 = vunpack.c.h.b16 %v359
    %v1795 = vunpack.c.l.b16 %v360
    %v1796 = vunpack.c.h.b16 %v360
    %v1797 = vunpack.c.l.b16 %v361
    %v1798 = vunpack.c.h.b16 %v361
    %v1799 = vunpack.c.l.b16 %v362
    %v1800 = vunpack.c.h.b16 %v362
    %v1801 = vunpack.c.l.b16 %v363
    %v1802 = vunpack.c.h.b16 %v363
    %v1803 = vunpack.c.l.b16 %v364
    %v1804 = vunpack.c.h.b16 %v364
    %v1805 = vunpack.c.l.b16 %v365
    %v1806 = vunpack.c.h.b16 %v365
    %v1807 = vunpack.c.l.b16 %v366
    %v1808 = vunpack.c.h.b16 %v366
    %v1809 = vunpack.c.l.b16 %v367
    %v1810 = vunpack.c.h.b16 %v367
    %v1811 = vunpack.c.l.b16 %v368
    %v1812 = vunpack.c.h.b16 %v368
    %v1813 = vunpack.c.l.b16 %v369
    %v1814 = vunpack.c.h.b16 %v369
    %v1815 = vunpack.c.l.b16 %v370
    %v1816 = vunpack.c.h.b16 %v370
    %v1817 = vunpack.c.l.b16 %v371
    %v1818 = vunpack.c.h.b16 %v371
    %v1819 = vunpack.c.l.b16 %v372
    %v1820 = vunpack.c.h.b16 %v372
    %v1821 = vunpack.c.l.b16 %v373
    %v1822 = vunpack.c.h.b16 %v373
    %v1823 = vunpack.c.l.b16 %v374
    %v1824 = vunpack.c.h.b16 %v374
    %v1825 = vunpack.c.l.b16 %v375
    %v1826 = vunpack.c.h.b16 %v375
    %v1827 = vunpack.c.l.b16 %v376
    %v1828 = vunpack.c.h.b16 %v376
    %v1829 = vunpack.c.l.b16 %v377
    %v1830 = vunpack.c.h.b16 %v377
    %v1831 = vunpack.c.l.b16 %v378
    %v1832 = vunpack.c.h.b16 %v378
    %v1833 = vunpack.c.l.b16 %v379
    %v1834 = vunpack.c.h.b16 %v379
    %v1835 = vunpack.c.l.b16 %v380
    %v1836 = vunpack.c.h.b16 %v380
    %v1837 = vunpack.c.l.b16 %v381
    %v1838 = vunpack.c.h.b16 %v381
    %v1839 = vunpack.c.l.b16 %v382
    %v1840 = vunpack.c.h.b16 %v382
    %v1841 = vunpack.c.l.b16 %v383
    %v1842 = vunpack.c.h.b16 %v383
    %v1843 = vunpack.c.l.b16 %v384
    %v1844 = vunpack.c.h.b16 %v384
    %v1845 = vunpack.c.l.b16 %v385
    %v1846 = vunpack.c.h.b16 %v385
    %v1847 = vunpack.c.l.b16 %v386
    %v1848 = vunpack.c.h.b16 %v386
    %v1849 = vunpack.c.l.b16 %v387
    %v1850 = vunpack.c.h.b16 %v387
    %v1851 = vunpack.c.l.b16 %v388
    %v1852 = vunpack.c.h.b16 %v388
    %v1853 = vunpack.c.l.b16 %v389
    %v1854 = vunpack.c.h.b16 %v389
    %v1855 = vunpack.c.l.b16 %v390
    %v1856 = vunpack.c.h.b16 %v390
    %v1857 = vunpack.c.l.b16 %v391
    %v1858 = vunpack.c.h.b16 %v391
    %v1859 = vunpack.c.l.b16 %v392
    %v1860 = vunpack.c.h.b16 %v392
    %v1861 = vunpack.c.l.b16 %v393
    %v1862 = vunpack.c.h.b16 %v393
    %v1863 = vunpack.c.l.b16 %v394
    %v1864 = vunpack.c.h.b16 %v394
    %v1865 = vunpack.c.l.b16 %v395
    %v1866 = vunpack.c.h.b16 %v395
    %v1867 = vunpack.c.l.b16 %v396
    %v1868 = vunpack.c.h.b16 %v396
    %v1869 = vunpack.c.l.b16 %v397
    %v1870 = vunpack.c.h.b16 %v397
    %v1871 = vunpack.c.l.b16 %v398
    %v1872 = vunpack.c.h.b16 %v398
    %v1873 = vunpack.c.l.b16 %v399
    %v1874 = vunpack.c.h.b16 %v399
    %v1875 = vunpack.c.l.b16 %v400
    %v1876 = vunpack.c.h.b16 %v400
    %v1877 = vunpack.c.l.b16 %v401
    %v1878 = vunpack.c.h.b16 %v401
    %v1879 = vunpack.c.l.b16 %v402
    %v1880 = vunpack.c.h.b16 %v402
    %v1881 = vunpack.c.l.b16 %v403
    %v1882 = vunpack.c.h.b16 %v403
    %v1883 = vunpack.c.l.b16 %v404
    %v1884 = vunpack.c.h.b16 %v404
    %v1885 = vunpack.c.l.b16 %v405
    %v1886 = vunpack.c.h.b16 %v405
    %v1887 = vunpack.c.l.b16 %v406
    %v1888 = vunpack.c.h.b16 %v406
    %v1889 = vunpack.c.l.b16 %v407
    %v1890 = vunpack.c.h.b16 %v407
    %v1891 = vunpack.c.l.b16 %v408
    %v1892 = vunpack.c.h.b16 %v408
    %v1893 = vunpack.c.l.b16 %v409
    %v1894 = vunpack.c.h.b16 %v409
    %v1895 = vunpack.c.l.b16 %v410
    %v1896 = vunpack.c.h.b16 %v410
    %v1897 = vunpack.c.l.b16 %v411
    %v1898 = vunpack.c.h.b16 %v411
    %v1899 = vunpack.c.l.b16 %v412
    %v1900 = vunpack.c.h.b16 %v412
    %v1901 = vunpack.c.l.b16 %v413
    %v1902 = vunpack.c.h.b16 %v413
    %v1903 = vunpack.c.l.b16 %v414
    %v1904 = vunpack.c.h.b16 %v414
    %v1905 = vunpack.c.l.b16 %v415
    %v1906 = vunpack.c.h.b16 %v415
    %v1907 = vunpack.c.l.b16 %v416
    %v1908 = vunpack.c.h.b16 %v416
    %v1909 = vunpack.c.l.b16 %v417
    %v1910 = vunpack.c.h.b16 %v417
    %v1911 = vunpack.c.l.b16 %v418
    %v1912 = vunpack.c.h.b16 %v418
    %v1913 = vunpack.c.l.b16 %v419
    %v1914 = vunpack.c.h.b16 %v419
    %v1915 = vunpack.c.l.b16 %v420
    %v1916 = vunpack.c.h.b16 %v420
    %v1917 = vunpack.c.l.b16 %v421
    %v1918 = vunpack.c.h.b16 %v421
    %v1919 = vunpack.c.l.b16 %v422
    %v1920 = vunpack.c.h.b16 %v422
    %v1921 = vunpack.c.l.b16 %v423
    %v1922 = vunpack.c.h.b16 %v423
    %v1923 = vunpack.c.l.b16 %v424
    %v1924 = vunpack.c.h.b16 %v424
    %v1925 = vunpack.c.l.b16 %v425
    %v1926 = vunpack.c.h.b16 %v425
    %v1927 = vunpack.c.l.b16 %v426
    %v1928 = vunpack.c.h.b16 %v426
    %v1929 = vunpack.c.l.b16 %v427
    %v1930 = vunpack.c.h.b16 %v427
    %v1931 = vunpack.c.l.b16 %v428
    %v1932 = vunpack.c.h.b16 %v428
    %v1933 = vunpack.c.l.b16 %v429
    %v1934 = vunpack.c.h.b16 %v429
    %v1935 = vunpack.c.l.b16 %v430
    %v1936 = vunpack.c.h.b16 %v430
    %v1937 = vunpack.c.l.b16 %v431
    %v1938 = vunpack.c.h.b16 %v431
    %v1939 = vunpack.c.l.b16 %v432
    %v1940 = vunpack.c.h.b16 %v432
    %v1941 = vunpack.c.l.b16 %v433
    %v1942 = vunpack.c.h.b16 %v433
    %v1943 = vunpack.c.l.b16 %v434
    %v1944 = vunpack.c.h.b16 %v434
    %v1945 = vunpack.c.l.b16 %v435
    %v1946 = vunpack.c.h.b16 %v435
    %v1947 = vunpack.c.l.b16 %v436
    %v1948 = vunpack.c.h.b16 %v436
    %v1949 = vunpack.c.l.b16 %v437
    %v1950 = vunpack.c.h.b16 %v437
    %v1951 = vunpack.c.l.b16 %v438
    %v1952 = vunpack.c.h.b16 %v438
    %v1953 = vunpack.c.l.b16 %v439
    %v1954 = vunpack.c.h.b16 %v439
    %v1955 = vunpack.c.l.b16 %v440
    %v1956 = vunpack.c.h.b16 %v440
    %v1957 = vunpack.c.l.b16 %v441
    %v1958 = vunpack.c.h.b16 %v441
    %v1959 = vunpack.c.l.b16 %v442
    %v1960 = vunpack.c.h.b16 %v442
    %v1961 = vunpack.c.l.b16 %v443
    %v1962 = vunpack.c.h.b16 %v443
    %v1963 = vunpack.c.l.b16 %v444
    %v1964 = vunpack.c.h.b16 %v444
    %v1965 = vunpack.c.l.b16 %v445
    %v1966 = vunpack.c.h.b16 %v445
    %v1967 = vunpack.c.l.b16 %v446
    %v1968 = vunpack.c.h.b16 %v446
    %v1969 = vunpack.c.l.b16 %v447
    %v1970 = vunpack.c.h.b16 %v447
    %v1971 = vunpack.c.l.b16 %v448
    %v1972 = vunpack.c.h.b16 %v448
    %v1973 = vunpack.c.l.b16 %v449
    %v1974 = vunpack.c.h.b16 %v449
    %v1975 = vunpack.c.l.b16 %v450
    %v1976 = vunpack.c.h.b16 %v450
    %v1977 = vunpack.c.l.b16 %v451
    %v1978 = vunpack.c.h.b16 %v451
    %v1979 = vunpack.c.l.b16 %v452
    %v1980 = vunpack.c.h.b16 %v452
    %v1981 = vunpack.c.l.b16 %v453
    %v1982 = vunpack.c.h.b16 %v453
    %v1983 = vunpack.c.l.b16 %v454
    %v1984 = vunpack.c.h.b16 %v454
    %v1985 = vunpack.c.l.b16 %v455
    %v1986 = vunpack.c.h.b16 %v455
    %v1987 = vunpack.c.l.b16 %v456
    %v1988 = vunpack.c.h.b16 %v456
    %v1989 = vunpack.c.l.b16 %v457
    %v1990 = vunpack.c.h.b16 %v457
    %v1991 = vunpack.c.l.b16 %v458
    %v1992 = vunpack.c.h.b16 %v458
    %v1993 = vunpack.c.l.b16 %v459
    %v1994 = vunpack.c.h.b16 %v459
    %v1995 = vunpack.c.l.b16 %v460
    %v1996 = vunpack.c.h.b16 %v460
    %v1997 = vunpack.c.l.b16 %v461
    %v1998 = vunpack.c.h.b16 %v461
    %v1999 = vunpack.c.l.b16 %v462
    %v2000 = vunpack.c.h.b16 %v462
    %v2001 = vunpack.c.l.b16 %v463
    %v2002 = vunpack.c.h.b16 %v463
    %v2003 = vunpack.c.l.b16 %v464
    %v2004 = vunpack.c.h.b16 %v464
    %v2005 = vunpack.c.l.b16 %v465
    %v2006 = vunpack.c.h.b16 %v465
    %v2007 = vunpack.c.l.b16 %v466
    %v2008 = vunpack.c.h.b16 %v466
    %v2009 = vunpack.c.l.b16 %v467
    %v2010 = vunpack.c.h.b16 %v467
    %v2011 = vunpack.c.l.b16 %v468
    %v2012 = vunpack.c.h.b16 %v468
    %v2013 = vunpack.c.l.b16 %v469
    %v2014 = vunpack.c.h.b16 %v469
    %v2015 = vunpack.c.l.b16 %v470
    %v2016 = vunpack.c.h.b16 %v470
    %v2017 = vunpack.c.l.b16 %v471
    %v2018 = vunpack.c.h.b16 %v471
    %v2019 = vunpack.c.l.b16 %v472
    %v2020 = vunpack.c.h.b16 %v472
    %v2021 = vunpack.c.l.b16 %v473
    %v2022 = vunpack.c.h.b16 %v473
    %v2023 = vunpack.c.l.b16 %v474
    %v2024 = vunpack.c.h.b16 %v474
    %v2025 = vunpack.c.l.b16 %v475
    %v2026 = vunpack.c.h.b16 %v475
    %v2027 = vunpack.c.l.b16 %v476
    %v2028 = vunpack.c.h.b16 %v476
    %v2029 = vunpack.c.l.b16 %v477
    %v2030 = vunpack.c.h.b16 %v477
    %v2031 = vunpack.c.l.b16 %v478
    %v2032 = vunpack.c.h.b16 %v478
    %v2033 = vunpack.c.l.b16 %v479
    %v2034 = vunpack.c.h.b16 %v479
    %v2035 = vunpack.c.l.b16 %v480
    %v2036 = vunpack.c.h.b16 %v480
    %v2037 = vunpack.c.l.b16 %v481
    %v2038 = vunpack.c.h.b16 %v481
    %v2039 = vunpack.c.l.b16 %v482
    %v2040 = vunpack.c.h.b16 %v482
    %v2041 = vunpack.c.l.b16 %v483
    %v2042 = vunpack.c.h.b16 %v483
    %v2043 = vunpack.c.l.b16 %v484
    %v2044 = vunpack.c.h.b16 %v484
    %v2045 = vunpack.c.l.b16 %v485
    %v2046 = vunpack.c.h.b16 %v485
    %v2047 = vunpack.c.l.b16 %v486
    %v2048 = vunpack.c.h.b16 %v486
    %v2049 = vunpack.c.l.b16 %v487
    %v2050 = vunpack.c.h.b16 %v487
    %v2051 = vunpack.c.l.b16 %v488
    %v2052 = vunpack.c.h.b16 %v488
    %v2053 = vunpack.c.l.b16 %v489
    %v2054 = vunpack.c.h.b16 %v489
    %v2055 = vunpack.c.l.b16 %v490
    %v2056 = vunpack.c.h.b16 %v490
    %v2057 = vunpack.c.l.b16 %v491
    %v2058 = vunpack.c.h.b16 %v491
    %v2059 = vunpack.c.l.b16 %v492
    %v2060 = vunpack.c.h.b16 %v492
    %v2061 = vunpack.c.l.b16 %v493
    %v2062 = vunpack.c.h.b16 %v493
    %v2063 = vunpack.c.l.b16 %v494
    %v2064 = vunpack.c.h.b16 %v494
    %v2065 = vunpack.c.l.b16 %v495
    %v2066 = vunpack.c.h.b16 %v495
    %v2067 = vunpack.c.l.b16 %v496
    %v2068 = vunpack.c.h.b16 %v496
    %v2069 = vunpack.c.l.b16 %v497
    %v2070 = vunpack.c.h.b16 %v497
    %v2071 = vunpack.c.l.b16 %v498
    %v2072 = vunpack.c.h.b16 %v498
    %v2073 = vunpack.c.l.b16 %v499
    %v2074 = vunpack.c.h.b16 %v499
    %v2075 = vunpack.c.l.b16 %v500
    %v2076 = vunpack.c.h.b16 %v500
    %v2077 = vunpack.c.l.b16 %v501
    %v2078 = vunpack.c.h.b16 %v501
    %v2079 = vunpack.c.l.b16 %v502
    %v2080 = vunpack.c.h.b16 %v502
    %v2081 = vunpack.c.l.b16 %v503
    %v2082 = vunpack.c.h.b16 %v503
    %v2083 = vunpack.c.l.b16 %v504
    %v2084 = vunpack.c.h.b16 %v504
    %v2085 = vunpack.c.l.b16 %v505
    %v2086 = vunpack.c.h.b16 %v505
    %v2087 = vunpack.c.l.b16 %v506
    %v2088 = vunpack.c.h.b16 %v506
    %v2089 = vunpack.c.l.b16 %v507
    %v2090 = vunpack.c.h.b16 %v507
    %v2091 = vunpack.c.l.b16 %v508
    %v2092 = vunpack.c.h.b16 %v508
    %v2093 = vunpack.c.l.b16 %v509
    %v2094 = vunpack.c.h.b16 %v509
    %v2095 = vunpack.c.l.b16 %v510
    %v2096 = vunpack.c.h.b16 %v510
    %v2097 = vunpack.c.l.b16 %v511
    %v2098 = vunpack.c.h.b16 %v511
    %v2099 = vunpack.c.l.b16 %v512
    %v2100 = vunpack.c.h.b16 %v512
    %v2101 = vunpack.c.l.b16 %v513
    %v2102 = vunpack.c.h.b16 %v513
    %v2103 = vunpack.c.l.b16 %v514
    %v2104 = vunpack.c.h.b16 %v514
    %v2105 = vunpack.c.l.b16 %v515
    %v2106 = vunpack.c.h.b16 %v515
    %v2107 = vunpack.c.l.b16 %v516
    %v2108 = vunpack.c.h.b16 %v516
    %v2109 = vunpack.c.l.b16 %v517
    %v2110 = vunpack.c.h.b16 %v517
    %v2111 = vunpack.c.l.b16 %v518
    %v2112 = vunpack.c.h.b16 %v518
    %v2113 = vunpack.c.l.b16 %v519
    %v2114 = vunpack.c.h.b16 %v519
    %v2115 = vunpack.c.l.b16 %v520
    %v2116 = vunpack.c.h.b16 %v520
    %v2117 = vunpack.c.l.b16 %v521
    %v2118 = vunpack.c.h.b16 %v521
    %v2119 = vunpack.c.l.b16 %v522
    %v2120 = vunpack.c.h.b16 %v522
    %v2121 = vunpack.c.l.b16 %v523
    %v2122 = vunpack.c.h.b16 %v523
    %v2123 = vunpack.c.l.b16 %v524
    %v2124 = vunpack.c.h.b16 %v524
    %v2125 = vunpack.c.l.b16 %v525
    %v2126 = vunpack.c.h.b16 %v525
    %v2127 = vunpack.c.l.b16 %v526
    %v2128 = vunpack.c.h.b16 %v526
    %v2129 = vunpack.c.l.b16 %v527
    %v2130 = vunpack.c.h.b16 %v527
    %v2131 = vunpack.c.l.b16 %v528
    %v2132 = vunpack.c.h.b16 %v528
    %v2133 = vunpack.c.l.b16 %v529
    %v2134 = vunpack.c.h.b16 %v529
    %v2135 = vunpack.c.l.b16 %v530
    %v2136 = vunpack.c.h.b16 %v530
    %v2137 = vunpack.c.l.b16 %v531
    %v2138 = vunpack.c.h.b16 %v531
    %v2139 = vunpack.c.l.b16 %v532
    %v2140 = vunpack.c.h.b16 %v532
    %v2141 = vunpack.c.l.b16 %v533
    %v2142 = vunpack.c.h.b16 %v533
    %v2143 = vunpack.c.l.b16 %v534
    %v2144 = vunpack.c.h.b16 %v534
    %v2145 = vunpack.c.l.b16 %v535
    %v2146 = vunpack.c.h.b16 %v535
    %v2147 = vunpack.c.l.b16 %v536
    %v2148 = vunpack.c.h.b16 %v536
    %v2149 = vunpack.c.l.b16 %v537
    %v2150 = vunpack.c.h.b16 %v537
    %v2151 = vunpack.c.l.b16 %v538
    %v2152 = vunpack.c.h.b16 %v538
    %v2153 = vunpack.c.l.b16 %v539
    %v2154 = vunpack.c.h.b16 %v539
    %v2155 = vunpack.c.l.b16 %v540
    %v2156 = vunpack.c.h.b16 %v540
    %v2157 = vunpack.c.l.b16 %v541
    %v2158 = vunpack.c.h.b16 %v541
    %v2159 = vunpack.c.l.b16 %v542
    %v2160 = vunpack.c.h.b16 %v542
    %v2161 = vunpack.c.l.b16 %v543
    %v2162 = vunpack.c.h.b16 %v543
    %v2163 = vunpack.c.l.b16 %v544
    %v2164 = vunpack.c.h.b16 %v544
    %v2165 = vunpack.c.l.b16 %v545
    %v2166 = vunpack.c.h.b16 %v545
    %v2167 = vunpack.c.l.b16 %v546
    %v2168 = vunpack.c.h.b16 %v546
    %v2169 = vunpack.c.l.b16 %v547
    %v2170 = vunpack.c.h.b16 %v547
    %v2171 = vunpack.c.l.b16 %v548
    %v2172 = vunpack.c.h.b16 %v548
    %v2173 = vunpack.c.l.b16 %v549
    %v2174 = vunpack.c.h.b16 %v549
    %v2175 = vunpack.c.l.b16 %v550
    %v2176 = vunpack.c.h.b16 %v550
    %v2177 = vunpack.c.l.b16 %v551
    %v2178 = vunpack.c.h.b16 %v551
    %v2179 = vunpack.c.l.b16 %v552
    %v2180 = vunpack.c.h.b16 %v552
    %v2181 = vunpack.c.l.b16 %v553
    %v2182 = vunpack.c.h.b16 %v553
    %v2183 = vunpack.c.l.b16 %v554
    %v2184 = vunpack.c.h.b16 %v554
    %v2185 = vunpack.c.l.b16 %v555
    %v2186 = vunpack.c.h.b16 %v555
    %v2187 = vunpack.c.l.b16 %v556
    %v2188 = vunpack.c.h.b16 %v556
    %v2189 = vunpack.c.l.b16 %v557
    %v2190 = vunpack.c.h.b16 %v557
    %v2191 = vunpack.c.l.b16 %v558
    %v2192 = vunpack.c.h.b16 %v558
    %v2193 = vunpack.c.l.b16 %v559
    %v2194 = vunpack.c.h.b16 %v559
    %v2195 = vunpack.c.l.b16 %v560
    %v2196 = vunpack.c.h.b16 %v560
    %v2197 = vunpack.c.l.b16 %v561
    %v2198 = vunpack.c.h.b16 %v561
    %v2199 = vunpack.c.l.b16 %v562
    %v2200 = vunpack.c.h.b16 %v562
    %v2201 = vunpack.c.l.b16 %v563
    %v2202 = vunpack.c.h.b16 %v563
    %v2203 = vunpack.c.l.b16 %v564
    %v2204 = vunpack.c.h.b16 %v564
    %v2205 = vunpack.c.l.b16 %v565
    %v2206 = vunpack.c.h.b16 %v565
    %v2207 = vunpack.c.l.b16 %v566
    %v2208 = vunpack.c.h.b16 %v566
    %v2209 = vunpack.c.l.b16 %v567
    %v2210 = vunpack.c.h.b16 %v567
    %v2211 = vunpack.c.l.b16 %v568
    %v2212 = vunpack.c.h.b16 %v568
    %v2213 = vunpack.c.l.b16 %v569
    %v2214 = vunpack.c.h.b16 %v569
    %v2215 = vunpack.c.l.b16 %v570
    %v2216 = vunpack.c.h.b16 %v570
    %v2217 = vunpack.c.l.b16 %v571
    %v2218 = vunpack.c.h.b16 %v571
    %v2219 = vunpack.c.l.b16 %v572
    %v2220 = vunpack.c.h.b16 %v572
    %v2221 = vunpack.c.l.b16 %v573
    %v2222 = vunpack.c.h.b16 %v573
    %v2223 = vunpack.c.l.b16 %v574
    %v2224 = vunpack.c.h.b16 %v574
    %v2225 = vunpack.c.l.b16 %v575
    %v2226 = vunpack.c.h.b16 %v575
    %v2227 = vunpack.c.l.b16 %v576
    %v2228 = vunpack.c.h.b16 %v576
    %v2229 = vunpack.c.l.b16 %v577
    %v2230 = vunpack.c.h.b16 %v577
    %v2231 = vunpack.c.l.b16 %v578
    %v2232 = vunpack.c.h.b16 %v578
    %v2233 = vunpack.c.l.b16 %v579
    %v2234 = vunpack.c.h.b16 %v579
    %v2235 = vunpack.c.l.b16 %v580
    %v2236 = vunpack.c.h.b16 %v580
    %v2237 = vunpack.c.l.b16 %v581
    %v2238 = vunpack.c.h.b16 %v581
    %v2239 = vunpack.c.l.b16 %v582
    %v2240 = vunpack.c.h.b16 %v582
    %v2241 = vunpack.c.l.b16 %v583
    %v2242 = vunpack.c.h.b16 %v583
    %v2243 = vunpack.c.l.b16 %v584
    %v2244 = vunpack.c.h.b16 %v584
    %v2245 = vunpack.c.l.b16 %v585
    %v2246 = vunpack.c.h.b16 %v585
    %v2247 = vunpack.c.l.b16 %v586
    %v2248 = vunpack.c.h.b16 %v586
    %v2249 = vunpack.c.l.b16 %v587
    %v2250 = vunpack.c.h.b16 %v587
    %v2251 = vunpack.c.l.b16 %v588
    %v2252 = vunpack.c.h.b16 %v588
    %v2253 = vunpack.c.l.b16 %v589
    %v2254 = vunpack.c.h.b16 %v589
    %v2255 = vunpack.c.l.b16 %v590
    %v2256 = vunpack.c.h.b16 %v590
    %v2257 = vunpack.c.l.b16 %v591
    %v2258 = vunpack.c.h.b16 %v591
    %v2259 = vunpack.c.l.b16 %v592
    %v2260 = vunpack.c.h.b16 %v592
    %v2261 = vunpack.c.l.b16 %v593
    %v2262 = vunpack.c.h.b16 %v593
    %v2263 = vunpack.c.l.b16 %v594
    %v2264 = vunpack.c.h.b16 %v594
    %v2265 = vunpack.c.l.b16 %v595
    %v2266 = vunpack.c.h.b16 %v595
    %v2267 = vunpack.c.l.b16 %v596
    %v2268 = vunpack.c.h.b16 %v596
    %v2269 = vunpack.c.l.b16 %v597
    %v2270 = vunpack.c.h.b16 %v597
    %v2271 = vunpack.c.l.b16 %v598
    %v2272 = vunpack.c.h.b16 %v598
    %v2273 = vunpack.c.l.b16 %v599
    %v2274 = vunpack.c.h.b16 %v599
    %v2275 = vunpack.c.l.b16 %v600
    %v2276 = vunpack.c.h.b16 %v600
    %v2277 = vunpack.c.l.b16 %v601
    %v2278 = vunpack.c.h.b16 %v601
    %v2279 = vunpack.c.l.b16 %v602
    %v2280 = vunpack.c.h.b16 %v602
    %v2281 = vunpack.c.l.b16 %v603
    %v2282 = vunpack.c.h.b16 %v603
    %v2283 = vunpack.c.l.b16 %v604
    %v2284 = vunpack.c.h.b16 %v604
    %v2285 = vunpack.c.l.b16 %v605
    %v2286 = vunpack.c.h.b16 %v605
    %v2287 = vunpack.c.l.b16 %v606
    %v2288 = vunpack.c.h.b16 %v606
    %v2289 = vunpack.c.l.b16 %v607
    %v2290 = vunpack.c.h.b16 %v607
    %v2291 = vunpack.c.l.b16 %v608
    %v2292 = vunpack.c.h.b16 %v608
    %v2293 = vunpack.c.l.b16 %v609
    %v2294 = vunpack.c.h.b16 %v609
    %v2295 = vunpack.c.l.b16 %v610
    %v2296 = vunpack.c.h.b16 %v610
    %v2297 = vunpack.c.l.b16 %v611
    %v2298 = vunpack.c.h.b16 %v611
    %v2299 = vunpack.c.l.b16 %v612
    %v2300 = vunpack.c.h.b16 %v612
    %v2301 = vunpack.c.l.b16 %v613
    %v2302 = vunpack.c.h.b16 %v613
    %v2303 = vunpack.c.l.b16 %v614
    %v2304 = vunpack.c.h.b16 %v614
    %v2305 = vunpack.c.l.b16 %v615
    %v2306 = vunpack.c.h.b16 %v615
    %v2307 = vunpack.c.l.b16 %v616
    %v2308 = vunpack.c.h.b16 %v616
    %v2309 = vunpack.c.l.b16 %v617
    %v2310 = vunpack.c.h.b16 %v617
    %v2311 = vunpack.c.l.b16 %v618
    %v2312 = vunpack.c.h.b16 %v618
    %v2313 = vunpack.c.l.b16 %v619
    %v2314 = vunpack.c.h.b16 %v619
    %v2315 = vunpack.c.l.b16 %v620
    %v2316 = vunpack.c.h.b16 %v620
    %v2317 = vunpack.c.l.b16 %v621
    %v2318 = vunpack.c.h.b16 %v621
    %v2319 = vunpack.c.l.b16 %v622
    %v2320 = vunpack.c.h.b16 %v622
    %v2321 = vunpack.c.l.b16 %v623
    %v2322 = vunpack.c.h.b16 %v623
    %v2323 = vunpack.c.l.b16 %v624
    %v2324 = vunpack.c.h.b16 %v624
    %v2325 = vunpack.c.l.b16 %v625
    %v2326 = vunpack.c.h.b16 %v625
    %v2327 = vunpack.c.l.b16 %v626
    %v2328 = vunpack.c.h.b16 %v626
    %v2329 = vunpack.c.l.b16 %v627
    %v2330 = vunpack.c.h.b16 %v627
    %v2331 = vunpack.c.l.b16 %v628
    %v2332 = vunpack.c.h.b16 %v628
    %v2333 = vunpack.c.l.b16 %v629
    %v2334 = vunpack.c.h.b16 %v629
    %v2335 = vunpack.c.l.b16 %v630
    %v2336 = vunpack.c.h.b16 %v630
    %v2337 = vunpack.c.l.b16 %v631
    %v2338 = vunpack.c.h.b16 %v631
    %v2339 = vunpack.c.l.b16 %v632
    %v2340 = vunpack.c.h.b16 %v632
    %v2341 = vunpack.c.l.b16 %v633
    %v2342 = vunpack.c.h.b16 %v633
    %v2343 = vunpack.c.l.b16 %v634
    %v2344 = vunpack.c.h.b16 %v634
    %v2345 = vunpack.c.l.b16 %v635
    %v2346 = vunpack.c.h.b16 %v635
    %v2347 = vunpack.c.l.b16 %v636
    %v2348 = vunpack.c.h.b16 %v636
    %v2349 = vunpack.c.l.b16 %v637
    %v2350 = vunpack.c.h.b16 %v637
    %v2351 = vunpack.c.l.b16 %v638
    %v2352 = vunpack.c.h.b16 %v638
    %v2353 = vunpack.c.l.b16 %v639
    %v2354 = vunpack.c.h.b16 %v639
    %v2355 = vunpack.c.l.b16 %v640
    %v2356 = vunpack.c.h.b16 %v640
    %v2357 = vpack.c.b16 %v1247, %v1237
    %v2358 = vpack.c.b16 %v1248, %v1238
    %v2359 = vpack.c.b16 %v1249, %v1239
    %v2360 = vpack.c.b16 %v1250, %v1240
    %v2361 = vpack.c.b16 %v1251, %v1241
    %v2362 = vpack.c.b16 %v1252, %v1242
    %v2363 = vpack.c.b16 %v1253, %v1243
    %v2364 = vpack.c.b16 %v1254, %v1244
    %v2365 = vpack.c.b16 %v1255, %v1245
    %v2366 = vpack.c.b16 %v1256, %v1246
    %v2367 = vpack.c.b16 %v1267, %v1257
    %v2368 = vpack.c.b16 %v1268, %v1258
    %v2369 = vpack.c.b16 %v1269, %v1259
    %v2370 = vpack.c.b16 %v1270, %v1260
    %v2371 = vpack.c.b16 %v1271, %v1261
    %v2372 = vpack.c.b16 %v1272, %v1262
    %v2373 = vpack.c.b16 %v1273, %v1263
    %v2374 = vpack.c.b16 %v1274, %v1264
    %v2375 = vpack.c.b16 %v1275, %v1265
    %v2376 = vpack.c.b16 %v1276, %v1266
    %v2377 = vpack.c.b16 %v1287, %v1277
    %v2378 = vpack.c.b16 %v1288, %v1278
    %v2379 = vpack.c.b16 %v1289, %v1279
    %v2380 = vpack.c.b16 %v1290, %v1280
    %v2381 = vpack.c.b16 %v1291, %v1281
    %v2382 = vpack.c.b16 %v1292, %v1282
    %v2383 = vpack.c.b16 %v1293, %v1283
    %v2384 = vpack.c.b16 %v1294, %v1284
    %v2385 = vpack.c.b16 %v1295, %v1285
    %v2386 = vpack.c.b16 %v1296, %v1286
    %v2387 = vpack.c.b16 %v1307, %v1297
    %v2388 = vpack.c.b16 %v1308, %v1298
    %v2389 = vpack.c.b16 %v1309, %v1299
    %v2390 = vpack.c.b16 %v1310, %v1300
    %v2391 = vpack.c.b16 %v1311, %v1301
    %v2392 = vpack.c.b16 %v1312, %v1302
    %v2393 = vpack.c.b16 %v1313, %v1303
    %v2394 = vpack.c.b16 %v1314, %v1304
    %v2395 = vpack.c.b16 %v1315, %v1305
    %v2396 = vpack.c.b16 %v1316, %v1306
    %v2397 = vpack.c.b16 %v1327, %v1317
    %v2398 = vpack.c.b16 %v1328, %v1318
    %v2399 = vpack.c.b16 %v1329, %v1319
    %v2400 = vpack.c.b16 %v1330, %v1320
    %v2401 = vpack.c.b16 %v1331, %v1321
    %v2402 = vpack.c.b16 %v1332, %v1322
    %v2403 = vpack.c.b16 %v1333, %v1323
    %v2404 = vpack.c.b16 %v1334, %v1324
    %v2405 = vpack.c.b16 %v1335, %v1325
    %v2406 = vpack.c.b16 %v1336, %v1326
    %v2407 = vpack.c.b16 %v1347, %v1337
    %v2408 = vpack.c.b16 %v1348, %v1338
    %v2409 = vpack.c.b16 %v1349, %v1339
    %v2410 = vpack.c.b16 %v1350, %v1340
    %v2411 = vpack.c.b16 %v1351, %v1341
    %v2412 = vpack.c.b16 %v1352, %v1342
    %v2413 = vpack.c.b16 %v1353, %v1343
    %v2414 = vpack.c.b16 %v1354, %v1344
    %v2415 = vpack.c.b16 %v1355, %v1345
    %v2416 = vpack.c.b16 %v1356, %v1346
    %v2417 = vpack.c.b16 %v1367, %v1357
    %v2418 = vpack.c.b16 %v1368, %v1358
    %v2419 = vpack.c.b16 %v1369, %v1359
    %v2420 = vpack.c.b16 %v1370, %v1360
    %v2421 = vpack.c.b16 %v1371, %v1361
    %v2422 = vpack.c.b16 %v1372, %v1362
    %v2423 = vpack.c.b16 %v1373, %v1363
    %v2424 = vpack.c.b16 %v1374, %v1364
    %v2425 = vpack.c.b16 %v1375, %v1365
    %v2426 = vpack.c.b16 %v1376, %v1366
    %v2427 = vpack.c.b16 %v1387, %v1377
    %v2428 = vpack.c.b16 %v1388, %v1378
    %v2429 = vpack.c.b16 %v1389, %v1379
    %v2430 = vpack.c.b16 %v1390, %v1380
    %v2431 = vpack.c.b16 %v1391, %v1381
    %v2432 = vpack.c.b16 %v1392, %v1382
    %v2433 = vpack.c.b16 %v1393, %v1383
    %v2434 = vpack.c.b16 %v1394, %v1384
    %v2435 = vpack.c.b16 %v1395, %v1385
    %v2436 = vpack.c.b16 %v1396, %v1386
    %v2437 = vpack.c.b16 %v1407, %v1397
    %v2438 = vpack.c.b16 %v1408, %v1398
    %v2439 = vpack.c.b16 %v1409, %v1399
    %v2440 = vpack.c.b16 %v1410, %v1400
    %v2441 = vpack.c.b16 %v1411, %v1401
    %v2442 = vpack.c.b16 %v1412, %v1402
    %v2443 = vpack.c.b16 %v1413, %v1403
    %v2444 = vpack.c.b16 %v1414, %v1404
    %v2445 = vpack.c.b16 %v1415, %v1405
    %v2446 = vpack.c.b16 %v1416, %v1406
    %v2447 = vpack.c.b16 %v1427, %v1417
    %v2448 = vpack.c.b16 %v1428, %v1418
    %v2449 = vpack.c.b16 %v1429, %v1419
    %v2450 = vpack.c.b16 %v1430, %v1420
    %v2451 = vpack.c.b16 %v1431, %v1421
    %v2452 = vpack.c.b16 %v1432, %v1422
    %v2453 = vpack.c.b16 %v1433, %v1423
    %v2454 = vpack.c.b16 %v1434, %v1424
    %v2455 = vpack.c.b16 %v1435, %v1425
    %v2456 = vpack.c.b16 %v1436, %v1426
    %v2457 = vpack.c.b16 %v1447, %v1437
    %v2458 = vpack.c.b16 %v1448, %v1438
    %v2459 = vpack.c.b16 %v1449, %v1439
    %v2460 = vpack.c.b16 %v1450, %v1440
    %v2461 = vpack.c.b16 %v1451, %v1441
    %v2462 = vpack.c.b16 %v1452, %v1442
    %v2463 = vpack.c.b16 %v1453, %v1443
    %v2464 = vpack.c.b16 %v1454, %v1444
    %v2465 = vpack.c.b16 %v1455, %v1445
    %v2466 = vpack.c.b16 %v1456, %v1446
    %v2467 = vpack.c.b16 %v1467, %v1457
    %v2468 = vpack.c.b16 %v1468, %v1458
    %v2469 = vpack.c.b16 %v1469, %v1459
    %v2470 = vpack.c.b16 %v1470, %v1460
    %v2471 = vpack.c.b16 %v1471, %v1461
    %v2472 = vpack.c.b16 %v1472, %v1462
    %v2473 = vpack.c.b16 %v1473, %v1463
    %v2474 = vpack.c.b16 %v1474, %v1464
    %v2475 = vpack.c.b16 %v1475, %v1465
    %v2476 = vpack.c.b16 %v1476, %v1466
    %v2477 = vpack.c.b16 %v1487, %v1477
    %v2478 = vpack.c.b16 %v1488, %v1478
    %v2479 = vpack.c.b16 %v1489, %v1479
    %v2480 = vpack.c.b16 %v1490, %v1480
    %v2481 = vpack.c.b16 %v1491, %v1481
    %v2482 = vpack.c.b16 %v1492, %v1482
    %v2483 = vpack.c.b16 %v1493, %v1483
    %v2484 = vpack.c.b16 %v1494, %v1484
    %v2485 = vpack.c.b16 %v1495, %v1485
    %v2486 = vpack.c.b16 %v1496, %v1486
    %v2487 = vpack.c.b16 %v1507, %v1497
    %v2488 = vpack.c.b16 %v1508, %v1498
    %v2489 = vpack.c.b16 %v1509, %v1499
    %v2490 = vpack.c.b16 %v1510, %v1500
    %v2491 = vpack.c.b16 %v1511, %v1501
    %v2492 = vpack.c.b16 %v1512, %v1502
    %v2493 = vpack.c.b16 %v1513, %v1503
    %v2494 = vpack.c.b16 %v1514, %v1504
    %v2495 = vpack.c.b16 %v1515, %v1505
    %v2496 = vpack.c.b16 %v1516, %v1506
    %v2497 = vpack.c.b16 %v1527, %v1517
    %v2498 = vpack.c.b16 %v1528, %v1518
    %v2499 = vpack.c.b16 %v1529, %v1519
    %v2500 = vpack.c.b16 %v1530, %v1520
    %v2501 = vpack.c.b16 %v1531, %v1521
    %v2502 = vpack.c.b16 %v1532, %v1522
    %v2503 = vpack.c.b16 %v1533, %v1523
    %v2504 = vpack.c.b16 %v1534, %v1524
    %v2505 = vpack.c.b16 %v1535, %v1525
    %v2506 = vpack.c.b16 %v1536, %v1526
    %v2507 = vpack.c.b16 %v1547, %v1537
    %v2508 = vpack.c.b16 %v1548, %v1538
    %v2509 = vpack.c.b16 %v1549, %v1539
    %v2510 = vpack.c.b16 %v1550, %v1540
    %v2511 = vpack.c.b16 %v1551, %v1541
    %v2512 = vpack.c.b16 %v1552, %v1542
    %v2513 = vpack.c.b16 %v1553, %v1543
    %v2514 = vpack.c.b16 %v1554, %v1544
    %v2515 = vpack.c.b16 %v1555, %v1545
    %v2516 = vpack.c.b16 %v1556, %v1546
    %v2517 = vpack.c.b16 %v1567, %v1557
    %v2518 = vpack.c.b16 %v1568, %v1558
    %v2519 = vpack.c.b16 %v1569, %v1559
    %v2520 = vpack.c.b16 %v1570, %v1560
    %v2521 = vpack.c.b16 %v1571, %v1561
    %v2522 = vpack.c.b16 %v1572, %v1562
    %v2523 = vpack.c.b16 %v1573, %v1563
    %v2524 = vpack.c.b16 %v1574, %v1564
    %v2525 = vpack.c.b16 %v1575, %v1565
    %v2526 = vpack.c.b16 %v1576, %v1566
    %v2527 = vpack.c.b16 %v1587, %v1577
    %v2528 = vpack.c.b16 %v1588, %v1578
    %v2529 = vpack.c.b16 %v1589, %v1579
    %v2530 = vpack.c.b16 %v1590, %v1580
    %v2531 = vpack.c.b16 %v1591, %v1581
    %v2532 = vpack.c.b16 %v1592, %v1582
    %v2533 = vpack.c.b16 %v1593, %v1583
    %v2534 = vpack.c.b16 %v1594, %v1584
    %v2535 = vpack.c.b16 %v1595, %v1585
    %v2536 = vpack.c.b16 %v1596, %v1586
    %v2537 = vpack.c.b16 %v1607, %v1597
    %v2538 = vpack.c.b16 %v1608, %v1598
    %v2539 = vpack.c.b16 %v1609, %v1599
    %v2540 = vpack.c.b16 %v1610, %v1600
    %v2541 = vpack.c.b16 %v1611, %v1601
    %v2542 = vpack.c.b16 %v1612, %v1602
    %v2543 = vpack.c.b16 %v1613, %v1603
    %v2544 = vpack.c.b16 %v1614, %v1604
    %v2545 = vpack.c.b16 %v1615, %v1605
    %v2546 = vpack.c.b16 %v1616, %v1606
    %v2547 = vpack.c.b16 %v1627, %v1617
    %v2548 = vpack.c.b16 %v1628, %v1618
    %v2549 = vpack.c.b16 %v1629, %v1619
    %v2550 = vpack.c.b16 %v1630, %v1620
    %v2551 = vpack.c.b16 %v1631, %v1621
    %v2552 = vpack.c.b16 %v1632, %v1622
    %v2553 = vpack.c.b16 %v1633, %v1623
    %v2554 = vpack.c.b16 %v1634, %v1624
    %v2555 = vpack.c.b16 %v1635, %v1625
    %v2556 = vpack.c.b16 %v1636, %v1626
    %v2557 = vpack.c.b16 %v1647, %v1637
    %v2558 = vpack.c.b16 %v1648, %v1638
    %v2559 = vpack.c.b16 %v1649, %v1639
    %v2560 = vpack.c.b16 %v1650, %v1640
    %v2561 = vpack.c.b16 %v1651, %v1641
    %v2562 = vpack.c.b16 %v1652, %v1642
    %v2563 = vpack.c.b16 %v1653, %v1643
    %v2564 = vpack.c.b16 %v1654, %v1644
    %v2565 = vpack.c.b16 %v1655, %v1645
    %v2566 = vpack.c.b16 %v1656, %v1646
    %v2567 = vpack.c.b16 %v1667, %v1657
    %v2568 = vpack.c.b16 %v1668, %v1658
    %v2569 = vpack.c.b16 %v1669, %v1659
    %v2570 = vpack.c.b16 %v1670, %v1660
    %v2571 = vpack.c.b16 %v1671, %v1661
    %v2572 = vpack.c.b16 %v1672, %v1662
    %v2573 = vpack.c.b16 %v1673, %v1663
    %v2574 = vpack.c.b16 %v1674, %v1664
    %v2575 = vpack.c.b16 %v1675, %v1665
    %v2576 = vpack.c.b16 %v1676, %v1666
    %v2577 = vpack.c.b16 %v1687, %v1677
    %v2578 = vpack.c.b16 %v1688, %v1678
    %v2579 = vpack.c.b16 %v1689, %v1679
    %v2580 = vpack.c.b16 %v1690, %v1680
    %v2581 = vpack.c.b16 %v1691, %v1681
    %v2582 = vpack.c.b16 %v1692, %v1682
    %v2583 = vpack.c.b16 %v1693, %v1683
    %v2584 = vpack.c.b16 %v1694, %v1684
    %v2585 = vpack.c.b16 %v1695, %v1685
    %v2586 = vpack.c.b16 %v1696, %v1686
    %v2587 = vpack.c.b16 %v1707, %v1697
    %v2588 = vpack.c.b16 %v1708, %v1698
    %v2589 = vpack.c.b16 %v1709, %v1699
    %v2590 = vpack.c.b16 %v1710, %v1700
    %v2591 = vpack.c.b16 %v1711, %v1701
    %v2592 = vpack.c.b16 %v1712, %v1702
    %v2593 = vpack.c.b16 %v1713, %v1703
    %v2594 = vpack.c.b16 %v1714, %v1704
    %v2595 = vpack.c.b16 %v1715, %v1705
    %v2596 = vpack.c.b16 %v1716, %v1706
    %v2597 = vpack.c.b16 %v1727, %v1717
    %v2598 = vpack.c.b16 %v1728, %v1718
    %v2599 = vpack.c.b16 %v1729, %v1719
    %v2600 = vpack.c.b16 %v1730, %v1720
    %v2601 = vpack.c.b16 %v1731, %v1721
    %v2602 = vpack.c.b16 %v1732, %v1722
    %v2603 = vpack.c.b16 %v1733, %v1723
    %v2604 = vpack.c.b16 %v1734, %v1724
    %v2605 = vpack.c.b16 %v1735, %v1725
    %v2606 = vpack.c.b16 %v1736, %v1726
    %v2607 = vpack.c.b16 %v1747, %v1737
    %v2608 = vpack.c.b16 %v1748, %v1738
    %v2609 = vpack.c.b16 %v1749, %v1739
    %v2610 = vpack.c.b16 %v1750, %v1740
    %v2611 = vpack.c.b16 %v1751, %v1741
    %v2612 = vpack.c.b16 %v1752, %v1742
    %v2613 = vpack.c.b16 %v1753, %v1743
    %v2614 = vpack.c.b16 %v1754, %v1744
    %v2615 = vpack.c.b16 %v1755, %v1745
    %v2616 = vpack.c.b16 %v1756, %v1746
    %v2617 = vpack.c.b16 %v1767, %v1757
    %v2618 = vpack.c.b16 %v1768, %v1758
    %v2619 = vpack.c.b16 %v1769, %v1759
    %v2620 = vpack.c.b16 %v1770, %v1760
    %v2621 = vpack.c.b16 %v1771, %v1761
    %v2622 = vpack.c.b16 %v1772, %v1762
    %v2623 = vpack.c.b16 %v1773, %v1763
    %v2624 = vpack.c.b16 %v1774, %v1764
    %v2625 = vpack.c.b16 %v1775, %v1765
    %v2626 = vpack.c.b16 %v1776, %v1766
    %v2627 = vpack.c.b16 %v1787, %v1777
    %v2628 = vpack.c.b16 %v1788, %v1778
    %v2629 = vpack.c.b16 %v1789, %v1779
    %v2630 = vpack.c.b16 %v1790, %v1780
    %v2631 = vpack.c.b16 %v1791, %v1781
    %v2632 = vpack.c.b16 %v1792, %v1782
    %v2633 = vpack.c.b16 %v1793, %v1783
    %v2634 = vpack.c.b16 %v1794, %v1784
    %v2635 = vpack.c.b16 %v1795, %v1785
    %v2636 = vpack.c.b16 %v1796, %v1786
    %v2637 = vpack.c.b16 %v1807, %v1797
    %v2638 = vpack.c.b16 %v1808, %v1798
    %v2639 = vpack.c.b16 %v1809, %v1799
    %v2640 = vpack.c.b16 %v1810, %v1800
    %v2641 = vpack.c.b16 %v1811, %v1801
    %v2642 = vpack.c.b16 %v1812, %v1802
    %v2643 = vpack.c.b16 %v1813, %v1803
    %v2644 = vpack.c.b16 %v1814, %v1804
    %v2645 = vpack.c.b16 %v1815, %v1805
    %v2646 = vpack.c.b16 %v1816, %v1806
    %v2647 = vpack.c.b16 %v1827, %v1817
    %v2648 = vpack.c.b16 %v1828, %v1818
    %v2649 = vpack.c.b16 %v1829, %v1819
    %v2650 = vpack.c.b16 %v1830, %v1820
    %v2651 = vpack.c.b16 %v1831, %v1821
    %v2652 = vpack.c.b16 %v1832, %v1822
    %v2653 = vpack.c.b16 %v1833, %v1823
    %v2654 = vpack.c.b16 %v1834, %v1824
    %v2655 = vpack.c.b16 %v1835, %v1825
    %v2656 = vpack.c.b16 %v1836, %v1826
    %v2657 = vpack.c.b16 %v1847, %v1837
    %v2658 = vpack.c.b16 %v1848, %v1838
    %v2659 = vpack.c.b16 %v1849, %v1839
    %v2660 = vpack.c.b16 %v1850, %v1840
    %v2661 = vpack.c.b16 %v1851, %v1841
    %v2662 = vpack.c.b16 %v1852, %v1842
    %v2663 = vpack.c.b16 %v1853, %v1843
    %v2664 = vpack.c.b16 %v1854, %v1844
    %v2665 = vpack.c.b16 %v1855, %v1845
    %v2666 = vpack.c.b16 %v1856, %v1846
    %v2667 = vpack.c.b16 %v1867, %v1857
    %v2668 = vpack.c.b16 %v1868, %v1858
    %v2669 = vpack.c.b16 %v1869, %v1859
    %v2670 = vpack.c.b16 %v1870, %v1860
    %v2671 = vpack.c.b16 %v1871, %v1861
    %v2672 = vpack.c.b16 %v1872, %v1862
    %v2673 = vpack.c.b16 %v1873, %v1863
    %v2674 = vpack.c.b16 %v1874, %v1864
    %v2675 = vpack.c.b16 %v1875, %v1865
    %v2676 = vpack.c.b16 %v1876, %v1866
    %v2677 = vpack.c.b16 %v1887, %v1877
    %v2678 = vpack.c.b16 %v1888, %v1878
    %v2679 = vpack.c.b16 %v1889, %v1879
    %v2680 = vpack.c.b16 %v1890, %v1880
    %v2681 = vpack.c.b16 %v1891, %v1881
    %v2682 = vpack.c.b16 %v1892, %v1882
    %v2683 = vpack.c.b16 %v1893, %v1883
    %v2684 = vpack.c.b16 %v1894, %v1884
    %v2685 = vpack.c.b16 %v1895, %v1885
    %v2686 = vpack.c.b16 %v1896, %v1886
    %v2687 = vpack.c.b16 %v1907, %v1897
    %v2688 = vpack.c.b16 %v1908, %v1898
    %v2689 = vpack.c.b16 %v1909, %v1899
    %v2690 = vpack.c.b16 %v1910, %v1900
    %v2691 = vpack.c.b16 %v1911, %v1901
    %v2692 = vpack.c.b16 %v1912, %v1902
    %v2693 = vpack.c.b16 %v1913, %v1903
    %v2694 = vpack.c.b16 %v1914, %v1904
    %v2695 = vpack.c.b16 %v1915, %v1905
    %v2696 = vpack.c.b16 %v1916, %v1906
    %v2697 = vpack.c.b16 %v1927, %v1917
    %v2698 = vpack.c.b16 %v1928, %v1918
    %v2699 = vpack.c.b16 %v1929, %v1919
    %v2700 = vpack.c.b16 %v1930, %v1920
    %v2701 = vpack.c.b16 %v1931, %v1921
    %v2702 = vpack.c.b16 %v1932, %v1922
    %v2703 = vpack.c.b16 %v1933, %v1923
    %v2704 = vpack.c.b16 %v1934, %v1924
    %v2705 = vpack.c.b16 %v1935, %v1925
    %v2706 = vpack.c.b16 %v1936, %v1926
    %v2707 = vpack.c.b16 %v1947, %v1937
    %v2708 = vpack.c.b16 %v1948, %v1938
    %v2709 = vpack.c.b16 %v1949, %v1939
    %v2710 = vpack.c.b16 %v1950, %v1940
    %v2711 = vpack.c.b16 %v1951, %v1941
    %v2712 = vpack.c.b16 %v1952, %v1942
    %v2713 = vpack.c.b16 %v1953, %v1943
    %v2714 = vpack.c.b16 %v1954, %v1944
    %v2715 = vpack.c.b16 %v1955, %v1945
    %v2716 = vpack.c.b16 %v1956, %v1946
    %v2717 = vpack.c.b16 %v1967, %v1957
    %v2718 = vpack.c.b16 %v1968, %v1958
    %v2719 = vpack.c.b16 %v1969, %v1959
    %v2720 = vpack.c.b16 %v1970, %v1960
    %v2721 = vpack.c.b16 %v1971, %v1961
    %v2722 = vpack.c.b16 %v1972, %v1962
    %v2723 = vpack.c.b16 %v1973, %v1963
    %v2724 = vpack.c.b16 %v1974, %v1964
    %v2725 = vpack.c.b16 %v1975, %v1965
    %v2726 = vpack.c.b16 %v1976, %v1966
    %v2727 = vpack.c.b16 %v1987, %v1977
    %v2728 = vpack.c.b16 %v1988, %v1978
    %v2729 = vpack.c.b16 %v1989, %v1979
    %v2730 = vpack.c.b16 %v1990, %v1980
    %v2731 = vpack.c.b16 %v1991, %v1981
    %v2732 = vpack.c.b16 %v1992, %v1982
    %v2733 = vpack.c.b16 %v1993, %v1983
    %v2734 = vpack.c.b16 %v1994, %v1984
    %v2735 = vpack.c.b16 %v1995, %v1985
    %v2736 = vpack.c.b16 %v1996, %v1986
    %v2737 = vpack.c.b16 %v2007, %v1997
    %v2738 = vpack.c.b16 %v2008, %v1998
    %v2739 = vpack.c.b16 %v2009, %v1999
    %v2740 = vpack.c.b16 %v2010, %v2000
    %v2741 = vpack.c.b16 %v2011, %v2001
    %v2742 = vpack.c.b16 %v2012, %v2002
    %v2743 = vpack.c.b16 %v2013, %v2003
    %v2744 = vpack.c.b16 %v2014, %v2004
    %v2745 = vpack.c.b16 %v2015, %v2005
    %v2746 = vpack.c.b16 %v2016, %v2006
    %v2747 = vpack.c.b16 %v2027, %v2017
    %v2748 = vpack.c.b16 %v2028, %v2018
    %v2749 = vpack.c.b16 %v2029, %v2019
    %v2750 = vpack.c.b16 %v2030, %v2020
    %v2751 = vpack.c.b16 %v2031, %v2021
    %v2752 = vpack.c.b16 %v2032, %v2022
    %v2753 = vpack.c.b16 %v2033, %v2023
    %v2754 = vpack.c.b16 %v2034, %v2024
    %v2755 = vpack.c.b16 %v2035, %v2025
    %v2756 = vpack.c.b16 %v2036, %v2026
    %v2757 = vpack.c.b16 %v2047, %v2037
    %v2758 = vpack.c.b16 %v2048, %v2038
    %v2759 = vpack.c.b16 %v2049, %v2039
    %v2760 = vpack.c.b16 %v2050, %v2040
    %v2761 = vpack.c.b16 %v2051, %v2041
    %v2762 = vpack.c.b16 %v2052, %v2042
    %v2763 = vpack.c.b16 %v2053, %v2043
    %v2764 = vpack.c.b16 %v2054, %v2044
    %v2765 = vpack.c.b16 %v2055, %v2045
    %v2766 = vpack.c.b16 %v2056, %v2046
    %v2767 = vpack.c.b16 %v2067, %v2057
    %v2768 = vpack.c.b16 %v2068, %v2058
    %v2769 = vpack.c.b16 %v2069, %v2059
    %v2770 = vpack.c.b16 %v2070, %v2060
    %v2771 = vpack.c.b16 %v2071, %v2061
    %v2772 = vpack.c.b16 %v2072, %v2062
    %v2773 = vpack.c.b16 %v2073, %v2063
    %v2774 = vpack.c.b16 %v2074, %v2064
    %v2775 = vpack.c.b16 %v2075, %v2065
    %v2776 = vpack.c.b16 %v2076, %v2066
    %v2777 = vpack.c.b16 %v2087, %v2077
    %v2778 = vpack.c.b16 %v2088, %v2078
    %v2779 = vpack.c.b16 %v2089, %v2079
    %v2780 = vpack.c.b16 %v2090, %v2080
    %v2781 = vpack.c.b16 %v2091, %v2081
    %v2782 = vpack.c.b16 %v2092, %v2082
    %v2783 = vpack.c.b16 %v2093, %v2083
    %v2784 = vpack.c.b16 %v2094, %v2084
    %v2785 = vpack.c.b16 %v2095, %v2085
    %v2786 = vpack.c.b16 %v2096, %v2086
    %v2787 = vpack.c.b16 %v2107, %v2097
    %v2788 = vpack.c.b16 %v2108, %v2098
    %v2789 = vpack.c.b16 %v2109, %v2099
    %v2790 = vpack.c.b16 %v2110, %v2100
    %v2791 = vpack.c.b16 %v2111, %v2101
    %v2792 = vpack.c.b16 %v2112, %v2102
    %v2793 = vpack.c.b16 %v2113, %v2103
    %v2794 = vpack.c.b16 %v2114, %v2104
    %v2795 = vpack.c.b16 %v2115, %v2105
    %v2796 = vpack.c.b16 %v2116, %v2106
    %v2797 = vpack.c.b16 %v2127, %v2117
    %v2798 = vpack.c.b16 %v2128, %v2118
    %v2799 = vpack.c.b16 %v2129, %v2119
    %v2800 = vpack.c.b16 %v2130, %v2120
    %v2801 = vpack.c.b16 %v2131, %v2121
    %v2802 = vpack.c.b16 %v2132, %v2122
    %v2803 = vpack.c.b16 %v2133, %v2123
    %v2804 = vpack.c.b16 %v2134, %v2124
    %v2805 = vpack.c.b16 %v2135, %v2125
    %v2806 = vpack.c.b16 %v2136, %v2126
    %v2807 = vpack.c.b16 %v2147, %v2137
    %v2808 = vpack.c.b16 %v2148, %v2138
    %v2809 = vpack.c.b16 %v2149, %v2139
    %v2810 = vpack.c.b16 %v2150, %v2140
    %v2811 = vpack.c.b16 %v2151, %v2141
    %v2812 = vpack.c.b16 %v2152, %v2142
    %v2813 = vpack.c.b16 %v2153, %v2143
    %v2814 = vpack.c.b16 %v2154, %v2144
    %v2815 = vpack.c.b16 %v2155, %v2145
    %v2816 = vpack.c.b16 %v2156, %v2146
    %v2817 = vpack.c.b16 %v2167, %v2157
    %v2818 = vpack.c.b16 %v2168, %v2158
    %v2819 = vpack.c.b16 %v2169, %v2159
    %v2820 = vpack.c.b16 %v2170, %v2160
    %v2821 = vpack.c.b16 %v2171, %v2161
    %v2822 = vpack.c.b16 %v2172, %v2162
    %v2823 = vpack.c.b16 %v2173, %v2163
    %v2824 = vpack.c.b16 %v2174, %v2164
    %v2825 = vpack.c.b16 %v2175, %v2165
    %v2826 = vpack.c.b16 %v2176, %v2166
    %v2827 = vpack.c.b16 %v2187, %v2177
    %v2828 = vpack.c.b16 %v2188, %v2178
    %v2829 = vpack.c.b16 %v2189, %v2179
    %v2830 = vpack.c.b16 %v2190, %v2180
    %v2831 = vpack.c.b16 %v2191, %v2181
    %v2832 = vpack.c.b16 %v2192, %v2182
    %v2833 = vpack.c.b16 %v2193, %v2183
    %v2834 = vpack.c.b16 %v2194, %v2184
    %v2835 = vpack.c.b16 %v2195, %v2185
    %v2836 = vpack.c.b16 %v2196, %v2186
    %v2837 = vpack.c.b16 %v2207, %v2197
    %v2838 = vpack.c.b16 %v2208, %v2198
    %v2839 = vpack.c.b16 %v2209, %v2199
    %v2840 = vpack.c.b16 %v2210, %v2200
    %v2841 = vpack.c.b16 %v2211, %v2201
    %v2842 = vpack.c.b16 %v2212, %v2202
    %v2843 = vpack.c.b16 %v2213, %v2203
    %v2844 = vpack.c.b16 %v2214, %v2204
    %v2845 = vpack.c.b16 %v2215, %v2205
    %v2846 = vpack.c.b16 %v2216, %v2206
    %v2847 = vpack.c.b16 %v2227, %v2217
    %v2848 = vpack.c.b16 %v2228, %v2218
    %v2849 = vpack.c.b16 %v2229, %v2219
    %v2850 = vpack.c.b16 %v2230, %v2220
    %v2851 = vpack.c.b16 %v2231, %v2221
    %v2852 = vpack.c.b16 %v2232, %v2222
    %v2853 = vpack.c.b16 %v2233, %v2223
    %v2854 = vpack.c.b16 %v2234, %v2224
    %v2855 = vpack.c.b16 %v2235, %v2225
    %v2856 = vpack.c.b16 %v2236, %v2226
    %v2857 = vpack.c.b16 %v2247, %v2237
    %v2858 = vpack.c.b16 %v2248, %v2238
    %v2859 = vpack.c.b16 %v2249, %v2239
    %v2860 = vpack.c.b16 %v2250, %v2240
    %v2861 = vpack.c.b16 %v2251, %v2241
    %v2862 = vpack.c.b16 %v2252, %v2242
    %v2863 = vpack.c.b16 %v2253, %v2243
    %v2864 = vpack.c.b16 %v2254, %v2244
    %v2865 = vpack.c.b16 %v2255, %v2245
    %v2866 = vpack.c.b16 %v2256, %v2246
    %v2867 = vpack.c.b16 %v2267, %v2257
    %v2868 = vpack.c.b16 %v2268, %v2258
    %v2869 = vpack.c.b16 %v2269, %v2259
    %v2870 = vpack.c.b16 %v2270, %v2260
    %v2871 = vpack.c.b16 %v2271, %v2261
    %v2872 = vpack.c.b16 %v2272, %v2262
    %v2873 = vpack.c.b16 %v2273, %v2263
    %v2874 = vpack.c.b16 %v2274, %v2264
    %v2875 = vpack.c.b16 %v2275, %v2265
    %v2876 = vpack.c.b16 %v2276, %v2266
    %v2877 = vpack.c.b16 %v2287, %v2277
    %v2878 = vpack.c.b16 %v2288, %v2278
    %v2879 = vpack.c.b16 %v2289, %v2279
    %v2880 = vpack.c.b16 %v2290, %v2280
    %v2881 = vpack.c.b16 %v2291, %v2281
    %v2882 = vpack.c.b16 %v2292, %v2282
    %v2883 = vpack.c.b16 %v2293, %v2283
    %v2884 = vpack.c.b16 %v2294, %v2284
    %v2885 = vpack.c.b16 %v2295, %v2285
    %v2886 = vpack.c.b16 %v2296, %v2286
    %v2887 = vpack.c.b16 %v2307, %v2297
    %v2888 = vpack.c.b16 %v2308, %v2298
    %v2889 = vpack.c.b16 %v2309, %v2299
    %v2890 = vpack.c.b16 %v2310, %v2300
    %v2891 = vpack.c.b16 %v2311, %v2301
    %v2892 = vpack.c.b16 %v2312, %v2302
    %v2893 = vpack.c.b16 %v2313, %v2303
    %v2894 = vpack.c.b16 %v2314, %v2304
    %v2895 = vpack.c.b16 %v2315, %v2305
    %v2896 = vpack.c.b16 %v2316, %v2306
    %v2897 = vpack.c.b16 %v2327, %v2317
    %v2898 = vpack.c.b16 %v2328, %v2318
    %v2899 = vpack.c.b16 %v2329, %v2319
    %v2900 = vpack.c.b16 %v2330, %v2320
    %v2901 = vpack.c.b16 %v2331, %v2321
    %v2902 = vpack.c.b16 %v2332, %v2322
    %v2903 = vpack.c.b16 %v2333, %v2323
    %v2904 = vpack.c.b16 %v2334, %v2324
    %v2905 = vpack.c.b16 %v2335, %v2325
    %v2906 = vpack.c.b16 %v2336, %v2326
    %v2907 = vpack.c.b16 %v2347, %v2337
    %v2908 = vpack.c.b16 %v2348, %v2338
    %v2909 = vpack.c.b16 %v2349, %v2339
    %v2910 = vpack.c.b16 %v2350, %v2340
    %v2911 = vpack.c.b16 %v2351, %v2341
    %v2912 = vpack.c.b16 %v2352, %v2342
    %v2913 = vpack.c.b16 %v2353, %v2343
    %v2914 = vpack.c.b16 %v2354, %v2344
    %v2915 = vpack.c.b16 %v2355, %v2345
    %v2916 = vpack.c.b16 %v2356, %v2346
    %3477 = vmatprep.subr.bf16.mxu0 %v2358
    %3478 = vmatpush1.bf16.msra.mxu0 %v2357
    %3479 = vmatprep.subr.bf16.mxu0 %v2368
    %3480 = vmatpush1.bf16.msra.mxu0 %v2367
    %3481 = vmatprep.subr.bf16.mxu0 %v2378
    %3482 = vmatpush1.bf16.msra.mxu0 %v2377
    %3483 = vmatprep.subr.bf16.mxu0 %v2388
    %3484 = vmatpush1.bf16.msra.mxu0 %v2387
    %3485 = vmatprep.subr.bf16.mxu0 %v2398
    %3486 = vmatpush1.bf16.msra.mxu0 %v2397
    %3487 = vmatprep.subr.bf16.mxu0 %v2408
    %3488 = vmatpush1.bf16.msra.mxu0 %v2407
    %3489 = vmatprep.subr.bf16.mxu0 %v2418
    %3490 = vmatpush1.bf16.msra.mxu0 %v2417
    %3491 = vmatprep.subr.bf16.mxu0 %v2428
    %3492 = vmatpush1.bf16.msra.mxu0 %v2427
    %3493 = vmatprep.subr.bf16.mxu0 %v2438
    %3494 = vmatpush1.bf16.msra.mxu0 %v2437
    %3495 = vmatprep.subr.bf16.mxu0 %v2448
    %3496 = vmatpush1.bf16.msra.mxu0 %v2447
    %3497 = vmatprep.subr.bf16.mxu0 %v2458
    %3498 = vmatpush1.bf16.msra.mxu0 %v2457
    %3499 = vmatprep.subr.bf16.mxu0 %v2468
    %3500 = vmatpush1.bf16.msra.mxu0 %v2467
    %3501 = vmatprep.subr.bf16.mxu0 %v2478
    %3502 = vmatpush1.bf16.msra.mxu0 %v2477
    %3503 = vmatprep.subr.bf16.mxu0 %v2488
    %3504 = vmatpush1.bf16.msra.mxu0 %v2487
    %3505 = vmatprep.subr.bf16.mxu0 %v2498
    %3506 = vmatpush1.bf16.msra.mxu0 %v2497
    %3507 = vmatprep.subr.bf16.mxu0 %v2508
    %3508 = vmatpush1.bf16.msra.mxu0 %v2507
    %3509 = vmatprep.mubr.bf16.mxu0 %v664
    %3510 = vmatmul.mubr.bf16.gmra.mrb[0].mxu0 %v663
    %v3511 = vpop.f32.mrb[0].mxu0
    %v3512 = vadd.f32 0.0, %v3511
    %v3513 = vpop.f32.mrb[0].mxu0
    %v3514 = vadd.f32 0.0, %v3513
    %v3515 = vpop.f32.mrb[0].mxu0
    %v3516 = vadd.f32 0.0, %v3515
    %v3517 = vpop.f32.mrb[0].mxu0
    %v3518 = vadd.f32 0.0, %v3517
    %3519 = vdwg.mxu0
    %3520 = vmatprep.subr.bf16.mxu0 %v2518
    %3521 = vmatpush1.bf16.msra.mxu0 %v2517
    %3522 = vmatprep.subr.bf16.mxu0 %v2528
    %3523 = vmatpush1.bf16.msra.mxu0 %v2527
    %3524 = vmatprep.subr.bf16.mxu0 %v2538
    %3525 = vmatpush1.bf16.msra.mxu0 %v2537
    %3526 = vmatprep.subr.bf16.mxu0 %v2548
    %3527 = vmatpush1.bf16.msra.mxu0 %v2547
    %3528 = vmatprep.subr.bf16.mxu0 %v2558
    %3529 = vmatpush1.bf16.msra.mxu0 %v2557
    %3530 = vmatprep.subr.bf16.mxu0 %v2568
    %3531 = vmatpush1.bf16.msra.mxu0 %v2567
    %3532 = vmatprep.subr.bf16.mxu0 %v2578
    %3533 = vmatpush1.bf16.msra.mxu0 %v2577
    %3534 = vmatprep.subr.bf16.mxu0 %v2588
    %3535 = vmatpush1.bf16.msra.mxu0 %v2587
    %3536 = vmatprep.subr.bf16.mxu0 %v2598
    %3537 = vmatpush1.bf16.msra.mxu0 %v2597
    %3538 = vmatprep.subr.bf16.mxu0 %v2608
    %3539 = vmatpush1.bf16.msra.mxu0 %v2607
    %3540 = vmatprep.subr.bf16.mxu0 %v2618
    %3541 = vmatpush1.bf16.msra.mxu0 %v2617
    %3542 = vmatprep.subr.bf16.mxu0 %v2628
    %3543 = vmatpush1.bf16.msra.mxu0 %v2627
    %3544 = vmatprep.subr.bf16.mxu0 %v2638
    %3545 = vmatpush1.bf16.msra.mxu0 %v2637
    %3546 = vmatprep.subr.bf16.mxu0 %v2648
    %3547 = vmatpush1.bf16.msra.mxu0 %v2647
    %3548 = vmatprep.subr.bf16.mxu0 %v2658
    %3549 = vmatpush1.bf16.msra.mxu0 %v2657
    %3550 = vmatprep.subr.bf16.mxu0 %v2668
    %3551 = vmatpush1.bf16.msra.mxu0 %v2667
    %3552 = vmatprep.mubr.bf16.mxu0 %v666
    %3553 = vmatmul.mubr.bf16.gmra.mrb[0].mxu0 %v665
    %v3554 = vpop.f32.mrb[0].mxu0
    %v3555 = vadd.f32 %v3512, %v3554
    %v3556 = vpop.f32.mrb[0].mxu0
    %v3557 = vadd.f32 %v3514, %v3556
    %v3558 = vpop.f32.mrb[0].mxu0
    %v3559 = vadd.f32 %v3516, %v3558
    %v3560 = vpop.f32.mrb[0].mxu0
    %v3561 = vadd.f32 %v3518, %v3560
    %3562 = vdwg.mxu0
    %3563 = vmatprep.subr.bf16.mxu0 %v2678
    %3564 = vmatpush1.bf16.msra.mxu0 %v2677
    %3565 = vmatprep.subr.bf16.mxu0 %v2688
    %3566 = vmatpush1.bf16.msra.mxu0 %v2687
    %3567 = vmatprep.subr.bf16.mxu0 %v2698
    %3568 = vmatpush1.bf16.msra.mxu0 %v2697
    %3569 = vmatprep.subr.bf16.mxu0 %v2708
    %3570 = vmatpush1.bf16.msra.mxu0 %v2707
    %3571 = vmatprep.subr.bf16.mxu0 %v2718
    %3572 = vmatpush1.bf16.msra.mxu0 %v2717
    %3573 = vmatprep.subr.bf16.mxu0 %v2728
    %3574 = vmatpush1.bf16.msra.mxu0 %v2727
    %3575 = vmatprep.subr.bf16.mxu0 %v2738
    %3576 = vmatpush1.bf16.msra.mxu0 %v2737
    %3577 = vmatprep.subr.bf16.mxu0 %v2748
    %3578 = vmatpush1.bf16.msra.mxu0 %v2747
    %3579 = vmatprep.subr.bf16.mxu0 %v2758
    %3580 = vmatpush1.bf16.msra.mxu0 %v2757
    %3581 = vmatprep.subr.bf16.mxu0 %v2768
    %3582 = vmatpush1.bf16.msra.mxu0 %v2767
    %3583 = vmatprep.subr.bf16.mxu0 %v2778
    %3584 = vmatpush1.bf16.msra.mxu0 %v2777
    %3585 = vmatprep.subr.bf16.mxu0 %v2788
    %3586 = vmatpush1.bf16.msra.mxu0 %v2787
    %3587 = vmatprep.subr.bf16.mxu0 %v2798
    %3588 = vmatpush1.bf16.msra.mxu0 %v2797
    %3589 = vmatprep.subr.bf16.mxu0 %v2808
    %3590 = vmatpush1.bf16.msra.mxu0 %v2807
    %3591 = vmatprep.subr.bf16.mxu0 %v2818
    %3592 = vmatpush1.bf16.msra.mxu0 %v2817
    %3593 = vmatprep.subr.bf16.mxu0 %v2828
    %3594 = vmatpush1.bf16.msra.mxu0 %v2827
    %3595 = vmatprep.mubr.bf16.mxu0 %v668
    %3596 = vmatmul.mubr.bf16.gmra.mrb[0].mxu0 %v667
    %v3597 = vpop.f32.mrb[0].mxu0
    %v3598 = vadd.f32 %v3555, %v3597
    %v3599 = vpop.f32.mrb[0].mxu0
    %v3600 = vadd.f32 %v3557, %v3599
    %v3601 = vpop.f32.mrb[0].mxu0
    %v3602 = vadd.f32 %v3559, %v3601
    %v3603 = vpop.f32.mrb[0].mxu0
    %v3604 = vadd.f32 %v3561, %v3603
    %3605 = vdwg.mxu0
    %3606 = vmatprep.subr.bf16.mxu0 %v2838
    %3607 = vmatpush1.bf16.msra.mxu0 %v2837
    %3608 = vmatprep.subr.bf16.mxu0 %v2848
    %3609 = vmatpush1.bf16.msra.mxu0 %v2847
    %3610 = vmatprep.subr.bf16.mxu0 %v2858
    %3611 = vmatpush1.bf16.msra.mxu0 %v2857
    %3612 = vmatprep.subr.bf16.mxu0 %v2868
    %3613 = vmatpush1.bf16.msra.mxu0 %v2867
    %3614 = vmatprep.subr.bf16.mxu0 %v2878
    %3615 = vmatpush1.bf16.msra.mxu0 %v2877
    %3616 = vmatprep.subr.bf16.mxu0 %v2888
    %3617 = vmatpush1.bf16.msra.mxu0 %v2887
    %3618 = vmatprep.subr.bf16.mxu0 %v2898
    %3619 = vmatpush1.bf16.msra.mxu0 %v2897
    %3620 = vmatprep.subr.bf16.mxu0 %v2908
    %3621 = vmatpush1.bf16.msra.mxu0 %v2907
    %3622 = vmatprep.subr.bf16.mxu0 0
    %3623 = vmatpush1.bf16.msra.mxu0 0
    %3624 = vmatprep.subr.bf16.mxu0 0
    %3625 = vmatpush1.bf16.msra.mxu0 0
    %3626 = vmatprep.subr.bf16.mxu0 0
    %3627 = vmatpush1.bf16.msra.mxu0 0
    %3628 = vmatprep.subr.bf16.mxu0 0
    %3629 = vmatpush1.bf16.msra.mxu0 0
    %3630 = vmatprep.subr.bf16.mxu0 0
    %3631 = vmatpush1.bf16.msra.mxu0 0
    %3632 = vmatprep.subr.bf16.mxu0 0
    %3633 = vmatpush1.bf16.msra.mxu0 0
    %3634 = vmatprep.subr.bf16.mxu0 0
    %3635 = vmatpush1.bf16.msra.mxu0 0
    %3636 = vmatprep.subr.bf16.mxu0 0
    %3637 = vmatpush1.bf16.msra.mxu0 0
    %3638 = vmatprep.mubr.bf16.mxu0 0
    %3639 = vmatmul.mubr.bf16.gmra.mrb[0].mxu0 %v669
    %v3640 = vpop.f32.mrb[0].mxu0
    %v3641 = vadd.f32 %v3598, %v3640
    %v3642 = vpop.f32.mrb[0].mxu0
    %v3643 = vadd.f32 %v3600, %v3642
    %v3644 = vpop.f32.mrb[0].mxu0
    %v3645 = vadd.f32 %v3602, %v3644
    %v3646 = vpop.f32.mrb[0].mxu0
    %v3647 = vadd.f32 %v3604, %v3646
    %3648 = vdwg.mxu0
    %3649 = vmatprep.subr.bf16.mxu0 %v2360
    %3650 = vmatpush1.bf16.msra.mxu0 %v2359
    %3651 = vmatprep.subr.bf16.mxu0 %v2370
    %3652 = vmatpush1.bf16.msra.mxu0 %v2369
    %3653 = vmatprep.subr.bf16.mxu0 %v2380
    %3654 = vmatpush1.bf16.msra.mxu0 %v2379
    %3655 = vmatprep.subr.bf16.mxu0 %v2390
    %3656 = vmatpush1.bf16.msra.mxu0 %v2389
    %3657 = vmatprep.subr.bf16.mxu0 %v2400
    %3658 = vmatpush1.bf16.msra.mxu0 %v2399
    %3659 = vmatprep.subr.bf16.mxu0 %v2410
    %3660 = vmatpush1.bf16.msra.mxu0 %v2409
    %3661 = vmatprep.subr.bf16.mxu0 %v2420
    %3662 = vmatpush1.bf16.msra.mxu0 %v2419
    %3663 = vmatprep.subr.bf16.mxu0 %v2430
    %3664 = vmatpush1.bf16.msra.mxu0 %v2429
    %3665 = vmatprep.subr.bf16.mxu0 %v2440
    %3666 = vmatpush1.bf16.msra.mxu0 %v2439
    %3667 = vmatprep.subr.bf16.mxu0 %v2450
    %3668 = vmatpush1.bf16.msra.mxu0 %v2449
    %3669 = vmatprep.subr.bf16.mxu0 %v2460
    %3670 = vmatpush1.bf16.msra.mxu0 %v2459
    %3671 = vmatprep.subr.bf16.mxu0 %v2470
    %3672 = vmatpush1.bf16.msra.mxu0 %v2469
    %3673 = vmatprep.subr.bf16.mxu0 %v2480
    %3674 = vmatpush1.bf16.msra.mxu0 %v2479
    %3675 = vmatprep.subr.bf16.mxu0 %v2490
    %3676 = vmatpush1.bf16.msra.mxu0 %v2489
    %3677 = vmatprep.subr.bf16.mxu0 %v2500
    %3678 = vmatpush1.bf16.msra.mxu0 %v2499
    %3679 = vmatprep.subr.bf16.mxu0 %v2510
    %3680 = vmatpush1.bf16.msra.mxu0 %v2509
    %3681 = vmatprep.mubr.bf16.mxu0 %v664
    %3682 = vmatmul.mubr.bf16.gmra.mrb[0].mxu0 %v663
    %v3683 = vpop.f32.mrb[0].mxu0
    %v3684 = vadd.f32 0.0, %v3683
    %v3685 = vpop.f32.mrb[0].mxu0
    %v3686 = vadd.f32 0.0, %v3685
    %v3687 = vpop.f32.mrb[0].mxu0
    %v3688 = vadd.f32 0.0, %v3687
    %v3689 = vpop.f32.mrb[0].mxu0
    %v3690 = vadd.f32 0.0, %v3689
    %3691 = vdwg.mxu0
    %3692 = vmatprep.subr.bf16.mxu0 %v2520
    %3693 = vmatpush1.bf16.msra.mxu0 %v2519
    %3694 = vmatprep.subr.bf16.mxu0 %v2530
    %3695 = vmatpush1.bf16.msra.mxu0 %v2529
    %3696 = vmatprep.subr.bf16.mxu0 %v2540
    %3697 = vmatpush1.bf16.msra.mxu0 %v2539
    %3698 = vmatprep.subr.bf16.mxu0 %v2550
    %3699 = vmatpush1.bf16.msra.mxu0 %v2549
    %3700 = vmatprep.subr.bf16.mxu0 %v2560
    %3701 = vmatpush1.bf16.msra.mxu0 %v2559
    %3702 = vmatprep.subr.bf16.mxu0 %v2570
    %3703 = vmatpush1.bf16.msra.mxu0 %v2569
    %3704 = vmatprep.subr.bf16.mxu0 %v2580
    %3705 = vmatpush1.bf16.msra.mxu0 %v2579
    %3706 = vmatprep.subr.bf16.mxu0 %v2590
    %3707 = vmatpush1.bf16.msra.mxu0 %v2589
    %3708 = vmatprep.subr.bf16.mxu0 %v2600
    %3709 = vmatpush1.bf16.msra.mxu0 %v2599
    %3710 = vmatprep.subr.bf16.mxu0 %v2610
    %3711 = vmatpush1.bf16.msra.mxu0 %v2609
    %3712 = vmatprep.subr.bf16.mxu0 %v2620
    %3713 = vmatpush1.bf16.msra.mxu0 %v2619
    %3714 = vmatprep.subr.bf16.mxu0 %v2630
    %3715 = vmatpush1.bf16.msra.mxu0 %v2629
    %3716 = vmatprep.subr.bf16.mxu0 %v2640
    %3717 = vmatpush1.bf16.msra.mxu0 %v2639
    %3718 = vmatprep.subr.bf16.mxu0 %v2650
    %3719 = vmatpush1.bf16.msra.mxu0 %v2649
    %3720 = vmatprep.subr.bf16.mxu0 %v2660
    %3721 = vmatpush1.bf16.msra.mxu0 %v2659
    %3722 = vmatprep.subr.bf16.mxu0 %v2670
    %3723 = vmatpush1.bf16.msra.mxu0 %v2669
    %3724 = vmatprep.mubr.bf16.mxu0 %v666
    %3725 = vmatmul.mubr.bf16.gmra.mrb[0].mxu0 %v665
    %v3726 = vpop.f32.mrb[0].mxu0
    %v3727 = vadd.f32 %v3684, %v3726
    %v3728 = vpop.f32.mrb[0].mxu0
    %v3729 = vadd.f32 %v3686, %v3728
    %v3730 = vpop.f32.mrb[0].mxu0
    %v3731 = vadd.f32 %v3688, %v3730
    %v3732 = vpop.f32.mrb[0].mxu0
    %v3733 = vadd.f32 %v3690, %v3732
    %3734 = vdwg.mxu0
    %3735 = vmatprep.subr.bf16.mxu0 %v2680
    %3736 = vmatpush1.bf16.msra.mxu0 %v2679
    %3737 = vmatprep.subr.bf16.mxu0 %v2690
    %3738 = vmatpush1.bf16.msra.mxu0 %v2689
    %3739 = vmatprep.subr.bf16.mxu0 %v2700
    %3740 = vmatpush1.bf16.msra.mxu0 %v2699
    %3741 = vmatprep.subr.bf16.mxu0 %v2710
    %3742 = vmatpush1.bf16.msra.mxu0 %v2709
    %3743 = vmatprep.subr.bf16.mxu0 %v2720
    %3744 = vmatpush1.bf16.msra.mxu0 %v2719
    %3745 = vmatprep.subr.bf16.mxu0 %v2730
    %3746 = vmatpush1.bf16.msra.mxu0 %v2729
    %3747 = vmatprep.subr.bf16.mxu0 %v2740
    %3748 = vmatpush1.bf16.msra.mxu0 %v2739
    %3749 = vmatprep.subr.bf16.mxu0 %v2750
    %3750 = vmatpush1.bf16.msra.mxu0 %v2749
    %3751 = vmatprep.subr.bf16.mxu0 %v2760
    %3752 = vmatpush1.bf16.msra.mxu0 %v2759
    %3753 = vmatprep.subr.bf16.mxu0 %v2770
    %3754 = vmatpush1.bf16.msra.mxu0 %v2769
    %3755 = vmatprep.subr.bf16.mxu0 %v2780
    %3756 = vmatpush1.bf16.msra.mxu0 %v2779
    %3757 = vmatprep.subr.bf16.mxu0 %v2790
    %3758 = vmatpush1.bf16.msra.mxu0 %v2789
    %3759 = vmatprep.subr.bf16.mxu0 %v2800
    %3760 = vmatpush1.bf16.msra.mxu0 %v2799
    %3761 = vmatprep.subr.bf16.mxu0 %v2810
    %3762 = vmatpush1.bf16.msra.mxu0 %v2809
    %3763 = vmatprep.subr.bf16.mxu0 %v2820
    %3764 = vmatpush1.bf16.msra.mxu0 %v2819
    %3765 = vmatprep.subr.bf16.mxu0 %v2830
    %3766 = vmatpush1.bf16.msra.mxu0 %v2829
    %3767 = vmatprep.mubr.bf16.mxu0 %v668
    %3768 = vmatmul.mubr.bf16.gmra.mrb[0].mxu0 %v667
    %v3769 = vpop.f32.mrb[0].mxu0
    %v3770 = vadd.f32 %v3727, %v3769
    %v3771 = vpop.f32.mrb[0].mxu0
    %v3772 = vadd.f32 %v3729, %v3771
    %v3773 = vpop.f32.mrb[0].mxu0
    %v3774 = vadd.f32 %v3731, %v3773
    %v3775 = vpop.f32.mrb[0].mxu0
    %v3776 = vadd.f32 %v3733, %v3775
    %3777 = vdwg.mxu0
    %3778 = vmatprep.subr.bf16.mxu0 %v2840
    %3779 = vmatpush1.bf16.msra.mxu0 %v2839
    %3780 = vmatprep.subr.bf16.mxu0 %v2850
    %3781 = vmatpush1.bf16.msra.mxu0 %v2849
    %3782 = vmatprep.subr.bf16.mxu0 %v2860
    %3783 = vmatpush1.bf16.msra.mxu0 %v2859
    %3784 = vmatprep.subr.bf16.mxu0 %v2870
    %3785 = vmatpush1.bf16.msra.mxu0 %v2869
    %3786 = vmatprep.subr.bf16.mxu0 %v2880
    %3787 = vmatpush1.bf16.msra.mxu0 %v2879
    %3788 = vmatprep.subr.bf16.mxu0 %v2890
    %3789 = vmatpush1.bf16.msra.mxu0 %v2889
    %3790 = vmatprep.subr.bf16.mxu0 %v2900
    %3791 = vmatpush1.bf16.msra.mxu0 %v2899
    %3792 = vmatprep.subr.bf16.mxu0 %v2910
    %3793 = vmatpush1.bf16.msra.mxu0 %v2909
    %3794 = vmatprep.subr.bf16.mxu0 0
    %3795 = vmatpush1.bf16.msra.mxu0 0
    %3796 = vmatprep.subr.bf16.mxu0 0
    %3797 = vmatpush1.bf16.msra.mxu0 0
    %3798 = vmatprep.subr.bf16.mxu0 0
    %3799 = vmatpush1.bf16.msra.mxu0 0
    %3800 = vmatprep.subr.bf16.mxu0 0
    %3801 = vmatpush1.bf16.msra.mxu0 0
    %3802 = vmatprep.subr.bf16.mxu0 0
    %3803 = vmatpush1.bf16.msra.mxu0 0
    %3804 = vmatprep.subr.bf16.mxu0 0
    %3805 = vmatpush1.bf16.msra.mxu0 0
    %3806 = vmatprep.subr.bf16.mxu0 0
    %3807 = vmatpush1.bf16.msra.mxu0 0
    %3808 = vmatprep.subr.bf16.mxu0 0
    %3809 = vmatpush1.bf16.msra.mxu0 0
    %3810 = vmatprep.mubr.bf16.mxu0 0
    %3811 = vmatmul.mubr.bf16.gmra.mrb[0].mxu0 %v669
    %v3812 = vpop.f32.mrb[0].mxu0
    %v3813 = vadd.f32 %v3770, %v3812
    %v3814 = vpop.f32.mrb[0].mxu0
    %v3815 = vadd.f32 %v3772, %v3814
    %v3816 = vpop.f32.mrb[0].mxu0
    %v3817 = vadd.f32 %v3774, %v3816
    %v3818 = vpop.f32.mrb[0].mxu0
    %v3819 = vadd.f32 %v3776, %v3818
    %3820 = vdwg.mxu0
    %3821 = vmatprep.subr.bf16.mxu0 %v2362
    %3822 = vmatpush1.bf16.msra.mxu0 %v2361
    %3823 = vmatprep.subr.bf16.mxu0 %v2372
    %3824 = vmatpush1.bf16.msra.mxu0 %v2371
    %3825 = vmatprep.subr.bf16.mxu0 %v2382
    %3826 = vmatpush1.bf16.msra.mxu0 %v2381
    %3827 = vmatprep.subr.bf16.mxu0 %v2392
    %3828 = vmatpush1.bf16.msra.mxu0 %v2391
    %3829 = vmatprep.subr.bf16.mxu0 %v2402
    %3830 = vmatpush1.bf16.msra.mxu0 %v2401
    %3831 = vmatprep.subr.bf16.mxu0 %v2412
    %3832 = vmatpush1.bf16.msra.mxu0 %v2411
    %3833 = vmatprep.subr.bf16.mxu0 %v2422
    %3834 = vmatpush1.bf16.msra.mxu0 %v2421
    %3835 = vmatprep.subr.bf16.mxu0 %v2432
    %3836 = vmatpush1.bf16.msra.mxu0 %v2431
    %3837 = vmatprep.subr.bf16.mxu0 %v2442
    %3838 = vmatpush1.bf16.msra.mxu0 %v2441
    %3839 = vmatprep.subr.bf16.mxu0 %v2452
    %3840 = vmatpush1.bf16.msra.mxu0 %v2451
    %3841 = vmatprep.subr.bf16.mxu0 %v2462
    %3842 = vmatpush1.bf16.msra.mxu0 %v2461
    %3843 = vmatprep.subr.bf16.mxu0 %v2472
    %3844 = vmatpush1.bf16.msra.mxu0 %v2471
    %3845 = vmatprep.subr.bf16.mxu0 %v2482
    %3846 = vmatpush1.bf16.msra.mxu0 %v2481
    %3847 = vmatprep.subr.bf16.mxu0 %v2492
    %3848 = vmatpush1.bf16.msra.mxu0 %v2491
    %3849 = vmatprep.subr.bf16.mxu0 %v2502
    %3850 = vmatpush1.bf16.msra.mxu0 %v2501
    %3851 = vmatprep.subr.bf16.mxu0 %v2512
    %3852 = vmatpush1.bf16.msra.mxu0 %v2511
    %3853 = vmatprep.mubr.bf16.mxu0 %v664
    %3854 = vmatmul.mubr.bf16.gmra.mrb[0].mxu0 %v663
    %v3855 = vpop.f32.mrb[0].mxu0
    %v3856 = vadd.f32 0.0, %v3855
    %v3857 = vpop.f32.mrb[0].mxu0
    %v3858 = vadd.f32 0.0, %v3857
    %v3859 = vpop.f32.mrb[0].mxu0
    %v3860 = vadd.f32 0.0, %v3859
    %v3861 = vpop.f32.mrb[0].mxu0
    %v3862 = vadd.f32 0.0, %v3861
    %3863 = vdwg.mxu0
    %3864 = vmatprep.subr.bf16.mxu0 %v2522
    %3865 = vmatpush1.bf16.msra.mxu0 %v2521
    %3866 = vmatprep.subr.bf16.mxu0 %v2532
    %3867 = vmatpush1.bf16.msra.mxu0 %v2531
    %3868 = vmatprep.subr.bf16.mxu0 %v2542
    %3869 = vmatpush1.bf16.msra.mxu0 %v2541
    %3870 = vmatprep.subr.bf16.mxu0 %v2552
    %3871 = vmatpush1.bf16.msra.mxu0 %v2551
    %3872 = vmatprep.subr.bf16.mxu0 %v2562
    %3873 = vmatpush1.bf16.msra.mxu0 %v2561
    %3874 = vmatprep.subr.bf16.mxu0 %v2572
    %3875 = vmatpush1.bf16.msra.mxu0 %v2571
    %3876 = vmatprep.subr.bf16.mxu0 %v2582
    %3877 = vmatpush1.bf16.msra.mxu0 %v2581
    %3878 = vmatprep.subr.bf16.mxu0 %v2592
    %3879 = vmatpush1.bf16.msra.mxu0 %v2591
    %3880 = vmatprep.subr.bf16.mxu0 %v2602
    %3881 = vmatpush1.bf16.msra.mxu0 %v2601
    %3882 = vmatprep.subr.bf16.mxu0 %v2612
    %3883 = vmatpush1.bf16.msra.mxu0 %v2611
    %3884 = vmatprep.subr.bf16.mxu0 %v2622
    %3885 = vmatpush1.bf16.msra.mxu0 %v2621
    %3886 = vmatprep.subr.bf16.mxu0 %v2632
    %3887 = vmatpush1.bf16.msra.mxu0 %v2631
    %3888 = vmatprep.subr.bf16.mxu0 %v2642
    %3889 = vmatpush1.bf16.msra.mxu0 %v2641
    %3890 = vmatprep.subr.bf16.mxu0 %v2652
    %3891 = vmatpush1.bf16.msra.mxu0 %v2651
    %3892 = vmatprep.subr.bf16.mxu0 %v2662
    %3893 = vmatpush1.bf16.msra.mxu0 %v2661
    %3894 = vmatprep.subr.bf16.mxu0 %v2672
    %3895 = vmatpush1.bf16.msra.mxu0 %v2671
    %3896 = vmatprep.mubr.bf16.mxu0 %v666
    %3897 = vmatmul.mubr.bf16.gmra.mrb[0].mxu0 %v665
    %v3898 = vpop.f32.mrb[0].mxu0
    %v3899 = vadd.f32 %v3856, %v3898
    %v3900 = vpop.f32.mrb[0].mxu0
    %v3901 = vadd.f32 %v3858, %v3900
    %v3902 = vpop.f32.mrb[0].mxu0
    %v3903 = vadd.f32 %v3860, %v3902
    %v3904 = vpop.f32.mrb[0].mxu0
    %v3905 = vadd.f32 %v3862, %v3904
    %3906 = vdwg.mxu0
    %3907 = vmatprep.subr.bf16.mxu0 %v2682
    %3908 = vmatpush1.bf16.msra.mxu0 %v2681
    %3909 = vmatprep.subr.bf16.mxu0 %v2692
    %3910 = vmatpush1.bf16.msra.mxu0 %v2691
    %3911 = vmatprep.subr.bf16.mxu0 %v2702
    %3912 = vmatpush1.bf16.msra.mxu0 %v2701
    %3913 = vmatprep.subr.bf16.mxu0 %v2712
    %3914 = vmatpush1.bf16.msra.mxu0 %v2711
    %3915 = vmatprep.subr.bf16.mxu0 %v2722
    %3916 = vmatpush1.bf16.msra.mxu0 %v2721
    %3917 = vmatprep.subr.bf16.mxu0 %v2732
    %3918 = vmatpush1.bf16.msra.mxu0 %v2731
    %3919 = vmatprep.subr.bf16.mxu0 %v2742
    %3920 = vmatpush1.bf16.msra.mxu0 %v2741
    %3921 = vmatprep.subr.bf16.mxu0 %v2752
    %3922 = vmatpush1.bf16.msra.mxu0 %v2751
    %3923 = vmatprep.subr.bf16.mxu0 %v2762
    %3924 = vmatpush1.bf16.msra.mxu0 %v2761
    %3925 = vmatprep.subr.bf16.mxu0 %v2772
    %3926 = vmatpush1.bf16.msra.mxu0 %v2771
    %3927 = vmatprep.subr.bf16.mxu0 %v2782
    %3928 = vmatpush1.bf16.msra.mxu0 %v2781
    %3929 = vmatprep.subr.bf16.mxu0 %v2792
    %3930 = vmatpush1.bf16.msra.mxu0 %v2791
    %3931 = vmatprep.subr.bf16.mxu0 %v2802
    %3932 = vmatpush1.bf16.msra.mxu0 %v2801
    %3933 = vmatprep.subr.bf16.mxu0 %v2812
    %3934 = vmatpush1.bf16.msra.mxu0 %v2811
    %3935 = vmatprep.subr.bf16.mxu0 %v2822
    %3936 = vmatpush1.bf16.msra.mxu0 %v2821
    %3937 = vmatprep.subr.bf16.mxu0 %v2832
    %3938 = vmatpush1.bf16.msra.mxu0 %v2831
    %3939 = vmatprep.mubr.bf16.mxu0 %v668
    %3940 = vmatmul.mubr.bf16.gmra.mrb[0].mxu0 %v667
    %v3941 = vpop.f32.mrb[0].mxu0
    %v3942 = vadd.f32 %v3899, %v3941
    %v3943 = vpop.f32.mrb[0].mxu0
    %v3944 = vadd.f32 %v3901, %v3943
    %v3945 = vpop.f32.mrb[0].mxu0
    %v3946 = vadd.f32 %v3903, %v3945
    %v3947 = vpop.f32.mrb[0].mxu0
    %v3948 = vadd.f32 %v3905, %v3947
    %3949 = vdwg.mxu0
    %3950 = vmatprep.subr.bf16.mxu0 %v2842
    %3951 = vmatpush1.bf16.msra.mxu0 %v2841
    %3952 = vmatprep.subr.bf16.mxu0 %v2852
    %3953 = vmatpush1.bf16.msra.mxu0 %v2851
    %3954 = vmatprep.subr.bf16.mxu0 %v2862
    %3955 = vmatpush1.bf16.msra.mxu0 %v2861
    %3956 = vmatprep.subr.bf16.mxu0 %v2872
    %3957 = vmatpush1.bf16.msra.mxu0 %v2871
    %3958 = vmatprep.subr.bf16.mxu0 %v2882
    %3959 = vmatpush1.bf16.msra.mxu0 %v2881
    %3960 = vmatprep.subr.bf16.mxu0 %v2892
    %3961 = vmatpush1.bf16.msra.mxu0 %v2891
    %3962 = vmatprep.subr.bf16.mxu0 %v2902
    %3963 = vmatpush1.bf16.msra.mxu0 %v2901
    %3964 = vmatprep.subr.bf16.mxu0 %v2912
    %3965 = vmatpush1.bf16.msra.mxu0 %v2911
    %3966 = vmatprep.subr.bf16.mxu0 0
    %3967 = vmatpush1.bf16.msra.mxu0 0
    %3968 = vmatprep.subr.bf16.mxu0 0
    %3969 = vmatpush1.bf16.msra.mxu0 0
    %3970 = vmatprep.subr.bf16.mxu0 0
    %3971 = vmatpush1.bf16.msra.mxu0 0
    %3972 = vmatprep.subr.bf16.mxu0 0
    %3973 = vmatpush1.bf16.msra.mxu0 0
    %3974 = vmatprep.subr.bf16.mxu0 0
    %3975 = vmatpush1.bf16.msra.mxu0 0
    %3976 = vmatprep.subr.bf16.mxu0 0
    %3977 = vmatpush1.bf16.msra.mxu0 0
    %3978 = vmatprep.subr.bf16.mxu0 0
    %3979 = vmatpush1.bf16.msra.mxu0 0
    %3980 = vmatprep.subr.bf16.mxu0 0
    %3981 = vmatpush1.bf16.msra.mxu0 0
    %3982 = vmatprep.mubr.bf16.mxu0 0
    %3983 = vmatmul.mubr.bf16.gmra.mrb[0].mxu0 %v669
    %v3984 = vpop.f32.mrb[0].mxu0
    %v3985 = vadd.f32 %v3942, %v3984
    %v3986 = vpop.f32.mrb[0].mxu0
    %v3987 = vadd.f32 %v3944, %v3986
    %v3988 = vpop.f32.mrb[0].mxu0
    %v3989 = vadd.f32 %v3946, %v3988
    %v3990 = vpop.f32.mrb[0].mxu0
    %v3991 = vadd.f32 %v3948, %v3990
    %3992 = vdwg.mxu0
    %3993 = vmatprep.subr.bf16.mxu0 %v2364
    %3994 = vmatpush1.bf16.msra.mxu0 %v2363
    %3995 = vmatprep.subr.bf16.mxu0 %v2374
    %3996 = vmatpush1.bf16.msra.mxu0 %v2373
    %3997 = vmatprep.subr.bf16.mxu0 %v2384
    %3998 = vmatpush1.bf16.msra.mxu0 %v2383
    %3999 = vmatprep.subr.bf16.mxu0 %v2394
    %4000 = vmatpush1.bf16.msra.mxu0 %v2393
    %4001 = vmatprep.subr.bf16.mxu0 %v2404
    %4002 = vmatpush1.bf16.msra.mxu0 %v2403
    %4003 = vmatprep.subr.bf16.mxu0 %v2414
    %4004 = vmatpush1.bf16.msra.mxu0 %v2413
    %4005 = vmatprep.subr.bf16.mxu0 %v2424
    %4006 = vmatpush1.bf16.msra.mxu0 %v2423
    %4007 = vmatprep.subr.bf16.mxu0 %v2434
    %4008 = vmatpush1.bf16.msra.mxu0 %v2433
    %4009 = vmatprep.subr.bf16.mxu0 %v2444
    %4010 = vmatpush1.bf16.msra.mxu0 %v2443
    %4011 = vmatprep.subr.bf16.mxu0 %v2454
    %4012 = vmatpush1.bf16.msra.mxu0 %v2453
    %4013 = vmatprep.subr.bf16.mxu0 %v2464
    %4014 = vmatpush1.bf16.msra.mxu0 %v2463
    %4015 = vmatprep.subr.bf16.mxu0 %v2474
    %4016 = vmatpush1.bf16.msra.mxu0 %v2473
    %4017 = vmatprep.subr.bf16.mxu0 %v2484
    %4018 = vmatpush1.bf16.msra.mxu0 %v2483
    %4019 = vmatprep.subr.bf16.mxu0 %v2494
    %4020 = vmatpush1.bf16.msra.mxu0 %v2493
    %4021 = vmatprep.subr.bf16.mxu0 %v2504
    %4022 = vmatpush1.bf16.msra.mxu0 %v2503
    %4023 = vmatprep.subr.bf16.mxu0 %v2514
    %4024 = vmatpush1.bf16.msra.mxu0 %v2513
    %4025 = vmatprep.mubr.bf16.mxu0 %v664
    %4026 = vmatmul.mubr.bf16.gmra.mrb[0].mxu0 %v663
    %v4027 = vpop.f32.mrb[0].mxu0
    %v4028 = vadd.f32 0.0, %v4027
    %v4029 = vpop.f32.mrb[0].mxu0
    %v4030 = vadd.f32 0.0, %v4029
    %v4031 = vpop.f32.mrb[0].mxu0
    %v4032 = vadd.f32 0.0, %v4031
    %v4033 = vpop.f32.mrb[0].mxu0
    %v4034 = vadd.f32 0.0, %v4033
    %4035 = vdwg.mxu0
    %4036 = vmatprep.subr.bf16.mxu0 %v2524
    %4037 = vmatpush1.bf16.msra.mxu0 %v2523
    %4038 = vmatprep.subr.bf16.mxu0 %v2534
    %4039 = vmatpush1.bf16.msra.mxu0 %v2533
    %4040 = vmatprep.subr.bf16.mxu0 %v2544
    %4041 = vmatpush1.bf16.msra.mxu0 %v2543
    %4042 = vmatprep.subr.bf16.mxu0 %v2554
    %4043 = vmatpush1.bf16.msra.mxu0 %v2553
    %4044 = vmatprep.subr.bf16.mxu0 %v2564
    %4045 = vmatpush1.bf16.msra.mxu0 %v2563
    %4046 = vmatprep.subr.bf16.mxu0 %v2574
    %4047 = vmatpush1.bf16.msra.mxu0 %v2573
    %4048 = vmatprep.subr.bf16.mxu0 %v2584
    %4049 = vmatpush1.bf16.msra.mxu0 %v2583
    %4050 = vmatprep.subr.bf16.mxu0 %v2594
    %4051 = vmatpush1.bf16.msra.mxu0 %v2593
    %4052 = vmatprep.subr.bf16.mxu0 %v2604
    %4053 = vmatpush1.bf16.msra.mxu0 %v2603
    %4054 = vmatprep.subr.bf16.mxu0 %v2614
    %4055 = vmatpush1.bf16.msra.mxu0 %v2613
    %4056 = vmatprep.subr.bf16.mxu0 %v2624
    %4057 = vmatpush1.bf16.msra.mxu0 %v2623
    %4058 = vmatprep.subr.bf16.mxu0 %v2634
    %4059 = vmatpush1.bf16.msra.mxu0 %v2633
    %4060 = vmatprep.subr.bf16.mxu0 %v2644
    %4061 = vmatpush1.bf16.msra.mxu0 %v2643
    %4062 = vmatprep.subr.bf16.mxu0 %v2654
    %4063 = vmatpush1.bf16.msra.mxu0 %v2653
    %4064 = vmatprep.subr.bf16.mxu0 %v2664
    %4065 = vmatpush1.bf16.msra.mxu0 %v2663
    %4066 = vmatprep.subr.bf16.mxu0 %v2674
    %4067 = vmatpush1.bf16.msra.mxu0 %v2673
    %4068 = vmatprep.mubr.bf16.mxu0 %v666
    %4069 = vmatmul.mubr.bf16.gmra.mrb[0].mxu0 %v665
    %v4070 = vpop.f32.mrb[0].mxu0
    %v4071 = vadd.f32 %v4028, %v4070
    %v4072 = vpop.f32.mrb[0].mxu0
    %v4073 = vadd.f32 %v4030, %v4072
    %v4074 = vpop.f32.mrb[0].mxu0
    %v4075 = vadd.f32 %v4032, %v4074
    %v4076 = vpop.f32.mrb[0].mxu0
    %v4077 = vadd.f32 %v4034, %v4076
    %4078 = vdwg.mxu0
    %4079 = vmatprep.subr.bf16.mxu0 %v2684
    %4080 = vmatpush1.bf16.msra.mxu0 %v2683
    %4081 = vmatprep.subr.bf16.mxu0 %v2694
    %4082 = vmatpush1.bf16.msra.mxu0 %v2693
    %4083 = vmatprep.subr.bf16.mxu0 %v2704
    %4084 = vmatpush1.bf16.msra.mxu0 %v2703
    %4085 = vmatprep.subr.bf16.mxu0 %v2714
    %4086 = vmatpush1.bf16.msra.mxu0 %v2713
    %4087 = vmatprep.subr.bf16.mxu0 %v2724
    %4088 = vmatpush1.bf16.msra.mxu0 %v2723
    %4089 = vmatprep.subr.bf16.mxu0 %v2734
    %4090 = vmatpush1.bf16.msra.mxu0 %v2733
    %4091 = vmatprep.subr.bf16.mxu0 %v2744
    %4092 = vmatpush1.bf16.msra.mxu0 %v2743
    %4093 = vmatprep.subr.bf16.mxu0 %v2754
    %4094 = vmatpush1.bf16.msra.mxu0 %v2753
    %4095 = vmatprep.subr.bf16.mxu0 %v2764
    %4096 = vmatpush1.bf16.msra.mxu0 %v2763
    %4097 = vmatprep.subr.bf16.mxu0 %v2774
    %4098 = vmatpush1.bf16.msra.mxu0 %v2773
    %4099 = vmatprep.subr.bf16.mxu0 %v2784
    %4100 = vmatpush1.bf16.msra.mxu0 %v2783
    %4101 = vmatprep.subr.bf16.mxu0 %v2794
    %4102 = vmatpush1.bf16.msra.mxu0 %v2793
    %4103 = vmatprep.subr.bf16.mxu0 %v2804
    %4104 = vmatpush1.bf16.msra.mxu0 %v2803
    %4105 = vmatprep.subr.bf16.mxu0 %v2814
    %4106 = vmatpush1.bf16.msra.mxu0 %v2813
    %4107 = vmatprep.subr.bf16.mxu0 %v2824
    %4108 = vmatpush1.bf16.msra.mxu0 %v2823
    %4109 = vmatprep.subr.bf16.mxu0 %v2834
    %4110 = vmatpush1.bf16.msra.mxu0 %v2833
    %4111 = vmatprep.mubr.bf16.mxu0 %v668
    %4112 = vmatmul.mubr.bf16.gmra.mrb[0].mxu0 %v667
    %v4113 = vpop.f32.mrb[0].mxu0
    %v4114 = vadd.f32 %v4071, %v4113
    %v4115 = vpop.f32.mrb[0].mxu0
    %v4116 = vadd.f32 %v4073, %v4115
    %v4117 = vpop.f32.mrb[0].mxu0
    %v4118 = vadd.f32 %v4075, %v4117
    %v4119 = vpop.f32.mrb[0].mxu0
    %v4120 = vadd.f32 %v4077, %v4119
    %4121 = vdwg.mxu0
    %4122 = vmatprep.subr.bf16.mxu0 %v2844
    %4123 = vmatpush1.bf16.msra.mxu0 %v2843
    %4124 = vmatprep.subr.bf16.mxu0 %v2854
    %4125 = vmatpush1.bf16.msra.mxu0 %v2853
    %4126 = vmatprep.subr.bf16.mxu0 %v2864
    %4127 = vmatpush1.bf16.msra.mxu0 %v2863
    %4128 = vmatprep.subr.bf16.mxu0 %v2874
    %4129 = vmatpush1.bf16.msra.mxu0 %v2873
    %4130 = vmatprep.subr.bf16.mxu0 %v2884
    %4131 = vmatpush1.bf16.msra.mxu0 %v2883
    %4132 = vmatprep.subr.bf16.mxu0 %v2894
    %4133 = vmatpush1.bf16.msra.mxu0 %v2893
    %4134 = vmatprep.subr.bf16.mxu0 %v2904
    %4135 = vmatpush1.bf16.msra.mxu0 %v2903
    %4136 = vmatprep.subr.bf16.mxu0 %v2914
    %4137 = vmatpush1.bf16.msra.mxu0 %v2913
    %4138 = vmatprep.subr.bf16.mxu0 0
    %4139 = vmatpush1.bf16.msra.mxu0 0
    %4140 = vmatprep.subr.bf16.mxu0 0
    %4141 = vmatpush1.bf16.msra.mxu0 0
    %4142 = vmatprep.subr.bf16.mxu0 0
    %4143 = vmatpush1.bf16.msra.mxu0 0
    %4144 = vmatprep.subr.bf16.mxu0 0
    %4145 = vmatpush1.bf16.msra.mxu0 0
    %4146 = vmatprep.subr.bf16.mxu0 0
    %4147 = vmatpush1.bf16.msra.mxu0 0
    %4148 = vmatprep.subr.bf16.mxu0 0
    %4149 = vmatpush1.bf16.msra.mxu0 0
    %4150 = vmatprep.subr.bf16.mxu0 0
    %4151 = vmatpush1.bf16.msra.mxu0 0
    %4152 = vmatprep.subr.bf16.mxu0 0
    %4153 = vmatpush1.bf16.msra.mxu0 0
    %4154 = vmatprep.mubr.bf16.mxu0 0
    %4155 = vmatmul.mubr.bf16.gmra.mrb[0].mxu0 %v669
    %v4156 = vpop.f32.mrb[0].mxu0
    %v4157 = vadd.f32 %v4114, %v4156
    %v4158 = vpop.f32.mrb[0].mxu0
    %v4159 = vadd.f32 %v4116, %v4158
    %v4160 = vpop.f32.mrb[0].mxu0
    %v4161 = vadd.f32 %v4118, %v4160
    %v4162 = vpop.f32.mrb[0].mxu0
    %v4163 = vadd.f32 %v4120, %v4162
    %4164 = vdwg.mxu0
    %4165 = vmatprep.subr.bf16.mxu0 %v2366
    %4166 = vmatpush1.bf16.msra.mxu0 %v2365
    %4167 = vmatprep.subr.bf16.mxu0 %v2376
    %4168 = vmatpush1.bf16.msra.mxu0 %v2375
    %4169 = vmatprep.subr.bf16.mxu0 %v2386
    %4170 = vmatpush1.bf16.msra.mxu0 %v2385
    %4171 = vmatprep.subr.bf16.mxu0 %v2396
    %4172 = vmatpush1.bf16.msra.mxu0 %v2395
    %4173 = vmatprep.subr.bf16.mxu0 %v2406
    %4174 = vmatpush1.bf16.msra.mxu0 %v2405
    %4175 = vmatprep.subr.bf16.mxu0 %v2416
    %4176 = vmatpush1.bf16.msra.mxu0 %v2415
    %4177 = vmatprep.subr.bf16.mxu0 %v2426
    %4178 = vmatpush1.bf16.msra.mxu0 %v2425
    %4179 = vmatprep.subr.bf16.mxu0 %v2436
    %4180 = vmatpush1.bf16.msra.mxu0 %v2435
    %4181 = vmatprep.subr.bf16.mxu0 %v2446
    %4182 = vmatpush1.bf16.msra.mxu0 %v2445
    %4183 = vmatprep.subr.bf16.mxu0 %v2456
    %4184 = vmatpush1.bf16.msra.mxu0 %v2455
    %4185 = vmatprep.subr.bf16.mxu0 %v2466
    %4186 = vmatpush1.bf16.msra.mxu0 %v2465
    %4187 = vmatprep.subr.bf16.mxu0 %v2476
    %4188 = vmatpush1.bf16.msra.mxu0 %v2475
    %4189 = vmatprep.subr.bf16.mxu0 %v2486
    %4190 = vmatpush1.bf16.msra.mxu0 %v2485
    %4191 = vmatprep.subr.bf16.mxu0 %v2496
    %4192 = vmatpush1.bf16.msra.mxu0 %v2495
    %4193 = vmatprep.subr.bf16.mxu0 %v2506
    %4194 = vmatpush1.bf16.msra.mxu0 %v2505
    %4195 = vmatprep.subr.bf16.mxu0 %v2516
    %4196 = vmatpush1.bf16.msra.mxu0 %v2515
    %4197 = vmatprep.mubr.bf16.mxu0 %v664
    %4198 = vmatmul.mubr.bf16.gmra.mrb[0].mxu0 %v663
    %v4199 = vpop.f32.mrb[0].mxu0
    %v4200 = vadd.f32 0.0, %v4199
    %v4201 = vpop.f32.mrb[0].mxu0
    %v4202 = vadd.f32 0.0, %v4201
    %v4203 = vpop.f32.mrb[0].mxu0
    %v4204 = vadd.f32 0.0, %v4203
    %v4205 = vpop.f32.mrb[0].mxu0
    %v4206 = vadd.f32 0.0, %v4205
    %4207 = vdwg.mxu0
    %4208 = vmatprep.subr.bf16.mxu0 %v2526
    %4209 = vmatpush1.bf16.msra.mxu0 %v2525
    %4210 = vmatprep.subr.bf16.mxu0 %v2536
    %4211 = vmatpush1.bf16.msra.mxu0 %v2535
    %4212 = vmatprep.subr.bf16.mxu0 %v2546
    %4213 = vmatpush1.bf16.msra.mxu0 %v2545
    %4214 = vmatprep.subr.bf16.mxu0 %v2556
    %4215 = vmatpush1.bf16.msra.mxu0 %v2555
    %4216 = vmatprep.subr.bf16.mxu0 %v2566
    %4217 = vmatpush1.bf16.msra.mxu0 %v2565
    %4218 = vmatprep.subr.bf16.mxu0 %v2576
    %4219 = vmatpush1.bf16.msra.mxu0 %v2575
    %4220 = vmatprep.subr.bf16.mxu0 %v2586
    %4221 = vmatpush1.bf16.msra.mxu0 %v2585
    %4222 = vmatprep.subr.bf16.mxu0 %v2596
    %4223 = vmatpush1.bf16.msra.mxu0 %v2595
    %4224 = vmatprep.subr.bf16.mxu0 %v2606
    %4225 = vmatpush1.bf16.msra.mxu0 %v2605
    %4226 = vmatprep.subr.bf16.mxu0 %v2616
    %4227 = vmatpush1.bf16.msra.mxu0 %v2615
    %4228 = vmatprep.subr.bf16.mxu0 %v2626
    %4229 = vmatpush1.bf16.msra.mxu0 %v2625
    %4230 = vmatprep.subr.bf16.mxu0 %v2636
    %4231 = vmatpush1.bf16.msra.mxu0 %v2635
    %4232 = vmatprep.subr.bf16.mxu0 %v2646
    %4233 = vmatpush1.bf16.msra.mxu0 %v2645
    %4234 = vmatprep.subr.bf16.mxu0 %v2656
    %4235 = vmatpush1.bf16.msra.mxu0 %v2655
    %4236 = vmatprep.subr.bf16.mxu0 %v2666
    %4237 = vmatpush1.bf16.msra.mxu0 %v2665
    %4238 = vmatprep.subr.bf16.mxu0 %v2676
    %4239 = vmatpush1.bf16.msra.mxu0 %v2675
    %4240 = vmatprep.mubr.bf16.mxu0 %v666
    %4241 = vmatmul.mubr.bf16.gmra.mrb[0].mxu0 %v665
    %v4242 = vpop.f32.mrb[0].mxu0
    %v4243 = vadd.f32 %v4200, %v4242
    %v4244 = vpop.f32.mrb[0].mxu0
    %v4245 = vadd.f32 %v4202, %v4244
    %v4246 = vpop.f32.mrb[0].mxu0
    %v4247 = vadd.f32 %v4204, %v4246
    %v4248 = vpop.f32.mrb[0].mxu0
    %v4249 = vadd.f32 %v4206, %v4248
    %4250 = vdwg.mxu0
    %4251 = vmatprep.subr.bf16.mxu0 %v2686
    %4252 = vmatpush1.bf16.msra.mxu0 %v2685
    %4253 = vmatprep.subr.bf16.mxu0 %v2696
    %4254 = vmatpush1.bf16.msra.mxu0 %v2695
    %4255 = vmatprep.subr.bf16.mxu0 %v2706
    %4256 = vmatpush1.bf16.msra.mxu0 %v2705
    %4257 = vmatprep.subr.bf16.mxu0 %v2716
    %4258 = vmatpush1.bf16.msra.mxu0 %v2715
    %4259 = vmatprep.subr.bf16.mxu0 %v2726
    %4260 = vmatpush1.bf16.msra.mxu0 %v2725
    %4261 = vmatprep.subr.bf16.mxu0 %v2736
    %4262 = vmatpush1.bf16.msra.mxu0 %v2735
    %4263 = vmatprep.subr.bf16.mxu0 %v2746
    %4264 = vmatpush1.bf16.msra.mxu0 %v2745
    %4265 = vmatprep.subr.bf16.mxu0 %v2756
    %4266 = vmatpush1.bf16.msra.mxu0 %v2755
    %4267 = vmatprep.subr.bf16.mxu0 %v2766
    %4268 = vmatpush1.bf16.msra.mxu0 %v2765
    %4269 = vmatprep.subr.bf16.mxu0 %v2776
    %4270 = vmatpush1.bf16.msra.mxu0 %v2775
    %4271 = vmatprep.subr.bf16.mxu0 %v2786
    %4272 = vmatpush1.bf16.msra.mxu0 %v2785
    %4273 = vmatprep.subr.bf16.mxu0 %v2796
    %4274 = vmatpush1.bf16.msra.mxu0 %v2795
    %4275 = vmatprep.subr.bf16.mxu0 %v2806
    %4276 = vmatpush1.bf16.msra.mxu0 %v2805
    %4277 = vmatprep.subr.bf16.mxu0 %v2816
    %4278 = vmatpush1.bf16.msra.mxu0 %v2815
    %4279 = vmatprep.subr.bf16.mxu0 %v2826
    %4280 = vmatpush1.bf16.msra.mxu0 %v2825
    %4281 = vmatprep.subr.bf16.mxu0 %v2836
    %4282 = vmatpush1.bf16.msra.mxu0 %v2835
    %4283 = vmatprep.mubr.bf16.mxu0 %v668
    %4284 = vmatmul.mubr.bf16.gmra.mrb[0].mxu0 %v667
    %v4285 = vpop.f32.mrb[0].mxu0
    %v4286 = vadd.f32 %v4243, %v4285
    %v4287 = vpop.f32.mrb[0].mxu0
    %v4288 = vadd.f32 %v4245, %v4287
    %v4289 = vpop.f32.mrb[0].mxu0
    %v4290 = vadd.f32 %v4247, %v4289
    %v4291 = vpop.f32.mrb[0].mxu0
    %v4292 = vadd.f32 %v4249, %v4291
    %4293 = vdwg.mxu0
    %4294 = vmatprep.subr.bf16.mxu0 %v2846
    %4295 = vmatpush1.bf16.msra.mxu0 %v2845
    %4296 = vmatprep.subr.bf16.mxu0 %v2856
    %4297 = vmatpush1.bf16.msra.mxu0 %v2855
    %4298 = vmatprep.subr.bf16.mxu0 %v2866
    %4299 = vmatpush1.bf16.msra.mxu0 %v2865
    %4300 = vmatprep.subr.bf16.mxu0 %v2876
    %4301 = vmatpush1.bf16.msra.mxu0 %v2875
    %4302 = vmatprep.subr.bf16.mxu0 %v2886
    %4303 = vmatpush1.bf16.msra.mxu0 %v2885
    %4304 = vmatprep.subr.bf16.mxu0 %v2896
    %4305 = vmatpush1.bf16.msra.mxu0 %v2895
    %4306 = vmatprep.subr.bf16.mxu0 %v2906
    %4307 = vmatpush1.bf16.msra.mxu0 %v2905
    %4308 = vmatprep.subr.bf16.mxu0 %v2916
    %4309 = vmatpush1.bf16.msra.mxu0 %v2915
    %4310 = vmatprep.subr.bf16.mxu0 0
    %4311 = vmatpush1.bf16.msra.mxu0 0
    %4312 = vmatprep.subr.bf16.mxu0 0
    %4313 = vmatpush1.bf16.msra.mxu0 0
    %4314 = vmatprep.subr.bf16.mxu0 0
    %4315 = vmatpush1.bf16.msra.mxu0 0
    %4316 = vmatprep.subr.bf16.mxu0 0
    %4317 = vmatpush1.bf16.msra.mxu0 0
    %4318 = vmatprep.subr.bf16.mxu0 0
    %4319 = vmatpush1.bf16.msra.mxu0 0
    %4320 = vmatprep.subr.bf16.mxu0 0
    %4321 = vmatpush1.bf16.msra.mxu0 0
    %4322 = vmatprep.subr.bf16.mxu0 0
    %4323 = vmatpush1.bf16.msra.mxu0 0
    %4324 = vmatprep.subr.bf16.mxu0 0
    %4325 = vmatpush1.bf16.msra.mxu0 0
    %4326 = vmatprep.mubr.bf16.mxu0 0
    %4327 = vmatmul.mubr.bf16.gmra.mrb[0].mxu0 %v669
    %v4328 = vpop.f32.mrb[0].mxu0
    %v4329 = vadd.f32 %v4286, %v4328
    %v4330 = vpop.f32.mrb[0].mxu0
    %v4331 = vadd.f32 %v4288, %v4330
    %v4332 = vpop.f32.mrb[0].mxu0
    %v4333 = vadd.f32 %v4290, %v4332
    %v4334 = vpop.f32.mrb[0].mxu0
    %v4335 = vadd.f32 %v4292, %v4334
    %4336 = vdwg.mxu0
    %v4337 = vmax.f32 %v3641, %v3643
    %v4338 = vmax.f32 %v3645, %v3647
    %v4339 = vmax.f32 %v4337, %v3813
    %v4340 = vmax.f32 %v4338, %v3817
    %v4341 = vmax.f32 %v4339, %v3815
    %v4342 = vmax.f32 %v4340, %v3819
    %v4343 = vmax.f32 %v4341, %v3985
    %v4344 = vmax.f32 %v4342, %v3989
    %v4345 = vmax.f32 %v4343, %v3987
    %v4346 = vmax.f32 %v4344, %v3991
    %v4347 = vmax.f32 %v4345, %v4157
    %v4348 = vmax.f32 %v4346, %v4161
    %v4349 = vmax.f32 %v4347, %v4159
    %v4350 = vmax.f32 %v4348, %v4163
    %v4351 = vmax.f32 %v4349, %v4329
    %v4352 = vmax.f32 %v4350, %v4333
    %v4353 = vmax.f32 %v4351, %v4331
    %v4354 = vmax.f32 %v4352, %v4335
    %v4355 = vld [vmem:[#allocation5] sm:$0x1]
    %v4357 = vlaneseq
    %v4358 = vshrl.u32 %v4357, 7
    %v4359 = vsub.s32 0, %v4358
    %v4360 = vrot.slane %v4355, %v4359
    %v4362 = vadd.f32 %v4353, %v4360
    %v4363 = vadd.f32 %v4354, %v4360
    %v4364 = vmax.f32 %v4362, 0.0
    %v4365 = vmax.f32 %v4363, 0.0
    %v4366 = vpack.c.bf16 %v4365, %v4364
    %v4367 = vld [vmem:[#allocation7] sm:$0xff]
    %v4368 = vld [vmem:[#allocation7 + $0x8] sm:$0xff]
    %v4369 = vld [vmem:[#allocation7 + $0x10] sm:$0xff]
    %v4370 = vld [vmem:[#allocation7 + $0x18] sm:$0xff]
    %v4371 = vld [vmem:[#allocation7 + $0x20] sm:$0xff]
    %v4372 = vld [vmem:[#allocation7 + $0x28] sm:$0xff]
    %v4373 = vld [vmem:[#allocation7 + $0x30] sm:$0xff]
    %v4374 = vld [vmem:[#allocation7 + $0x38] sm:$0xff]
    %v4375 = vld [vmem:[#allocation7 + $0x40] sm:$0xff]
    %v4376 = vld [vmem:[#allocation7 + $0x48] sm:$0xff]
    %v4377 = vld [vmem:[#allocation7 + $0x50] sm:$0xff]
    %v4378 = vld [vmem:[#allocation7 + $0x58] sm:$0xff]
    %v4379 = vld [vmem:[#allocation7 + $0x60] sm:$0xff]
    %v4380 = vld [vmem:[#allocation7 + $0x68] sm:$0xff]
    %v4381 = vld [vmem:[#allocation7 + $0x70] sm:$0xff]
    %v4382 = vld [vmem:[#allocation7 + $0x78] sm:$0xff]
    %v4383 = vld [vmem:[#allocation8] sm:$0x3]
    %v4385 = vlaneseq
    %v4386 = vshrl.u32 %v4385, 7
    %v4387 = vsub.s32 0, %v4386
    %v4388 = vrot.slane %v4383, %v4387
    %v4389 = vlaneseq
    %v4390 = vshrl.u32 %v4389, 7
    %v4391 = vsub.s32 1, %v4390
    %v4392 = vrot.slane %v4383, %v4391
    %v4411 = vunpack.c.l.b16 %v4367
    %v4412 = vunpack.c.h.b16 %v4367
    %v4413 = vunpack.c.l.b16 %v4368
    %v4414 = vunpack.c.h.b16 %v4368
    %v4415 = vunpack.c.l.b16 %v4369
    %v4416 = vunpack.c.h.b16 %v4369
    %v4417 = vunpack.c.l.b16 %v4370
    %v4418 = vunpack.c.h.b16 %v4370
    %v4419 = vunpack.c.l.b16 %v4371
    %v4420 = vunpack.c.h.b16 %v4371
    %v4421 = vunpack.c.l.b16 %v4372
    %v4422 = vunpack.c.h.b16 %v4372
    %v4423 = vunpack.c.l.b16 %v4373
    %v4424 = vunpack.c.h.b16 %v4373
    %v4425 = vunpack.c.l.b16 %v4374
    %v4426 = vunpack.c.h.b16 %v4374
    %v4427 = vunpack.c.l.b16 %v4375
    %v4428 = vunpack.c.h.b16 %v4375
    %v4429 = vunpack.c.l.b16 %v4376
    %v4430 = vunpack.c.h.b16 %v4376
    %v4431 = vunpack.c.l.b16 %v4377
    %v4432 = vunpack.c.h.b16 %v4377
    %v4433 = vunpack.c.l.b16 %v4378
    %v4434 = vunpack.c.h.b16 %v4378
    %v4435 = vunpack.c.l.b16 %v4379
    %v4436 = vunpack.c.h.b16 %v4379
    %v4437 = vunpack.c.l.b16 %v4380
    %v4438 = vunpack.c.h.b16 %v4380
    %v4439 = vunpack.c.l.b16 %v4381
    %v4440 = vunpack.c.h.b16 %v4381
    %v4441 = vunpack.c.l.b16 %v4382
    %v4442 = vunpack.c.h.b16 %v4382
    %v4443 = vpack.c.b16 %v4413, %v4411
    %v4444 = vpack.c.b16 %v4414, %v4412
    %v4445 = vpack.c.b16 %v4417, %v4415
    %v4446 = vpack.c.b16 %v4418, %v4416
    %v4447 = vpack.c.b16 %v4421, %v4419
    %v4448 = vpack.c.b16 %v4422, %v4420
    %v4449 = vpack.c.b16 %v4425, %v4423
    %v4450 = vpack.c.b16 %v4426, %v4424
    %v4451 = vpack.c.b16 %v4429, %v4427
    %v4452 = vpack.c.b16 %v4430, %v4428
    %v4453 = vpack.c.b16 %v4433, %v4431
    %v4454 = vpack.c.b16 %v4434, %v4432
    %v4455 = vpack.c.b16 %v4437, %v4435
    %v4456 = vpack.c.b16 %v4438, %v4436
    %v4457 = vpack.c.b16 %v4441, %v4439
    %v4458 = vpack.c.b16 %v4442, %v4440
    %4475 = vmatprep.subr.bf16.mxu0 %v4444
    %4476 = vmatpush1.bf16.msra.mxu0 %v4443
    %4477 = vmatprep.subr.bf16.mxu0 %v4446
    %4478 = vmatpush1.bf16.msra.mxu0 %v4445
    %4479 = vmatprep.subr.bf16.mxu0 %v4448
    %4480 = vmatpush1.bf16.msra.mxu0 %v4447
    %4481 = vmatprep.subr.bf16.mxu0 %v4450
    %4482 = vmatpush1.bf16.msra.mxu0 %v4449
    %4483 = vmatprep.subr.bf16.mxu0 %v4452
    %4484 = vmatpush1.bf16.msra.mxu0 %v4451
    %4485 = vmatprep.subr.bf16.mxu0 %v4454
    %4486 = vmatpush1.bf16.msra.mxu0 %v4453
    %4487 = vmatprep.subr.bf16.mxu0 %v4456
    %4488 = vmatpush1.bf16.msra.mxu0 %v4455
    %4489 = vmatprep.subr.bf16.mxu0 %v4458
    %4490 = vmatpush1.bf16.msra.mxu0 %v4457
    %4491 = vmatprep.subr.bf16.mxu0 0
    %4492 = vmatpush1.bf16.msra.mxu0 0
    %4493 = vmatprep.subr.bf16.mxu0 0
    %4494 = vmatpush1.bf16.msra.mxu0 0
    %4495 = vmatprep.subr.bf16.mxu0 0
    %4496 = vmatpush1.bf16.msra.mxu0 0
    %4497 = vmatprep.subr.bf16.mxu0 0
    %4498 = vmatpush1.bf16.msra.mxu0 0
    %4499 = vmatprep.subr.bf16.mxu0 0
    %4500 = vmatpush1.bf16.msra.mxu0 0
    %4501 = vmatprep.subr.bf16.mxu0 0
    %4502 = vmatpush1.bf16.msra.mxu0 0
    %4503 = vmatprep.subr.bf16.mxu0 0
    %4504 = vmatpush1.bf16.msra.mxu0 0
    %4505 = vmatprep.subr.bf16.mxu0 0
    %4506 = vmatpush1.bf16.msra.mxu0 0
    %4507 = vmatprep.mubr.bf16.mxu0 0
    %4508 = vmatmul.mubr.bf16.gmra.mrb[0].mxu0 %v4366
    %v4509 = vpop.f32.mrb[0].mxu0
    %v4510 = vadd.f32 %v4388, %v4509
    %v4511 = vpop.f32.mrb[0].mxu0
    %v4512 = vadd.f32 %v4392, %v4511
    %v4513 = vpop.f32.mrb[0].mxu0
    %v4514 = vadd.f32 %v4388, %v4513
    %v4515 = vpop.f32.mrb[0].mxu0
    %v4516 = vadd.f32 %v4392, %v4515
    %4517 = vdwg.mxu0
    %v4518 = vmax.f32 %v4510, 0.0
    %v4519 = vmax.f32 %v4514, 0.0
    %v4520 = vxor.u32 %v4512, 2147483648
    %v4521 = vxor.u32 %v4516, 2147483648
    %v4522 = vmul.f32 %v4520, 1.442695
    %v4523 = vpow.pop %v4522
    %v4524 = vmul.f32 %v4521, 1.442695
    %v4525 = vpow.pop %v4524
    %v4526 = vadd.f32 %v4523, 1.0
    %v4527 = vadd.f32 %v4525, 1.0
    %v4528 = vrcp.pop %v4526
    %v4529 = vmul.f32 1.0, %v4528
    %v4530 = vrcp.pop %v4527
    %v4531 = vmul.f32 1.0, %v4530
    %v4532 = vsub.f32 %v4518, %v4364
    %v4533 = vsub.f32 %v4519, %v4365
    %v4534 = vmul.f32 %v4529, %v4532
    %v4535 = vmul.f32 %v4531, %v4533
    %v4536 = vadd.f32 %v4364, %v4534
    %v4537 = vadd.f32 %v4365, %v4535
    %4538 = vst [vmem:[#allocation10] sm:$0xff] %v4536
    %4539 = vst [vmem:[#allocation10 + $0x8] sm:$0xff] %v4537
    // Predicated region
    $region38: #{model_embeddings_forward.1} parent=1 // pred_check
      _
    $region39: #{model_embeddings_forward.1} parent=1 // pred_check_branch
      %4541 = sbr.rel (0) target = $region41
    $region40: #{model_embeddings_forward.1} parent=1 // pred_region
      %s4543 = ssub.s32 256, 256
      %4544 = vsyncadd [#allocation4], %s4543
      %s4545 = sshll.u32 [#allocation10], 4
      %s4546 = int_to_ptr.vmem [resolvable:$true] %s4545
      %4551 = dma.vmem_to_hbm [thread:$0]  %s4546, 256, %s5, [#allocation4], 128, 128, 8
    $region41: #{model_embeddings_forward.1} parent=1 // pred_fallthru
      _
    // Predicated region
    $region42: #{model_embeddings_forward.1} parent=1 // pred_check
      _
    $region43: #{model_embeddings_forward.1} parent=1 // pred_check_branch
      %4553 = sbr.rel (0) target = $region45
    $region44: #{model_embeddings_forward.1} parent=1 // pred_region
      %4554 = dma.done [#allocation4], 256
    $region45: #{model_embeddings_forward.1} parent=1 // pred_fallthru
      _
    %4555 = vsyncpa [#allocation3], 1
    %4556 = vsyncpa [#allocation6], 1
    %4557 = vsyncpa [#allocation9], 1
    %4558 = vsyncpa [#allocation4], 1

</llo_original>
